<compile_context>
chip_gen: v5e
topology: v5e:2x2
jax: 0.10.0
libtpu: 0.0.40
codegen_flags: <defaults>
</compile_context>

<pallas_src>
import jax
import jax.numpy as jnp
from jax import lax
from jax.experimental import pallas as pl
from jax.experimental.pallas import tpu as pltpu

IN_FEATURES = 224 * 224 * 3          # 150528, hard-coded by the module
NUM_CLASSES = 16                     # cfg.MODEL.NUM_CLASSES (small test value)
TK = IN_FEATURES // 8                # 18816 -> 8 K-steps, multiple of 128


def linear_kernel(x_ref, w_ref, b_ref, o_ref):
    # x_ref: (B, TK), w_ref: (N, TK), b_ref: (1, N), o_ref: (B, N) f32
    k = pl.program_id(0)

    @pl.when(k == 0)
    def _init():
        o_ref[...] = jnp.zeros_like(o_ref)

    # Contract the K (last) axis of both tiles: (B, TK) x (N, TK) -> (B, N).
    o_ref[...] += lax.dot_general(
        x_ref[...],
        w_ref[...],
        dimension_numbers=(((1,), (1,)), ((), ())),
        preferred_element_type=jnp.float32,
    )

    @pl.when(k == pl.num_programs(0) - 1)
    def _finalize():
        o_ref[...] += b_ref[...]


def pallas_linear(x_flat, weight, bias, *, tk=TK):
    """x_flat: (B, K) f32, weight: (N, K) f32 (native layout), bias: (N,) f32."""
    B, K = x_flat.shape
    N, K2 = weight.shape
    assert K == K2, "weight in_features mismatch"
    assert K % tk == 0, "K tile must divide K"
    bias2d = bias.reshape(1, N)

    cost = pl.CostEstimate(
        flops=2 * B * K * N,
        transcendentals=0,
        bytes_accessed=(B * K + K * N + B * N) * 4,
    )

    return pl.pallas_call(
        linear_kernel,
        out_shape=jax.ShapeDtypeStruct((B, N), jnp.float32),
        grid_spec=pltpu.PrefetchScalarGridSpec(
            num_scalar_prefetch=0,
            grid=(K // tk,),
            in_specs=[
                pl.BlockSpec((B, tk), lambda k: (0, k)),   # x tile (lane-dense)
                pl.BlockSpec((N, tk), lambda k: (0, k)),   # native weight tile
                pl.BlockSpec((1, N), lambda k: (0, 0)),    # bias (resident)
            ],
            out_specs=pl.BlockSpec((B, N), lambda k: (0, 0)),  # resident acc
        ),
        compiler_params=pltpu.CompilerParams(
            dimension_semantics=("arbitrary",),   # K is a reduction axis
        ),
        cost_estimate=cost,
    )(x_flat, weight, bias2d)


def linear_forward(x_pathways, weight, bias):
    """Mirrors Linear.forward: x is a list of pathway tensors (NCHW)."""
    x0 = x_pathways[0]
    B = x0.shape[0]
    x_flat = x0.reshape(B, -1)                 # torch.flatten(x[0], start_dim=1)
    return pallas_linear(x_flat, weight, bias)  # native (N, K) weight, no .T


if __name__ == "__main__":
    key = jax.random.PRNGKey(0)
    k_x, k_w, k_b = jax.random.split(key, 3)

    # Deterministic parameter init (PyTorch nn.Linear default: U(-1/sqrt(K), 1/sqrt(K)))
    bound = 1.0 / (IN_FEATURES ** 0.5)
    weight = jax.random.uniform(
        k_w, (NUM_CLASSES, IN_FEATURES), jnp.float32, -bound, bound
    )
    bias = jax.random.uniform(k_b, (NUM_CLASSES,), jnp.float32, -bound, bound)

    # Input: list of pathways, pathway 0 is NCHW (B, 3, 224, 224)
    B = 2
    x0 = jax.random.normal(k_x, (B, 3, 224, 224), jnp.float32)
    x = [x0]

    out = linear_forward(x, weight, bias)
    out = jax.block_until_ready(out)

    # Reference check in plain JAX
    ref = x0.reshape(B, -1) @ weight.T + bias
    assert out.shape == (B, NUM_CLASSES)
    assert jnp.allclose(out, ref, atol=1e-3, rtol=1e-3)

    print("KERNEL_OK")
</pallas_src>

<mosaic_0001>
module attributes {stable_mosaic.version = 11 : i64} {
  func.func @linear_kernel(%arg0: i32, %arg1: memref<2x18816xf32, #tpu.memory_space<vmem>>, %arg2: memref<16x18816xf32, #tpu.memory_space<vmem>>, %arg3: memref<1x16xf32, #tpu.memory_space<vmem>>, %arg4: memref<2x16xf32, #tpu.memory_space<vmem>>) attributes {dimension_semantics = [#tpu.dimension_semantics<arbitrary>], iteration_bounds = array<i64: 8>, scalar_prefetch = 0 : i64, scratch_operands = 0 : i64, tpu.core_type = #tpu.core_type<tc>, window_params = [{transform_indices = @transform_0, window_bounds = array<i64: 2, 18816>}, {transform_indices = @transform_1, window_bounds = array<i64: 16, 18816>}, {pipeline_mode = #tpu.pipeline_mode<synchronous>, transform_indices = @transform_2, window_bounds = array<i64: 1, 16>}, {pipeline_mode = #tpu.pipeline_mode<synchronous>, transform_indices = @transform_3, window_bounds = array<i64: 2, 16>}]} {
    %c0_i32 = arith.constant 0 : i32
    %0 = arith.cmpi eq, %arg0, %c0_i32 : i32
    %1 = arith.extui %0 : i1 to i32
    %c0_i32_0 = arith.constant 0 : i32
    %2 = arith.cmpi ne, %1, %c0_i32_0 : i32
    scf.if %2 {
      %cst_9 = arith.constant 0.000000e+00 : f32
      %12 = vector.broadcast %cst_9 : f32 to vector<2x16xf32>
      %c0_10 = arith.constant 0 : index
      %c0_11 = arith.constant 0 : index
      %13 = vector.load %arg4[%c0_10, %c0_11] : memref<2x16xf32, #tpu.memory_space<vmem>>, vector<2x16xf32>
      tpu.vector_store %arg4[%c0_10, %c0_11], %12 {strides = array<i32>} : memref<2x16xf32, #tpu.memory_space<vmem>>, vector<2x16xf32>,
    } else {
    }
    %c0 = arith.constant 0 : index
    %c0_1 = arith.constant 0 : index
    %3 = vector.load %arg4[%c0, %c0_1] : memref<2x16xf32, #tpu.memory_space<vmem>>, vector<2x16xf32>
    %c0_2 = arith.constant 0 : index
    %c0_3 = arith.constant 0 : index
    %4 = vector.load %arg1[%c0_2, %c0_3] : memref<2x18816xf32, #tpu.memory_space<vmem>>, vector<2x18816xf32>
    %c0_4 = arith.constant 0 : index
    %c0_5 = arith.constant 0 : index
    %5 = vector.load %arg2[%c0_4, %c0_5] : memref<16x18816xf32, #tpu.memory_space<vmem>>, vector<16x18816xf32>
    %cst = arith.constant dense<0.000000e+00> : vector<2x16xf32>
    %6 = tpu.matmul %4, %5, %cst {dimension_numbers = #tpu.dot_dimension_numbers<[1], [1], [0], [0], [0, 0, 1, 0], [], []>} : vector<2x18816xf32>, vector<16x18816xf32>, vector<2x16xf32> -> vector<2x16xf32>
    %7 = arith.addf %3, %6 : vector<2x16xf32>
    %c0_6 = arith.constant 0 : index
    %c0_7 = arith.constant 0 : index
    %8 = vector.load %arg4[%c0_6, %c0_7] : memref<2x16xf32, #tpu.memory_space<vmem>>, vector<2x16xf32>
    tpu.vector_store %arg4[%c0_6, %c0_7], %7 {strides = array<i32>} : memref<2x16xf32, #tpu.memory_space<vmem>>, vector<2x16xf32>,
    %c7_i32 = arith.constant 7 : i32
    %9 = arith.cmpi eq, %arg0, %c7_i32 : i32
    %10 = arith.extui %9 : i1 to i32
    %c0_i32_8 = arith.constant 0 : i32
    %11 = arith.cmpi ne, %10, %c0_i32_8 : i32
    scf.if %11 {
      %c0_9 = arith.constant 0 : index
      %c0_10 = arith.constant 0 : index
      %12 = vector.load %arg4[%c0_9, %c0_10] : memref<2x16xf32, #tpu.memory_space<vmem>>, vector<2x16xf32>
      %c0_11 = arith.constant 0 : index
      %c0_12 = arith.constant 0 : index
      %13 = vector.load %arg3[%c0_11, %c0_12] : memref<1x16xf32, #tpu.memory_space<vmem>>, vector<1x16xf32>
      %14 = vector.broadcast %13 : vector<1x16xf32> to vector<2x16xf32>
      %15 = arith.addf %12, %14 : vector<2x16xf32>
      %c0_13 = arith.constant 0 : index
      %c0_14 = arith.constant 0 : index
      %16 = vector.load %arg4[%c0_13, %c0_14] : memref<2x16xf32, #tpu.memory_space<vmem>>, vector<2x16xf32>
      tpu.vector_store %arg4[%c0_13, %c0_14], %15 {strides = array<i32>} : memref<2x16xf32, #tpu.memory_space<vmem>>, vector<2x16xf32>,
    } else {
    }
    return
  }
  func.func @transform_0(%arg0: i32) -> (i32, i32) {
    %c0_i32 = arith.constant 0 : i32
    %c0_i32_0 = arith.constant 0 : i32
    return %c0_i32, %arg0 : i32, i32
  }
  func.func @transform_1(%arg0: i32) -> (i32, i32) {
    %c0_i32 = arith.constant 0 : i32
    %c0_i32_0 = arith.constant 0 : i32
    return %c0_i32, %arg0 : i32, i32
  }
  func.func @transform_2(%arg0: i32) -> (i32, i32) {
    %c0_i32 = arith.constant 0 : i32
    %c0_i32_0 = arith.constant 0 : i32
    %c0_i32_1 = arith.constant 0 : i32
    return %c0_i32, %c0_i32_0 : i32, i32
  }
  func.func @transform_3(%arg0: i32) -> (i32, i32) {
    %c0_i32 = arith.constant 0 : i32
    %c0_i32_0 = arith.constant 0 : i32
    %c0_i32_1 = arith.constant 0 : i32
    return %c0_i32, %c0_i32_0 : i32, i32
  }
}

</mosaic_0001>

<llo_original>
// kernel: tpu_custom_call.1
$region0: #{tpu_custom_call.1}
  #allocation0 [shape = 'u32[]', space=smem, size = 0x4, offset = 0x4, fixed_abs, tag = 'smem constant byte address 0x4 - core index']
  #allocation1 [shape = 'u32[72,128]{1,0:T(1,128)}', space=vmem, size = 0x9000, scoped, tag = 'internal scratch']
  %s0 = inlined_call_operand.hbm [shape: f32[2,150528], index: 0, kind: input, shape index: {}]
  %s1 = inlined_call_operand.hbm [shape: f32[16,150528], index: 1, kind: input, shape index: {}]
  %s2 = inlined_call_operand.hbm [shape: f32[1,16], index: 2, kind: input, shape index: {}]
  %s3 = inlined_call_operand.hbm [shape: f32[2,16], index: 3, kind: output, shape index: {}]
  %s4 = sld [smem:[#allocation0]]
  $region65: #{tpu_custom_call.1} parent=0
    _
  %s6 = ssub.s32 1, %s4
  %s7 = scalar_select 0, %s6, %s4
  $region1: #{tpu_custom_call.1} parent=0
    #allocation2 [shape = 'u8[301056]{0}', space=vmem, size = 0x49800, scoped, tag = 'input window, operand 0']
    #allocation3 [shape = 's32[2]{0}', space=sflag, size = 0x8, scoped, tag = 'scoped memory for tpu_custom_call.1']
    #allocation4 [shape = 's32[2]{0}', space=sflag, size = 0x8, scoped, tag = 'scoped memory for tpu_custom_call.1']
    #allocation5 [shape = 'u8[2408448]{0}', space=vmem, size = 0x24c000, scoped, tag = 'input window, operand 1']
    #allocation6 [shape = 's32[2]{0}', space=sflag, size = 0x8, scoped, tag = 'scoped memory for tpu_custom_call.1']
    #allocation7 [shape = 'u8[512]{0}', space=vmem, size = 0x400, scoped, tag = 'input window, operand 2, single buffered']
    #allocation8 [shape = 'u8[1024]{0}', space=vmem, size = 0x400, scoped, tag = 'output window, operand 0, single buffered']
    %8 = vsyncpa [#allocation3], 0
    %s9 = scalar_lea.sflag [#allocation3], 1
    %10 = vsyncpa %s9, 0
    %11 = vsyncpa [#allocation6], 0
    %s12 = scalar_lea.sflag [#allocation6], 1
    %13 = vsyncpa %s12, 0
    %14 = vsyncpa [#allocation4], 0
    loop: start=0, step=1, limit=10
    $region2: #{tpu_custom_call.1} parent=1 // loop_pre_header
      _
    $region3: #{tpu_custom_call.1} parent=1 // loop_header
      %s16 = sphi 0, %s20
      %p17 = scmp.ge.s32.totalorder %s16, 10
      %s26 = sphi 0, %s28
      %s29 = sphi 0, %s26
      %s30 = sphi 0, %s29
      %s46 = sphi 0, %s30
      %s52 = sphi 0, %s54
      %s55 = sphi 0, %s52
      %s56 = sphi 0, %s55
      %s72 = sphi 0, %s56
      %s76 = sphi 0, %s76
      %s78 = sphi 0, %s76
      %s79 = sphi 0, %s78
      %s93 = sphi 0, %s79
      %s97 = sphi 0, %s97
      %s99 = sphi 0, %s97
      %s100 = sphi 0, %s99
      %s114 = sphi 0, %s100
    $region4: #{tpu_custom_call.1} parent=1 // loop_header_branch
      %19 = sbr.rel (%p17) target = $region8
    $region5: #{tpu_custom_call.1} parent=1 // loop_body
      %s21 = ssub.s32 %s16, 1
      %s22 = ssub.s32 %s16, 2
      %s23 = sadd.s32 %s16, 1
      %s24 = ssub.s32 %s16, %s23
      %p25 = scmp.eq.s32.totalorder %s24, 0
      %s27 = sadd.s32 %s26, 1
      %s28 = scalar_select %p25, %s26, %s27
      %p31 = pneg %p25
      %p32 = scmp.eq.s32.totalorder %s16, 7
      %p33 = por %p31, %p32
      %p34 = scmp.ne.s32.totalorder %s26, %s29
      %p35 = scmp.eq.s32.totalorder %s16, 0
      %p36 = por %p34, %p35
      %p37 = scmp.ne.s32.totalorder %s26, %s29
      %p38 = scmp.eq.s32.totalorder %s21, 7
      %p39 = por %p37, %p38
      %p40 = scmp.ne.s32.totalorder %s29, %s30
      %p41 = scmp.eq.s32.totalorder %s21, 0
      %p42 = por %p40, %p41
      %p43 = scmp.ne.s32.totalorder %s29, %s30
      %p44 = scmp.eq.s32.totalorder %s22, 7
      %p45 = por %p43, %p44
      %p47 = scmp.ne.s32.totalorder %s30, %s46
      %p48 = scmp.eq.s32.totalorder %s22, 0
      %p49 = por %p47, %p48
      %s50 = ssub.s32 %s16, %s23
      %p51 = scmp.eq.s32.totalorder %s50, 0
      %s53 = sadd.s32 %s52, 1
      %s54 = scalar_select %p51, %s52, %s53
      %p57 = pneg %p51
      %p58 = scmp.eq.s32.totalorder %s16, 7
      %p59 = por %p57, %p58
      %p60 = scmp.ne.s32.totalorder %s52, %s55
      %p61 = scmp.eq.s32.totalorder %s16, 0
      %p62 = por %p60, %p61
      %p63 = scmp.ne.s32.totalorder %s52, %s55
      %p64 = scmp.eq.s32.totalorder %s21, 7
      %p65 = por %p63, %p64
      %p66 = scmp.ne.s32.totalorder %s55, %s56
      %p67 = scmp.eq.s32.totalorder %s21, 0
      %p68 = por %p66, %p67
      %p69 = scmp.ne.s32.totalorder %s55, %s56
      %p70 = scmp.eq.s32.totalorder %s22, 7
      %p71 = por %p69, %p70
      %p73 = scmp.ne.s32.totalorder %s56, %s72
      %p74 = scmp.eq.s32.totalorder %s22, 0
      %p75 = por %p73, %p74
      %s77 = sadd.s32 %s76, 1
      %p80 = scmp.eq.s32.totalorder %s16, 7
      %p81 = scmp.ne.s32.totalorder %s76, %s78
      %p82 = scmp.eq.s32.totalorder %s16, 0
      %p83 = por %p81, %p82
      %p84 = scmp.ne.s32.totalorder %s76, %s78
      %p85 = scmp.eq.s32.totalorder %s21, 7
      %p86 = por %p84, %p85
      %p87 = scmp.ne.s32.totalorder %s78, %s79
      %p88 = scmp.eq.s32.totalorder %s21, 0
      %p89 = por %p87, %p88
      %p90 = scmp.ne.s32.totalorder %s78, %s79
      %p91 = scmp.eq.s32.totalorder %s22, 7
      %p92 = por %p90, %p91
      %p94 = scmp.ne.s32.totalorder %s79, %s93
      %p95 = scmp.eq.s32.totalorder %s22, 0
      %p96 = por %p94, %p95
      %s98 = sadd.s32 %s97, 1
      %p101 = scmp.eq.s32.totalorder %s16, 7
      %p102 = scmp.ne.s32.totalorder %s97, %s99
      %p103 = scmp.eq.s32.totalorder %s16, 0
      %p104 = por %p102, %p103
      %p105 = scmp.ne.s32.totalorder %s97, %s99
      %p106 = scmp.eq.s32.totalorder %s21, 7
      %p107 = por %p105, %p106
      %p108 = scmp.ne.s32.totalorder %s99, %s100
      %p109 = scmp.eq.s32.totalorder %s21, 0
      %p110 = por %p108, %p109
      %p111 = scmp.ne.s32.totalorder %s99, %s100
      %p112 = scmp.eq.s32.totalorder %s22, 7
      %p113 = por %p111, %p112
      %p115 = scmp.ne.s32.totalorder %s100, %s114
      %p116 = scmp.eq.s32.totalorder %s22, 0
      %p117 = por %p115, %p116
      %p118 = scmp.le.s32.totalorder 1, %s16
      %p119 = scmp.lt.s32.totalorder %s16, 9
      %p120 = pnand %p118, %p119
      %p121 = pneg %p120
      // Predicated region
      $region9: #{tpu_custom_call.1} parent=5 // pred_check
        _
      $region10: #{tpu_custom_call.1} parent=5 // pred_check_branch
        %123 = sbr.rel (%p120) target = $region12
      $region11: #{tpu_custom_call.1} parent=5 // pred_region
        %s124 = ssub.s32 %s16, 1
        // Predicated region
        $region13: #{tpu_custom_call.1} parent=11 // pred_check
          %p125 = pneg %p89
        $region14: #{tpu_custom_call.1} parent=11 // pred_check_branch
          %127 = sbr.rel (%p125) target = $region16
        $region15: #{tpu_custom_call.1} parent=11 // pred_region
          %129 = vsyncadd [#allocation6], 0
          %s131 = sshll.u32 %s2, 4
          %s132 = int_to_ptr.hbm [resolvable:$true] %s131
          %s133 = sshll.u32 [#allocation7], 4
          %s134 = int_to_ptr.vmem [resolvable:$true] %s133
          %136 = dma.hbm_to_vmem [thread:$0]  %s132, 16, %s134, [#allocation6]
        $region16: #{tpu_custom_call.1} parent=11 // pred_fallthru
          _
      $region12: #{tpu_custom_call.1} parent=5 // pred_fallthru
        _
      %p137 = scmp.lt.s32.totalorder %s16, 8
      // Predicated region
      $region17: #{tpu_custom_call.1} parent=5 // pred_check
        %p138 = pneg %p137
      $region18: #{tpu_custom_call.1} parent=5 // pred_check_branch
        %140 = sbr.rel (%p138) target = $region20
      $region19: #{tpu_custom_call.1} parent=5 // pred_region
        // Predicated region
        $region21: #{tpu_custom_call.1} parent=19 // pred_check
          %p141 = pneg %p36
        $region22: #{tpu_custom_call.1} parent=19 // pred_check_branch
          %143 = sbr.rel (%p141) target = $region24
        $region23: #{tpu_custom_call.1} parent=19 // pred_region
          %s144 = sand.u32 %s26, 1
          %s145 = scalar_lea.sflag [#allocation3], %s144
          %s146 = sand.u32 %s26, 1
          %s147 = smul.addr %s146, 294
          %s148 = scalar_lea.vmem [#allocation2], %s147
          %s149 = smul.u32 147, %s16
          %151 = vsyncadd %s145, 0
          %s152 = smul.addr %s149, 2
          %s153 = scalar_lea.hbm %s0, %s152
          %s155 = sshll.u32 %s153, 4
          %s156 = int_to_ptr.hbm [resolvable:$true] %s155
          %s157 = sshll.u32 %s148, 4
          %s158 = int_to_ptr.vmem [resolvable:$true] %s157
          %160 = dma.hbm_to_vmem [thread:$0]  %s156, 4704, %s158, %s145
        $region24: #{tpu_custom_call.1} parent=19 // pred_fallthru
          _
        // Predicated region
        $region25: #{tpu_custom_call.1} parent=19 // pred_check
          %p161 = pneg %p62
        $region26: #{tpu_custom_call.1} parent=19 // pred_check_branch
          %163 = sbr.rel (%p161) target = $region28
        $region27: #{tpu_custom_call.1} parent=19 // pred_region
          %s164 = sand.u32 %s16, 1
          %s165 = scalar_lea.sflag [#allocation6], %s164
          %s166 = sand.u32 %s52, 1
          %s167 = smul.addr %s166, 2352
          %s168 = scalar_lea.vmem [#allocation5], %s167
          %s169 = smul.u32 147, %s16
          %171 = vsyncadd %s165, 0
          %s172 = smul.addr %s169, 8
          %s173 = scalar_lea.hbm %s1, %s172
          %s174 = sshll.u32 %s173, 4
          %s175 = int_to_ptr.hbm [resolvable:$true] %s174
          %s176 = sshll.u32 %s168, 4
          %s177 = int_to_ptr.vmem [resolvable:$true] %s176
          %182 = dma.hbm_to_vmem [thread:$0]  %s175, 37632, %s177, %s165, 150528, 18816, 1176
        $region28: #{tpu_custom_call.1} parent=19 // pred_fallthru
          _
      $region20: #{tpu_custom_call.1} parent=5 // pred_fallthru
        _
      %p183 = scmp.le.s32.totalorder 1, %s16
      %p184 = scmp.lt.s32.totalorder %s16, 9
      %p185 = pnand %p183, %p184
      %p186 = pneg %p185
      // Predicated region
      $region29: #{tpu_custom_call.1} parent=5 // pred_check
        _
      $region30: #{tpu_custom_call.1} parent=5 // pred_check_branch
        %188 = sbr.rel (%p185) target = $region32
      $region31: #{tpu_custom_call.1} parent=5 // pred_region
        %s189 = ssub.s32 %s16, 1
        %s190 = sand.u32 %s29, 1
        %s191 = scalar_lea.sflag [#allocation3], %s190
        %s192 = sand.u32 %s29, 1
        %s193 = smul.addr %s192, 294
        %s194 = scalar_lea.vmem [#allocation2], %s193
        // Predicated region
        $region33: #{tpu_custom_call.1} parent=31 // pred_check
          %p195 = pneg %p42
        $region34: #{tpu_custom_call.1} parent=31 // pred_check_branch
          %197 = sbr.rel (%p195) target = $region36
        $region35: #{tpu_custom_call.1} parent=31 // pred_region
          %199 = dma.done %s191, 4704
        $region36: #{tpu_custom_call.1} parent=31 // pred_fallthru
          _
        %s200 = sand.u32 %s21, 1
        %s201 = scalar_lea.sflag [#allocation6], %s200
        %s202 = sand.u32 %s55, 1
        %s203 = smul.addr %s202, 2352
        %s204 = scalar_lea.vmem [#allocation5], %s203
        // Predicated region
        $region37: #{tpu_custom_call.1} parent=31 // pred_check
          %p205 = pneg %p68
        $region38: #{tpu_custom_call.1} parent=31 // pred_check_branch
          %207 = sbr.rel (%p205) target = $region40
        $region39: #{tpu_custom_call.1} parent=31 // pred_region
          %209 = dma.done %s201, 37632
        $region40: #{tpu_custom_call.1} parent=31 // pred_fallthru
          _
        // Predicated region
        $region41: #{tpu_custom_call.1} parent=31 // pred_check
          %p210 = pneg %p89
        $region42: #{tpu_custom_call.1} parent=31 // pred_check_branch
          %212 = sbr.rel (%p210) target = $region44
        $region43: #{tpu_custom_call.1} parent=31 // pred_region
          %214 = dma.done [#allocation6], 16
        $region44: #{tpu_custom_call.1} parent=31 // pred_fallthru
          _
        %s215 = sand.u32 %s29, 1
        %s216 = scalar_lea.sflag [#allocation3], %s215
        %s217 = sand.u32 %s29, 1
        %s218 = smul.addr %s217, 294
        %s219 = scalar_lea.vmem [#allocation2], %s218
        %p220 = pneg %p42
        %p221 = pneg %p39
        %s222 = sand.u32 %s21, 1
        %s223 = scalar_lea.sflag [#allocation6], %s222
        %s224 = sand.u32 %s55, 1
        %s225 = smul.addr %s224, 2352
        %s226 = scalar_lea.vmem [#allocation5], %s225
        %p227 = pneg %p68
        %p228 = pneg %p65
        %p229 = pneg %p89
        %p230 = pneg %p86
        %p231 = pneg %p110
        %p232 = pneg %p107
        %s233 = smul.u32 147, %s21
        %s234 = smul.u32 147, %s21
        %p235 = scmp.eq.s32.totalorder %s21, 0
        // Predicated region
        $region45: #{tpu_custom_call.1} parent=31 // pred_check
          %p236 = pneg %p235
        $region46: #{tpu_custom_call.1} parent=31 // pred_check_branch
          %238 = sbr.rel (%p236) target = $region48
        $region47: #{tpu_custom_call.1} parent=31 // pred_region
          %vm239 = vcmask 123904
          %240 = vst.msk [vmem:[#allocation8] sm:$0x3] %vm239, 0.0
        $region48: #{tpu_custom_call.1} parent=31 // pred_fallthru
          _
        %v241 = vld [vmem:[#allocation8] sm:$0x3]
        %v242 = vld [vmem:[%s194] sm:$0xff]
        %v243 = vld [vmem:[%s194 + $0x8] sm:$0xff]
        %v244 = vld [vmem:[%s194 + $0x10] sm:$0xff]
        %v245 = vld [vmem:[%s194 + $0x18] sm:$0xff]
        %v246 = vld [vmem:[%s194 + $0x20] sm:$0xff]
        %v247 = vld [vmem:[%s194 + $0x28] sm:$0xff]
        %v248 = vld [vmem:[%s194 + $0x30] sm:$0xff]
        %v249 = vld [vmem:[%s194 + $0x38] sm:$0xff]
        %v250 = vld [vmem:[%s194 + $0x40] sm:$0xff]
        %v251 = vld [vmem:[%s194 + $0x48] sm:$0xff]
        %v252 = vld [vmem:[%s194 + $0x50] sm:$0xff]
        %v253 = vld [vmem:[%s194 + $0x58] sm:$0xff]
        %v254 = vld [vmem:[%s194 + $0x60] sm:$0xff]
        %v255 = vld [vmem:[%s194 + $0x68] sm:$0xff]
        %v256 = vld [vmem:[%s194 + $0x70] sm:$0xff]
        %v257 = vld [vmem:[%s194 + $0x78] sm:$0xff]
        %v258 = vld [vmem:[%s194 + $0x80] sm:$0xff]
        %v259 = vld [vmem:[%s194 + $0x88] sm:$0xff]
        %v260 = vld [vmem:[%s194 + $0x90] sm:$0xff]
        %v261 = vld [vmem:[%s194 + $0x98] sm:$0xff]
        %v262 = vld [vmem:[%s194 + $0xa0] sm:$0xff]
        %v263 = vld [vmem:[%s194 + $0xa8] sm:$0xff]
        %v264 = vld [vmem:[%s194 + $0xb0] sm:$0xff]
        %v265 = vld [vmem:[%s194 + $0xb8] sm:$0xff]
        %v266 = vld [vmem:[%s194 + $0xc0] sm:$0xff]
        %v267 = vld [vmem:[%s194 + $0xc8] sm:$0xff]
        %v268 = vld [vmem:[%s194 + $0xd0] sm:$0xff]
        %v269 = vld [vmem:[%s194 + $0xd8] sm:$0xff]
        %v270 = vld [vmem:[%s194 + $0xe0] sm:$0xff]
        %v271 = vld [vmem:[%s194 + $0xe8] sm:$0xff]
        %v272 = vld [vmem:[%s194 + $0xf0] sm:$0xff]
        %v273 = vld [vmem:[%s194 + $0xf8] sm:$0xff]
        %v274 = vld [vmem:[%s194 + $0x100] sm:$0xff]
        %v275 = vld [vmem:[%s194 + $0x108] sm:$0xff]
        %v276 = vld [vmem:[%s194 + $0x110] sm:$0xff]
        %v277 = vld [vmem:[%s194 + $0x118] sm:$0xff]
        %v278 = vld [vmem:[%s194 + $0x120] sm:$0x3f]
        %v279 = vld [vmem:[%s204] sm:$0xff]
        %v280 = vld [vmem:[%s204 + $0x8] sm:$0xff]
        %v281 = vld [vmem:[%s204 + $0x10] sm:$0xff]
        %v282 = vld [vmem:[%s204 + $0x18] sm:$0xff]
        %v283 = vld [vmem:[%s204 + $0x20] sm:$0xff]
        %v284 = vld [vmem:[%s204 + $0x28] sm:$0xff]
        %v285 = vld [vmem:[%s204 + $0x30] sm:$0xff]
        %v286 = vld [vmem:[%s204 + $0x38] sm:$0xff]
        %v287 = vld [vmem:[%s204 + $0x40] sm:$0xff]
        %v288 = vld [vmem:[%s204 + $0x48] sm:$0xff]
        %v289 = vld [vmem:[%s204 + $0x50] sm:$0xff]
        %v290 = vld [vmem:[%s204 + $0x58] sm:$0xff]
        %v291 = vld [vmem:[%s204 + $0x60] sm:$0xff]
        %v292 = vld [vmem:[%s204 + $0x68] sm:$0xff]
        %v293 = vld [vmem:[%s204 + $0x70] sm:$0xff]
        %v294 = vld [vmem:[%s204 + $0x78] sm:$0xff]
        %v295 = vld [vmem:[%s204 + $0x80] sm:$0xff]
        %v296 = vld [vmem:[%s204 + $0x88] sm:$0xff]
        %v297 = vld [vmem:[%s204 + $0x90] sm:$0xff]
        %v298 = vld [vmem:[%s204 + $0x98] sm:$0xff]
        %v299 = vld [vmem:[%s204 + $0xa0] sm:$0xff]
        %v300 = vld [vmem:[%s204 + $0xa8] sm:$0xff]
        %v301 = vld [vmem:[%s204 + $0xb0] sm:$0xff]
        %v302 = vld [vmem:[%s204 + $0xb8] sm:$0xff]
        %v303 = vld [vmem:[%s204 + $0xc0] sm:$0xff]
        %v304 = vld [vmem:[%s204 + $0xc8] sm:$0xff]
        %v305 = vld [vmem:[%s204 + $0xd0] sm:$0xff]
        %v306 = vld [vmem:[%s204 + $0xd8] sm:$0xff]
        %v307 = vld [vmem:[%s204 + $0xe0] sm:$0xff]
        %v308 = vld [vmem:[%s204 + $0xe8] sm:$0xff]
        %v309 = vld [vmem:[%s204 + $0xf0] sm:$0xff]
        %v310 = vld [vmem:[%s204 + $0xf8] sm:$0xff]
        %v311 = vld [vmem:[%s204 + $0x100] sm:$0xff]
        %v312 = vld [vmem:[%s204 + $0x108] sm:$0xff]
        %v313 = vld [vmem:[%s204 + $0x110] sm:$0xff]
        %v314 = vld [vmem:[%s204 + $0x118] sm:$0xff]
        %v315 = vld [vmem:[%s204 + $0x120] sm:$0xff]
        %v316 = vld [vmem:[%s204 + $0x128] sm:$0xff]
        %v317 = vld [vmem:[%s204 + $0x130] sm:$0xff]
        %v318 = vld [vmem:[%s204 + $0x138] sm:$0xff]
        %v319 = vld [vmem:[%s204 + $0x140] sm:$0xff]
        %v320 = vld [vmem:[%s204 + $0x148] sm:$0xff]
        %v321 = vld [vmem:[%s204 + $0x150] sm:$0xff]
        %v322 = vld [vmem:[%s204 + $0x158] sm:$0xff]
        %v323 = vld [vmem:[%s204 + $0x160] sm:$0xff]
        %v324 = vld [vmem:[%s204 + $0x168] sm:$0xff]
        %v325 = vld [vmem:[%s204 + $0x170] sm:$0xff]
        %v326 = vld [vmem:[%s204 + $0x178] sm:$0xff]
        %v327 = vld [vmem:[%s204 + $0x180] sm:$0xff]
        %v328 = vld [vmem:[%s204 + $0x188] sm:$0xff]
        %v329 = vld [vmem:[%s204 + $0x190] sm:$0xff]
        %v330 = vld [vmem:[%s204 + $0x198] sm:$0xff]
        %v331 = vld [vmem:[%s204 + $0x1a0] sm:$0xff]
        %v332 = vld [vmem:[%s204 + $0x1a8] sm:$0xff]
        %v333 = vld [vmem:[%s204 + $0x1b0] sm:$0xff]
        %v334 = vld [vmem:[%s204 + $0x1b8] sm:$0xff]
        %v335 = vld [vmem:[%s204 + $0x1c0] sm:$0xff]
        %v336 = vld [vmem:[%s204 + $0x1c8] sm:$0xff]
        %v337 = vld [vmem:[%s204 + $0x1d0] sm:$0xff]
        %v338 = vld [vmem:[%s204 + $0x1d8] sm:$0xff]
        %v339 = vld [vmem:[%s204 + $0x1e0] sm:$0xff]
        %v340 = vld [vmem:[%s204 + $0x1e8] sm:$0xff]
        %v341 = vld [vmem:[%s204 + $0x1f0] sm:$0xff]
        %v342 = vld [vmem:[%s204 + $0x1f8] sm:$0xff]
        %v343 = vld [vmem:[%s204 + $0x200] sm:$0xff]
        %v344 = vld [vmem:[%s204 + $0x208] sm:$0xff]
        %v345 = vld [vmem:[%s204 + $0x210] sm:$0xff]
        %v346 = vld [vmem:[%s204 + $0x218] sm:$0xff]
        %v347 = vld [vmem:[%s204 + $0x220] sm:$0xff]
        %v348 = vld [vmem:[%s204 + $0x228] sm:$0xff]
        %v349 = vld [vmem:[%s204 + $0x230] sm:$0xff]
        %v350 = vld [vmem:[%s204 + $0x238] sm:$0xff]
        %v351 = vld [vmem:[%s204 + $0x240] sm:$0xff]
        %v352 = vld [vmem:[%s204 + $0x248] sm:$0xff]
        %v353 = vld [vmem:[%s204 + $0x250] sm:$0xff]
        %v354 = vld [vmem:[%s204 + $0x258] sm:$0xff]
        %v355 = vld [vmem:[%s204 + $0x260] sm:$0xff]
        %v356 = vld [vmem:[%s204 + $0x268] sm:$0xff]
        %v357 = vld [vmem:[%s204 + $0x270] sm:$0xff]
        %v358 = vld [vmem:[%s204 + $0x278] sm:$0xff]
        %v359 = vld [vmem:[%s204 + $0x280] sm:$0xff]
        %v360 = vld [vmem:[%s204 + $0x288] sm:$0xff]
        %v361 = vld [vmem:[%s204 + $0x290] sm:$0xff]
        %v362 = vld [vmem:[%s204 + $0x298] sm:$0xff]
        %v363 = vld [vmem:[%s204 + $0x2a0] sm:$0xff]
        %v364 = vld [vmem:[%s204 + $0x2a8] sm:$0xff]
        %v365 = vld [vmem:[%s204 + $0x2b0] sm:$0xff]
        %v366 = vld [vmem:[%s204 + $0x2b8] sm:$0xff]
        %v367 = vld [vmem:[%s204 + $0x2c0] sm:$0xff]
        %v368 = vld [vmem:[%s204 + $0x2c8] sm:$0xff]
        %v369 = vld [vmem:[%s204 + $0x2d0] sm:$0xff]
        %v370 = vld [vmem:[%s204 + $0x2d8] sm:$0xff]
        %v371 = vld [vmem:[%s204 + $0x2e0] sm:$0xff]
        %v372 = vld [vmem:[%s204 + $0x2e8] sm:$0xff]
        %v373 = vld [vmem:[%s204 + $0x2f0] sm:$0xff]
        %v374 = vld [vmem:[%s204 + $0x2f8] sm:$0xff]
        %v375 = vld [vmem:[%s204 + $0x300] sm:$0xff]
        %v376 = vld [vmem:[%s204 + $0x308] sm:$0xff]
        %v377 = vld [vmem:[%s204 + $0x310] sm:$0xff]
        %v378 = vld [vmem:[%s204 + $0x318] sm:$0xff]
        %v379 = vld [vmem:[%s204 + $0x320] sm:$0xff]
        %v380 = vld [vmem:[%s204 + $0x328] sm:$0xff]
        %v381 = vld [vmem:[%s204 + $0x330] sm:$0xff]
        %v382 = vld [vmem:[%s204 + $0x338] sm:$0xff]
        %v383 = vld [vmem:[%s204 + $0x340] sm:$0xff]
        %v384 = vld [vmem:[%s204 + $0x348] sm:$0xff]
        %v385 = vld [vmem:[%s204 + $0x350] sm:$0xff]
        %v386 = vld [vmem:[%s204 + $0x358] sm:$0xff]
        %v387 = vld [vmem:[%s204 + $0x360] sm:$0xff]
        %v388 = vld [vmem:[%s204 + $0x368] sm:$0xff]
        %v389 = vld [vmem:[%s204 + $0x370] sm:$0xff]
        %v390 = vld [vmem:[%s204 + $0x378] sm:$0xff]
        %v391 = vld [vmem:[%s204 + $0x380] sm:$0xff]
        %v392 = vld [vmem:[%s204 + $0x388] sm:$0xff]
        %v393 = vld [vmem:[%s204 + $0x390] sm:$0xff]
        %v394 = vld [vmem:[%s204 + $0x398] sm:$0xff]
        %v395 = vld [vmem:[%s204 + $0x3a0] sm:$0xff]
        %v396 = vld [vmem:[%s204 + $0x3a8] sm:$0xff]
        %v397 = vld [vmem:[%s204 + $0x3b0] sm:$0xff]
        %v398 = vld [vmem:[%s204 + $0x3b8] sm:$0xff]
        %v399 = vld [vmem:[%s204 + $0x3c0] sm:$0xff]
        %v400 = vld [vmem:[%s204 + $0x3c8] sm:$0xff]
        %v401 = vld [vmem:[%s204 + $0x3d0] sm:$0xff]
        %v402 = vld [vmem:[%s204 + $0x3d8] sm:$0xff]
        %v403 = vld [vmem:[%s204 + $0x3e0] sm:$0xff]
        %v404 = vld [vmem:[%s204 + $0x3e8] sm:$0xff]
        %v405 = vld [vmem:[%s204 + $0x3f0] sm:$0xff]
        %v406 = vld [vmem:[%s204 + $0x3f8] sm:$0xff]
        %v407 = vld [vmem:[%s204 + $0x400] sm:$0xff]
        %v408 = vld [vmem:[%s204 + $0x408] sm:$0xff]
        %v409 = vld [vmem:[%s204 + $0x410] sm:$0xff]
        %v410 = vld [vmem:[%s204 + $0x418] sm:$0xff]
        %v411 = vld [vmem:[%s204 + $0x420] sm:$0xff]
        %v412 = vld [vmem:[%s204 + $0x428] sm:$0xff]
        %v413 = vld [vmem:[%s204 + $0x430] sm:$0xff]
        %v414 = vld [vmem:[%s204 + $0x438] sm:$0xff]
        %v415 = vld [vmem:[%s204 + $0x440] sm:$0xff]
        %v416 = vld [vmem:[%s204 + $0x448] sm:$0xff]
        %v417 = vld [vmem:[%s204 + $0x450] sm:$0xff]
        %v418 = vld [vmem:[%s204 + $0x458] sm:$0xff]
        %v419 = vld [vmem:[%s204 + $0x460] sm:$0xff]
        %v420 = vld [vmem:[%s204 + $0x468] sm:$0xff]
        %v421 = vld [vmem:[%s204 + $0x470] sm:$0xff]
        %v422 = vld [vmem:[%s204 + $0x478] sm:$0xff]
        %v423 = vld [vmem:[%s204 + $0x480] sm:$0xff]
        %v424 = vld [vmem:[%s204 + $0x488] sm:$0xff]
        %v425 = vld [vmem:[%s204 + $0x490] sm:$0xff]
        %v426 = vld [vmem:[%s204 + $0x498] sm:$0xff]
        %v427 = vld [vmem:[%s204 + $0x4a0] sm:$0xff]
        %v428 = vld [vmem:[%s204 + $0x4a8] sm:$0xff]
        %v429 = vld [vmem:[%s204 + $0x4b0] sm:$0xff]
        %v430 = vld [vmem:[%s204 + $0x4b8] sm:$0xff]
        %v431 = vld [vmem:[%s204 + $0x4c0] sm:$0xff]
        %v432 = vld [vmem:[%s204 + $0x4c8] sm:$0xff]
        %v433 = vld [vmem:[%s204 + $0x4d0] sm:$0xff]
        %v434 = vld [vmem:[%s204 + $0x4d8] sm:$0xff]
        %v435 = vld [vmem:[%s204 + $0x4e0] sm:$0xff]
        %v436 = vld [vmem:[%s204 + $0x4e8] sm:$0xff]
        %v437 = vld [vmem:[%s204 + $0x4f0] sm:$0xff]
        %v438 = vld [vmem:[%s204 + $0x4f8] sm:$0xff]
        %v439 = vld [vmem:[%s204 + $0x500] sm:$0xff]
        %v440 = vld [vmem:[%s204 + $0x508] sm:$0xff]
        %v441 = vld [vmem:[%s204 + $0x510] sm:$0xff]
        %v442 = vld [vmem:[%s204 + $0x518] sm:$0xff]
        %v443 = vld [vmem:[%s204 + $0x520] sm:$0xff]
        %v444 = vld [vmem:[%s204 + $0x528] sm:$0xff]
        %v445 = vld [vmem:[%s204 + $0x530] sm:$0xff]
        %v446 = vld [vmem:[%s204 + $0x538] sm:$0xff]
        %v447 = vld [vmem:[%s204 + $0x540] sm:$0xff]
        %v448 = vld [vmem:[%s204 + $0x548] sm:$0xff]
        %v449 = vld [vmem:[%s204 + $0x550] sm:$0xff]
        %v450 = vld [vmem:[%s204 + $0x558] sm:$0xff]
        %v451 = vld [vmem:[%s204 + $0x560] sm:$0xff]
        %v452 = vld [vmem:[%s204 + $0x568] sm:$0xff]
        %v453 = vld [vmem:[%s204 + $0x570] sm:$0xff]
        %v454 = vld [vmem:[%s204 + $0x578] sm:$0xff]
        %v455 = vld [vmem:[%s204 + $0x580] sm:$0xff]
        %v456 = vld [vmem:[%s204 + $0x588] sm:$0xff]
        %v457 = vld [vmem:[%s204 + $0x590] sm:$0xff]
        %v458 = vld [vmem:[%s204 + $0x598] sm:$0xff]
        %v459 = vld [vmem:[%s204 + $0x5a0] sm:$0xff]
        %v460 = vld [vmem:[%s204 + $0x5a8] sm:$0xff]
        %v461 = vld [vmem:[%s204 + $0x5b0] sm:$0xff]
        %v462 = vld [vmem:[%s204 + $0x5b8] sm:$0xff]
        %v463 = vld [vmem:[%s204 + $0x5c0] sm:$0xff]
        %v464 = vld [vmem:[%s204 + $0x5c8] sm:$0xff]
        %v465 = vld [vmem:[%s204 + $0x5d0] sm:$0xff]
        %v466 = vld [vmem:[%s204 + $0x5d8] sm:$0xff]
        %v467 = vld [vmem:[%s204 + $0x5e0] sm:$0xff]
        %v468 = vld [vmem:[%s204 + $0x5e8] sm:$0xff]
        %v469 = vld [vmem:[%s204 + $0x5f0] sm:$0xff]
        %v470 = vld [vmem:[%s204 + $0x5f8] sm:$0xff]
        %v471 = vld [vmem:[%s204 + $0x600] sm:$0xff]
        %v472 = vld [vmem:[%s204 + $0x608] sm:$0xff]
        %v473 = vld [vmem:[%s204 + $0x610] sm:$0xff]
        %v474 = vld [vmem:[%s204 + $0x618] sm:$0xff]
        %v475 = vld [vmem:[%s204 + $0x620] sm:$0xff]
        %v476 = vld [vmem:[%s204 + $0x628] sm:$0xff]
        %v477 = vld [vmem:[%s204 + $0x630] sm:$0xff]
        %v478 = vld [vmem:[%s204 + $0x638] sm:$0xff]
        %v479 = vld [vmem:[%s204 + $0x640] sm:$0xff]
        %v480 = vld [vmem:[%s204 + $0x648] sm:$0xff]
        %v481 = vld [vmem:[%s204 + $0x650] sm:$0xff]
        %v482 = vld [vmem:[%s204 + $0x658] sm:$0xff]
        %v483 = vld [vmem:[%s204 + $0x660] sm:$0xff]
        %v484 = vld [vmem:[%s204 + $0x668] sm:$0xff]
        %v485 = vld [vmem:[%s204 + $0x670] sm:$0xff]
        %v486 = vld [vmem:[%s204 + $0x678] sm:$0xff]
        %v487 = vld [vmem:[%s204 + $0x680] sm:$0xff]
        %v488 = vld [vmem:[%s204 + $0x688] sm:$0xff]
        %v489 = vld [vmem:[%s204 + $0x690] sm:$0xff]
        %v490 = vld [vmem:[%s204 + $0x698] sm:$0xff]
        %v491 = vld [vmem:[%s204 + $0x6a0] sm:$0xff]
        %v492 = vld [vmem:[%s204 + $0x6a8] sm:$0xff]
        %v493 = vld [vmem:[%s204 + $0x6b0] sm:$0xff]
        %v494 = vld [vmem:[%s204 + $0x6b8] sm:$0xff]
        %v495 = vld [vmem:[%s204 + $0x6c0] sm:$0xff]
        %v496 = vld [vmem:[%s204 + $0x6c8] sm:$0xff]
        %v497 = vld [vmem:[%s204 + $0x6d0] sm:$0xff]
        %v498 = vld [vmem:[%s204 + $0x6d8] sm:$0xff]
        %v499 = vld [vmem:[%s204 + $0x6e0] sm:$0xff]
        %v500 = vld [vmem:[%s204 + $0x6e8] sm:$0xff]
        %v501 = vld [vmem:[%s204 + $0x6f0] sm:$0xff]
        %v502 = vld [vmem:[%s204 + $0x6f8] sm:$0xff]
        %v503 = vld [vmem:[%s204 + $0x700] sm:$0xff]
        %v504 = vld [vmem:[%s204 + $0x708] sm:$0xff]
        %v505 = vld [vmem:[%s204 + $0x710] sm:$0xff]
        %v506 = vld [vmem:[%s204 + $0x718] sm:$0xff]
        %v507 = vld [vmem:[%s204 + $0x720] sm:$0xff]
        %v508 = vld [vmem:[%s204 + $0x728] sm:$0xff]
        %v509 = vld [vmem:[%s204 + $0x730] sm:$0xff]
        %v510 = vld [vmem:[%s204 + $0x738] sm:$0xff]
        %v511 = vld [vmem:[%s204 + $0x740] sm:$0xff]
        %v512 = vld [vmem:[%s204 + $0x748] sm:$0xff]
        %v513 = vld [vmem:[%s204 + $0x750] sm:$0xff]
        %v514 = vld [vmem:[%s204 + $0x758] sm:$0xff]
        %v515 = vld [vmem:[%s204 + $0x760] sm:$0xff]
        %v516 = vld [vmem:[%s204 + $0x768] sm:$0xff]
        %v517 = vld [vmem:[%s204 + $0x770] sm:$0xff]
        %v518 = vld [vmem:[%s204 + $0x778] sm:$0xff]
        %v519 = vld [vmem:[%s204 + $0x780] sm:$0xff]
        %v520 = vld [vmem:[%s204 + $0x788] sm:$0xff]
        %v521 = vld [vmem:[%s204 + $0x790] sm:$0xff]
        %v522 = vld [vmem:[%s204 + $0x798] sm:$0xff]
        %v523 = vld [vmem:[%s204 + $0x7a0] sm:$0xff]
        %v524 = vld [vmem:[%s204 + $0x7a8] sm:$0xff]
        %v525 = vld [vmem:[%s204 + $0x7b0] sm:$0xff]
        %v526 = vld [vmem:[%s204 + $0x7b8] sm:$0xff]
        %v527 = vld [vmem:[%s204 + $0x7c0] sm:$0xff]
        %v528 = vld [vmem:[%s204 + $0x7c8] sm:$0xff]
        %v529 = vld [vmem:[%s204 + $0x7d0] sm:$0xff]
        %v530 = vld [vmem:[%s204 + $0x7d8] sm:$0xff]
        %v531 = vld [vmem:[%s204 + $0x7e0] sm:$0xff]
        %v532 = vld [vmem:[%s204 + $0x7e8] sm:$0xff]
        %v533 = vld [vmem:[%s204 + $0x7f0] sm:$0xff]
        %v534 = vld [vmem:[%s204 + $0x7f8] sm:$0xff]
        %v535 = vld [vmem:[%s204 + $0x800] sm:$0xff]
        %v536 = vld [vmem:[%s204 + $0x808] sm:$0xff]
        %v537 = vld [vmem:[%s204 + $0x810] sm:$0xff]
        %v538 = vld [vmem:[%s204 + $0x818] sm:$0xff]
        %v539 = vld [vmem:[%s204 + $0x820] sm:$0xff]
        %v540 = vld [vmem:[%s204 + $0x828] sm:$0xff]
        %v541 = vld [vmem:[%s204 + $0x830] sm:$0xff]
        %v542 = vld [vmem:[%s204 + $0x838] sm:$0xff]
        %v543 = vld [vmem:[%s204 + $0x840] sm:$0xff]
        %v544 = vld [vmem:[%s204 + $0x848] sm:$0xff]
        %v545 = vld [vmem:[%s204 + $0x850] sm:$0xff]
        %v546 = vld [vmem:[%s204 + $0x858] sm:$0xff]
        %v547 = vld [vmem:[%s204 + $0x860] sm:$0xff]
        %v548 = vld [vmem:[%s204 + $0x868] sm:$0xff]
        %v549 = vld [vmem:[%s204 + $0x870] sm:$0xff]
        %v550 = vld [vmem:[%s204 + $0x878] sm:$0xff]
        %v551 = vld [vmem:[%s204 + $0x880] sm:$0xff]
        %v552 = vld [vmem:[%s204 + $0x888] sm:$0xff]
        %v553 = vld [vmem:[%s204 + $0x890] sm:$0xff]
        %v554 = vld [vmem:[%s204 + $0x898] sm:$0xff]
        %v555 = vld [vmem:[%s204 + $0x8a0] sm:$0xff]
        %v556 = vld [vmem:[%s204 + $0x8a8] sm:$0xff]
        %v557 = vld [vmem:[%s204 + $0x8b0] sm:$0xff]
        %v558 = vld [vmem:[%s204 + $0x8b8] sm:$0xff]
        %v559 = vld [vmem:[%s204 + $0x8c0] sm:$0xff]
        %v560 = vld [vmem:[%s204 + $0x8c8] sm:$0xff]
        %v561 = vld [vmem:[%s204 + $0x8d0] sm:$0xff]
        %v562 = vld [vmem:[%s204 + $0x8d8] sm:$0xff]
        %v563 = vld [vmem:[%s204 + $0x8e0] sm:$0xff]
        %v564 = vld [vmem:[%s204 + $0x8e8] sm:$0xff]
        %v565 = vld [vmem:[%s204 + $0x8f0] sm:$0xff]
        %v566 = vld [vmem:[%s204 + $0x8f8] sm:$0xff]
        %v567 = vld [vmem:[%s204 + $0x900] sm:$0xff]
        %v568 = vld [vmem:[%s204 + $0x908] sm:$0xff]
        %v569 = vld [vmem:[%s204 + $0x910] sm:$0xff]
        %v570 = vld [vmem:[%s204 + $0x918] sm:$0xff]
        %v571 = vld [vmem:[%s204 + $0x920] sm:$0xff]
        %v572 = vld [vmem:[%s204 + $0x928] sm:$0xff]
        %610 = vst [vmem:[#allocation1] ss:$4 sm:$0xff] %v242
        %s611 = scalar_lea.vmem [#allocation1], 32
        %612 = vst [vmem:[%s611] ss:$4 sm:$0xff] %v243
        %v613 = vld.sshfl [vmem:[#allocation1] sm:$0xff pattern:$0x73625140]
        %v614 = vld.sshfl [vmem:[#allocation1 + $0x8] sm:$0xff pattern:$0x73625140]
        %v615 = vld.sshfl [vmem:[#allocation1 + $0x10] sm:$0xff pattern:$0x73625140]
        %v616 = vld.sshfl [vmem:[#allocation1 + $0x18] sm:$0xff pattern:$0x73625140]
        %v617 = vld.sshfl [vmem:[#allocation1 + $0x20] sm:$0xff pattern:$0x73625140]
        %v618 = vld.sshfl [vmem:[#allocation1 + $0x28] sm:$0xff pattern:$0x73625140]
        %v619 = vld.sshfl [vmem:[#allocation1 + $0x30] sm:$0xff pattern:$0x73625140]
        %v620 = vld.sshfl [vmem:[#allocation1 + $0x38] sm:$0xff pattern:$0x73625140]
        %621 = vst [vmem:[#allocation1] ss:$4 sm:$0xff] %v244
        %622 = vst [vmem:[%s611] ss:$4 sm:$0xff] %v245
        %v623 = vld.sshfl [vmem:[#allocation1] sm:$0xff pattern:$0x73625140]
        %v624 = vld.sshfl [vmem:[#allocation1 + $0x8] sm:$0xff pattern:$0x73625140]
        %v625 = vld.sshfl [vmem:[#allocation1 + $0x10] sm:$0xff pattern:$0x73625140]
        %v626 = vld.sshfl [vmem:[#allocation1 + $0x18] sm:$0xff pattern:$0x73625140]
        %v627 = vld.sshfl [vmem:[#allocation1 + $0x20] sm:$0xff pattern:$0x73625140]
        %v628 = vld.sshfl [vmem:[#allocation1 + $0x28] sm:$0xff pattern:$0x73625140]
        %v629 = vld.sshfl [vmem:[#allocation1 + $0x30] sm:$0xff pattern:$0x73625140]
        %v630 = vld.sshfl [vmem:[#allocation1 + $0x38] sm:$0xff pattern:$0x73625140]
        %631 = vst [vmem:[#allocation1] ss:$4 sm:$0xff] %v246
        %632 = vst [vmem:[%s611] ss:$4 sm:$0xff] %v247
        %v633 = vld.sshfl [vmem:[#allocation1] sm:$0xff pattern:$0x73625140]
        %v634 = vld.sshfl [vmem:[#allocation1 + $0x8] sm:$0xff pattern:$0x73625140]
        %v635 = vld.sshfl [vmem:[#allocation1 + $0x10] sm:$0xff pattern:$0x73625140]
        %v636 = vld.sshfl [vmem:[#allocation1 + $0x18] sm:$0xff pattern:$0x73625140]
        %v637 = vld.sshfl [vmem:[#allocation1 + $0x20] sm:$0xff pattern:$0x73625140]
        %v638 = vld.sshfl [vmem:[#allocation1 + $0x28] sm:$0xff pattern:$0x73625140]
        %v639 = vld.sshfl [vmem:[#allocation1 + $0x30] sm:$0xff pattern:$0x73625140]
        %v640 = vld.sshfl [vmem:[#allocation1 + $0x38] sm:$0xff pattern:$0x73625140]
        %641 = vst [vmem:[#allocation1] ss:$4 sm:$0xff] %v248
        %642 = vst [vmem:[%s611] ss:$4 sm:$0xff] %v249
        %v643 = vld.sshfl [vmem:[#allocation1] sm:$0xff pattern:$0x73625140]
        %v644 = vld.sshfl [vmem:[#allocation1 + $0x8] sm:$0xff pattern:$0x73625140]
        %v645 = vld.sshfl [vmem:[#allocation1 + $0x10] sm:$0xff pattern:$0x73625140]
        %v646 = vld.sshfl [vmem:[#allocation1 + $0x18] sm:$0xff pattern:$0x73625140]
        %v647 = vld.sshfl [vmem:[#allocation1 + $0x20] sm:$0xff pattern:$0x73625140]
        %v648 = vld.sshfl [vmem:[#allocation1 + $0x28] sm:$0xff pattern:$0x73625140]
        %v649 = vld.sshfl [vmem:[#allocation1 + $0x30] sm:$0xff pattern:$0x73625140]
        %v650 = vld.sshfl [vmem:[#allocation1 + $0x38] sm:$0xff pattern:$0x73625140]
        %651 = vst [vmem:[#allocation1] ss:$4 sm:$0xff] %v250
        %652 = vst [vmem:[%s611] ss:$4 sm:$0xff] %v251
        %v653 = vld.sshfl [vmem:[#allocation1] sm:$0xff pattern:$0x73625140]
        %v654 = vld.sshfl [vmem:[#allocation1 + $0x8] sm:$0xff pattern:$0x73625140]
        %v655 = vld.sshfl [vmem:[#allocation1 + $0x10] sm:$0xff pattern:$0x73625140]
        %v656 = vld.sshfl [vmem:[#allocation1 + $0x18] sm:$0xff pattern:$0x73625140]
        %v657 = vld.sshfl [vmem:[#allocation1 + $0x20] sm:$0xff pattern:$0x73625140]
        %v658 = vld.sshfl [vmem:[#allocation1 + $0x28] sm:$0xff pattern:$0x73625140]
        %v659 = vld.sshfl [vmem:[#allocation1 + $0x30] sm:$0xff pattern:$0x73625140]
        %v660 = vld.sshfl [vmem:[#allocation1 + $0x38] sm:$0xff pattern:$0x73625140]
        %661 = vst [vmem:[#allocation1] ss:$4 sm:$0xff] %v252
        %662 = vst [vmem:[%s611] ss:$4 sm:$0xff] %v253
        %v663 = vld.sshfl [vmem:[#allocation1] sm:$0xff pattern:$0x73625140]
        %v664 = vld.sshfl [vmem:[#allocation1 + $0x8] sm:$0xff pattern:$0x73625140]
        %v665 = vld.sshfl [vmem:[#allocation1 + $0x10] sm:$0xff pattern:$0x73625140]
        %v666 = vld.sshfl [vmem:[#allocation1 + $0x18] sm:$0xff pattern:$0x73625140]
        %v667 = vld.sshfl [vmem:[#allocation1 + $0x20] sm:$0xff pattern:$0x73625140]
        %v668 = vld.sshfl [vmem:[#allocation1 + $0x28] sm:$0xff pattern:$0x73625140]
        %v669 = vld.sshfl [vmem:[#allocation1 + $0x30] sm:$0xff pattern:$0x73625140]
        %v670 = vld.sshfl [vmem:[#allocation1 + $0x38] sm:$0xff pattern:$0x73625140]
        %671 = vst [vmem:[#allocation1] ss:$4 sm:$0xff] %v254
        %672 = vst [vmem:[%s611] ss:$4 sm:$0xff] %v255
        %v673 = vld.sshfl [vmem:[#allocation1] sm:$0xff pattern:$0x73625140]
        %v674 = vld.sshfl [vmem:[#allocation1 + $0x8] sm:$0xff pattern:$0x73625140]
        %v675 = vld.sshfl [vmem:[#allocation1 + $0x10] sm:$0xff pattern:$0x73625140]
        %v676 = vld.sshfl [vmem:[#allocation1 + $0x18] sm:$0xff pattern:$0x73625140]
        %v677 = vld.sshfl [vmem:[#allocation1 + $0x20] sm:$0xff pattern:$0x73625140]
        %v678 = vld.sshfl [vmem:[#allocation1 + $0x28] sm:$0xff pattern:$0x73625140]
        %v679 = vld.sshfl [vmem:[#allocation1 + $0x30] sm:$0xff pattern:$0x73625140]
        %v680 = vld.sshfl [vmem:[#allocation1 + $0x38] sm:$0xff pattern:$0x73625140]
        %681 = vst [vmem:[#allocation1] ss:$4 sm:$0xff] %v256
        %682 = vst [vmem:[%s611] ss:$4 sm:$0xff] %v257
        %v683 = vld.sshfl [vmem:[#allocation1] sm:$0xff pattern:$0x73625140]
        %v684 = vld.sshfl [vmem:[#allocation1 + $0x8] sm:$0xff pattern:$0x73625140]
        %v685 = vld.sshfl [vmem:[#allocation1 + $0x10] sm:$0xff pattern:$0x73625140]
        %v686 = vld.sshfl [vmem:[#allocation1 + $0x18] sm:$0xff pattern:$0x73625140]
        %v687 = vld.sshfl [vmem:[#allocation1 + $0x20] sm:$0xff pattern:$0x73625140]
        %v688 = vld.sshfl [vmem:[#allocation1 + $0x28] sm:$0xff pattern:$0x73625140]
        %v689 = vld.sshfl [vmem:[#allocation1 + $0x30] sm:$0xff pattern:$0x73625140]
        %v690 = vld.sshfl [vmem:[#allocation1 + $0x38] sm:$0xff pattern:$0x73625140]
        %691 = vst [vmem:[#allocation1] ss:$4 sm:$0xff] %v258
        %692 = vst [vmem:[%s611] ss:$4 sm:$0xff] %v259
        %v693 = vld.sshfl [vmem:[#allocation1] sm:$0xff pattern:$0x73625140]
        %v694 = vld.sshfl [vmem:[#allocation1 + $0x8] sm:$0xff pattern:$0x73625140]
        %v695 = vld.sshfl [vmem:[#allocation1 + $0x10] sm:$0xff pattern:$0x73625140]
        %v696 = vld.sshfl [vmem:[#allocation1 + $0x18] sm:$0xff pattern:$0x73625140]
        %v697 = vld.sshfl [vmem:[#allocation1 + $0x20] sm:$0xff pattern:$0x73625140]
        %v698 = vld.sshfl [vmem:[#allocation1 + $0x28] sm:$0xff pattern:$0x73625140]
        %v699 = vld.sshfl [vmem:[#allocation1 + $0x30] sm:$0xff pattern:$0x73625140]
        %v700 = vld.sshfl [vmem:[#allocation1 + $0x38] sm:$0xff pattern:$0x73625140]
        %701 = vst [vmem:[#allocation1] ss:$4 sm:$0xff] %v260
        %702 = vst [vmem:[%s611] ss:$4 sm:$0xff] %v261
        %v703 = vld.sshfl [vmem:[#allocation1] sm:$0xff pattern:$0x73625140]
        %v704 = vld.sshfl [vmem:[#allocation1 + $0x8] sm:$0xff pattern:$0x73625140]
        %v705 = vld.sshfl [vmem:[#allocation1 + $0x10] sm:$0xff pattern:$0x73625140]
        %v706 = vld.sshfl [vmem:[#allocation1 + $0x18] sm:$0xff pattern:$0x73625140]
        %v707 = vld.sshfl [vmem:[#allocation1 + $0x20] sm:$0xff pattern:$0x73625140]
        %v708 = vld.sshfl [vmem:[#allocation1 + $0x28] sm:$0xff pattern:$0x73625140]
        %v709 = vld.sshfl [vmem:[#allocation1 + $0x30] sm:$0xff pattern:$0x73625140]
        %v710 = vld.sshfl [vmem:[#allocation1 + $0x38] sm:$0xff pattern:$0x73625140]
        %711 = vst [vmem:[#allocation1] ss:$4 sm:$0xff] %v262
        %712 = vst [vmem:[%s611] ss:$4 sm:$0xff] %v263
        %v713 = vld.sshfl [vmem:[#allocation1] sm:$0xff pattern:$0x73625140]
        %v714 = vld.sshfl [vmem:[#allocation1 + $0x8] sm:$0xff pattern:$0x73625140]
        %v715 = vld.sshfl [vmem:[#allocation1 + $0x10] sm:$0xff pattern:$0x73625140]
        %v716 = vld.sshfl [vmem:[#allocation1 + $0x18] sm:$0xff pattern:$0x73625140]
        %v717 = vld.sshfl [vmem:[#allocation1 + $0x20] sm:$0xff pattern:$0x73625140]
        %v718 = vld.sshfl [vmem:[#allocation1 + $0x28] sm:$0xff pattern:$0x73625140]
        %v719 = vld.sshfl [vmem:[#allocation1 + $0x30] sm:$0xff pattern:$0x73625140]
        %v720 = vld.sshfl [vmem:[#allocation1 + $0x38] sm:$0xff pattern:$0x73625140]
        %721 = vst [vmem:[#allocation1] ss:$4 sm:$0xff] %v264
        %722 = vst [vmem:[%s611] ss:$4 sm:$0xff] %v265
        %v723 = vld.sshfl [vmem:[#allocation1] sm:$0xff pattern:$0x73625140]
        %v724 = vld.sshfl [vmem:[#allocation1 + $0x8] sm:$0xff pattern:$0x73625140]
        %v725 = vld.sshfl [vmem:[#allocation1 + $0x10] sm:$0xff pattern:$0x73625140]
        %v726 = vld.sshfl [vmem:[#allocation1 + $0x18] sm:$0xff pattern:$0x73625140]
        %v727 = vld.sshfl [vmem:[#allocation1 + $0x20] sm:$0xff pattern:$0x73625140]
        %v728 = vld.sshfl [vmem:[#allocation1 + $0x28] sm:$0xff pattern:$0x73625140]
        %v729 = vld.sshfl [vmem:[#allocation1 + $0x30] sm:$0xff pattern:$0x73625140]
        %v730 = vld.sshfl [vmem:[#allocation1 + $0x38] sm:$0xff pattern:$0x73625140]
        %731 = vst [vmem:[#allocation1] ss:$4 sm:$0xff] %v266
        %732 = vst [vmem:[%s611] ss:$4 sm:$0xff] %v267
        %v733 = vld.sshfl [vmem:[#allocation1] sm:$0xff pattern:$0x73625140]
        %v734 = vld.sshfl [vmem:[#allocation1 + $0x8] sm:$0xff pattern:$0x73625140]
        %v735 = vld.sshfl [vmem:[#allocation1 + $0x10] sm:$0xff pattern:$0x73625140]
        %v736 = vld.sshfl [vmem:[#allocation1 + $0x18] sm:$0xff pattern:$0x73625140]
        %v737 = vld.sshfl [vmem:[#allocation1 + $0x20] sm:$0xff pattern:$0x73625140]
        %v738 = vld.sshfl [vmem:[#allocation1 + $0x28] sm:$0xff pattern:$0x73625140]
        %v739 = vld.sshfl [vmem:[#allocation1 + $0x30] sm:$0xff pattern:$0x73625140]
        %v740 = vld.sshfl [vmem:[#allocation1 + $0x38] sm:$0xff pattern:$0x73625140]
        %741 = vst [vmem:[#allocation1] ss:$4 sm:$0xff] %v268
        %742 = vst [vmem:[%s611] ss:$4 sm:$0xff] %v269
        %v743 = vld.sshfl [vmem:[#allocation1] sm:$0xff pattern:$0x73625140]
        %v744 = vld.sshfl [vmem:[#allocation1 + $0x8] sm:$0xff pattern:$0x73625140]
        %v745 = vld.sshfl [vmem:[#allocation1 + $0x10] sm:$0xff pattern:$0x73625140]
        %v746 = vld.sshfl [vmem:[#allocation1 + $0x18] sm:$0xff pattern:$0x73625140]
        %v747 = vld.sshfl [vmem:[#allocation1 + $0x20] sm:$0xff pattern:$0x73625140]
        %v748 = vld.sshfl [vmem:[#allocation1 + $0x28] sm:$0xff pattern:$0x73625140]
        %v749 = vld.sshfl [vmem:[#allocation1 + $0x30] sm:$0xff pattern:$0x73625140]
        %v750 = vld.sshfl [vmem:[#allocation1 + $0x38] sm:$0xff pattern:$0x73625140]
        %751 = vst [vmem:[#allocation1] ss:$4 sm:$0xff] %v270
        %752 = vst [vmem:[%s611] ss:$4 sm:$0xff] %v271
        %v753 = vld.sshfl [vmem:[#allocation1] sm:$0xff pattern:$0x73625140]
        %v754 = vld.sshfl [vmem:[#allocation1 + $0x8] sm:$0xff pattern:$0x73625140]
        %v755 = vld.sshfl [vmem:[#allocation1 + $0x10] sm:$0xff pattern:$0x73625140]
        %v756 = vld.sshfl [vmem:[#allocation1 + $0x18] sm:$0xff pattern:$0x73625140]
        %v757 = vld.sshfl [vmem:[#allocation1 + $0x20] sm:$0xff pattern:$0x73625140]
        %v758 = vld.sshfl [vmem:[#allocation1 + $0x28] sm:$0xff pattern:$0x73625140]
        %v759 = vld.sshfl [vmem:[#allocation1 + $0x30] sm:$0xff pattern:$0x73625140]
        %v760 = vld.sshfl [vmem:[#allocation1 + $0x38] sm:$0xff pattern:$0x73625140]
        %761 = vst [vmem:[#allocation1] ss:$4 sm:$0xff] %v272
        %762 = vst [vmem:[%s611] ss:$4 sm:$0xff] %v273
        %v763 = vld.sshfl [vmem:[#allocation1] sm:$0xff pattern:$0x73625140]
        %v764 = vld.sshfl [vmem:[#allocation1 + $0x8] sm:$0xff pattern:$0x73625140]
        %v765 = vld.sshfl [vmem:[#allocation1 + $0x10] sm:$0xff pattern:$0x73625140]
        %v766 = vld.sshfl [vmem:[#allocation1 + $0x18] sm:$0xff pattern:$0x73625140]
        %v767 = vld.sshfl [vmem:[#allocation1 + $0x20] sm:$0xff pattern:$0x73625140]
        %v768 = vld.sshfl [vmem:[#allocation1 + $0x28] sm:$0xff pattern:$0x73625140]
        %v769 = vld.sshfl [vmem:[#allocation1 + $0x30] sm:$0xff pattern:$0x73625140]
        %v770 = vld.sshfl [vmem:[#allocation1 + $0x38] sm:$0xff pattern:$0x73625140]
        %771 = vst [vmem:[#allocation1] ss:$4 sm:$0xff] %v274
        %772 = vst [vmem:[%s611] ss:$4 sm:$0xff] %v275
        %v773 = vld.sshfl [vmem:[#allocation1] sm:$0xff pattern:$0x73625140]
        %v774 = vld.sshfl [vmem:[#allocation1 + $0x8] sm:$0xff pattern:$0x73625140]
        %v775 = vld.sshfl [vmem:[#allocation1 + $0x10] sm:$0xff pattern:$0x73625140]
        %v776 = vld.sshfl [vmem:[#allocation1 + $0x18] sm:$0xff pattern:$0x73625140]
        %v777 = vld.sshfl [vmem:[#allocation1 + $0x20] sm:$0xff pattern:$0x73625140]
        %v778 = vld.sshfl [vmem:[#allocation1 + $0x28] sm:$0xff pattern:$0x73625140]
        %v779 = vld.sshfl [vmem:[#allocation1 + $0x30] sm:$0xff pattern:$0x73625140]
        %v780 = vld.sshfl [vmem:[#allocation1 + $0x38] sm:$0xff pattern:$0x73625140]
        %781 = vst [vmem:[#allocation1] ss:$4 sm:$0xff] %v276
        %782 = vst [vmem:[%s611] ss:$4 sm:$0xff] %v277
        %v783 = vld.sshfl [vmem:[#allocation1] sm:$0xff pattern:$0x73625140]
        %v784 = vld.sshfl [vmem:[#allocation1 + $0x8] sm:$0xff pattern:$0x73625140]
        %v785 = vld.sshfl [vmem:[#allocation1 + $0x10] sm:$0xff pattern:$0x73625140]
        %v786 = vld.sshfl [vmem:[#allocation1 + $0x18] sm:$0xff pattern:$0x73625140]
        %v787 = vld.sshfl [vmem:[#allocation1 + $0x20] sm:$0xff pattern:$0x73625140]
        %v788 = vld.sshfl [vmem:[#allocation1 + $0x28] sm:$0xff pattern:$0x73625140]
        %v789 = vld.sshfl [vmem:[#allocation1 + $0x30] sm:$0xff pattern:$0x73625140]
        %v790 = vld.sshfl [vmem:[#allocation1 + $0x38] sm:$0xff pattern:$0x73625140]
        %791 = vst [vmem:[#allocation1] ss:$4 sm:$0xff] %v278
        %v792 = vld.sshfl [vmem:[#allocation1] sm:$0xff pattern:$0x73625140]
        %v793 = vld.sshfl [vmem:[#allocation1 + $0x8] sm:$0xff pattern:$0x73625140]
        %v794 = vld.sshfl [vmem:[#allocation1 + $0x10] sm:$0xff pattern:$0x73625140]
        %942 = vmatpush.xpose.msra.mxu0 0.0
        %943 = vmatpush.xpose.msra.mxu0 0.0
        %944 = vmatpush.xpose.msra.mxu0 0.0
        %945 = vmatpush.xpose.msra.mxu0 0.0
        %946 = vmatpush.xpose.msra.mxu0 0.0
        %947 = vmatpush.xpose.msra.mxu0 0.0
        %948 = vmatpush.xpose.msra.mxu0 0.0
        %949 = vmatpush.xpose.msra.mxu0 0.0
        %950 = vmatpush.xpose.msra.mxu0 0.0
        %951 = vmatpush.xpose.msra.mxu0 0.0
        %952 = vmatpush.xpose.msra.mxu0 0.0
        %953 = vmatpush.xpose.msra.mxu0 0.0
        %954 = vmatpush.xpose.msra.mxu0 0.0
        %955 = vmatpush.xpose.msra.mxu0 0.0
        %956 = vmatpush.xpose.msra.mxu0 %v426
        %957 = vmatpush.xpose.msra.mxu0 %v279
        %958 = vmatmul.f32.gmra.mxu0 %v613
        %v959 = vpop.f32.mrf.mxu0
        %v960 = vadd.f32 0.0, %v959
        %961 = vdwg.mxu0
        %962 = vmatpush.xpose.msra.mxu0 0.0
        %963 = vmatpush.xpose.msra.mxu0 0.0
        %964 = vmatpush.xpose.msra.mxu0 0.0
        %965 = vmatpush.xpose.msra.mxu0 0.0
        %966 = vmatpush.xpose.msra.mxu0 0.0
        %967 = vmatpush.xpose.msra.mxu0 0.0
        %968 = vmatpush.xpose.msra.mxu0 0.0
        %969 = vmatpush.xpose.msra.mxu0 0.0
        %970 = vmatpush.xpose.msra.mxu0 0.0
        %971 = vmatpush.xpose.msra.mxu0 0.0
        %972 = vmatpush.xpose.msra.mxu0 0.0
        %973 = vmatpush.xpose.msra.mxu0 0.0
        %974 = vmatpush.xpose.msra.mxu0 0.0
        %975 = vmatpush.xpose.msra.mxu0 0.0
        %976 = vmatpush.xpose.msra.mxu0 %v427
        %977 = vmatpush.xpose.msra.mxu0 %v280
        %978 = vmatmul.f32.gmra.mxu0 %v614
        %v979 = vpop.f32.mrf.mxu0
        %v980 = vadd.f32 %v960, %v979
        %981 = vdwg.mxu0
        %982 = vmatpush.xpose.msra.mxu0 0.0
        %983 = vmatpush.xpose.msra.mxu0 0.0
        %984 = vmatpush.xpose.msra.mxu0 0.0
        %985 = vmatpush.xpose.msra.mxu0 0.0
        %986 = vmatpush.xpose.msra.mxu0 0.0
        %987 = vmatpush.xpose.msra.mxu0 0.0
        %988 = vmatpush.xpose.msra.mxu0 0.0
        %989 = vmatpush.xpose.msra.mxu0 0.0
        %990 = vmatpush.xpose.msra.mxu0 0.0
        %991 = vmatpush.xpose.msra.mxu0 0.0
        %992 = vmatpush.xpose.msra.mxu0 0.0
        %993 = vmatpush.xpose.msra.mxu0 0.0
        %994 = vmatpush.xpose.msra.mxu0 0.0
        %995 = vmatpush.xpose.msra.mxu0 0.0
        %996 = vmatpush.xpose.msra.mxu0 %v428
        %997 = vmatpush.xpose.msra.mxu0 %v281
        %998 = vmatmul.f32.gmra.mxu0 %v615
        %v999 = vpop.f32.mrf.mxu0
        %v1000 = vadd.f32 %v980, %v999
        %1001 = vdwg.mxu0
        %1002 = vmatpush.xpose.msra.mxu0 0.0
        %1003 = vmatpush.xpose.msra.mxu0 0.0
        %1004 = vmatpush.xpose.msra.mxu0 0.0
        %1005 = vmatpush.xpose.msra.mxu0 0.0
        %1006 = vmatpush.xpose.msra.mxu0 0.0
        %1007 = vmatpush.xpose.msra.mxu0 0.0
        %1008 = vmatpush.xpose.msra.mxu0 0.0
        %1009 = vmatpush.xpose.msra.mxu0 0.0
        %1010 = vmatpush.xpose.msra.mxu0 0.0
        %1011 = vmatpush.xpose.msra.mxu0 0.0
        %1012 = vmatpush.xpose.msra.mxu0 0.0
        %1013 = vmatpush.xpose.msra.mxu0 0.0
        %1014 = vmatpush.xpose.msra.mxu0 0.0
        %1015 = vmatpush.xpose.msra.mxu0 0.0
        %1016 = vmatpush.xpose.msra.mxu0 %v429
        %1017 = vmatpush.xpose.msra.mxu0 %v282
        %1018 = vmatmul.f32.gmra.mxu0 %v616
        %v1019 = vpop.f32.mrf.mxu0
        %v1020 = vadd.f32 %v1000, %v1019
        %1021 = vdwg.mxu0
        %1022 = vmatpush.xpose.msra.mxu0 0.0
        %1023 = vmatpush.xpose.msra.mxu0 0.0
        %1024 = vmatpush.xpose.msra.mxu0 0.0
        %1025 = vmatpush.xpose.msra.mxu0 0.0
        %1026 = vmatpush.xpose.msra.mxu0 0.0
        %1027 = vmatpush.xpose.msra.mxu0 0.0
        %1028 = vmatpush.xpose.msra.mxu0 0.0
        %1029 = vmatpush.xpose.msra.mxu0 0.0
        %1030 = vmatpush.xpose.msra.mxu0 0.0
        %1031 = vmatpush.xpose.msra.mxu0 0.0
        %1032 = vmatpush.xpose.msra.mxu0 0.0
        %1033 = vmatpush.xpose.msra.mxu0 0.0
        %1034 = vmatpush.xpose.msra.mxu0 0.0
        %1035 = vmatpush.xpose.msra.mxu0 0.0
        %1036 = vmatpush.xpose.msra.mxu0 %v430
        %1037 = vmatpush.xpose.msra.mxu0 %v283
        %1038 = vmatmul.f32.gmra.mxu0 %v617
        %v1039 = vpop.f32.mrf.mxu0
        %v1040 = vadd.f32 %v1020, %v1039
        %1041 = vdwg.mxu0
        %1042 = vmatpush.xpose.msra.mxu0 0.0
        %1043 = vmatpush.xpose.msra.mxu0 0.0
        %1044 = vmatpush.xpose.msra.mxu0 0.0
        %1045 = vmatpush.xpose.msra.mxu0 0.0
        %1046 = vmatpush.xpose.msra.mxu0 0.0
        %1047 = vmatpush.xpose.msra.mxu0 0.0
        %1048 = vmatpush.xpose.msra.mxu0 0.0
        %1049 = vmatpush.xpose.msra.mxu0 0.0
        %1050 = vmatpush.xpose.msra.mxu0 0.0
        %1051 = vmatpush.xpose.msra.mxu0 0.0
        %1052 = vmatpush.xpose.msra.mxu0 0.0
        %1053 = vmatpush.xpose.msra.mxu0 0.0
        %1054 = vmatpush.xpose.msra.mxu0 0.0
        %1055 = vmatpush.xpose.msra.mxu0 0.0
        %1056 = vmatpush.xpose.msra.mxu0 %v431
        %1057 = vmatpush.xpose.msra.mxu0 %v284
        %1058 = vmatmul.f32.gmra.mxu0 %v618
        %v1059 = vpop.f32.mrf.mxu0
        %v1060 = vadd.f32 %v1040, %v1059
        %1061 = vdwg.mxu0
        %1062 = vmatpush.xpose.msra.mxu0 0.0
        %1063 = vmatpush.xpose.msra.mxu0 0.0
        %1064 = vmatpush.xpose.msra.mxu0 0.0
        %1065 = vmatpush.xpose.msra.mxu0 0.0
        %1066 = vmatpush.xpose.msra.mxu0 0.0
        %1067 = vmatpush.xpose.msra.mxu0 0.0
        %1068 = vmatpush.xpose.msra.mxu0 0.0
        %1069 = vmatpush.xpose.msra.mxu0 0.0
        %1070 = vmatpush.xpose.msra.mxu0 0.0
        %1071 = vmatpush.xpose.msra.mxu0 0.0
        %1072 = vmatpush.xpose.msra.mxu0 0.0
        %1073 = vmatpush.xpose.msra.mxu0 0.0
        %1074 = vmatpush.xpose.msra.mxu0 0.0
        %1075 = vmatpush.xpose.msra.mxu0 0.0
        %1076 = vmatpush.xpose.msra.mxu0 %v432
        %1077 = vmatpush.xpose.msra.mxu0 %v285
        %1078 = vmatmul.f32.gmra.mxu0 %v619
        %v1079 = vpop.f32.mrf.mxu0
        %v1080 = vadd.f32 %v1060, %v1079
        %1081 = vdwg.mxu0
        %1082 = vmatpush.xpose.msra.mxu0 0.0
        %1083 = vmatpush.xpose.msra.mxu0 0.0
        %1084 = vmatpush.xpose.msra.mxu0 0.0
        %1085 = vmatpush.xpose.msra.mxu0 0.0
        %1086 = vmatpush.xpose.msra.mxu0 0.0
        %1087 = vmatpush.xpose.msra.mxu0 0.0
        %1088 = vmatpush.xpose.msra.mxu0 0.0
        %1089 = vmatpush.xpose.msra.mxu0 0.0
        %1090 = vmatpush.xpose.msra.mxu0 0.0
        %1091 = vmatpush.xpose.msra.mxu0 0.0
        %1092 = vmatpush.xpose.msra.mxu0 0.0
        %1093 = vmatpush.xpose.msra.mxu0 0.0
        %1094 = vmatpush.xpose.msra.mxu0 0.0
        %1095 = vmatpush.xpose.msra.mxu0 0.0
        %1096 = vmatpush.xpose.msra.mxu0 %v433
        %1097 = vmatpush.xpose.msra.mxu0 %v286
        %1098 = vmatmul.f32.gmra.mxu0 %v620
        %v1099 = vpop.f32.mrf.mxu0
        %v1100 = vadd.f32 %v1080, %v1099
        %1101 = vdwg.mxu0
        %1102 = vmatpush.xpose.msra.mxu0 0.0
        %1103 = vmatpush.xpose.msra.mxu0 0.0
        %1104 = vmatpush.xpose.msra.mxu0 0.0
        %1105 = vmatpush.xpose.msra.mxu0 0.0
        %1106 = vmatpush.xpose.msra.mxu0 0.0
        %1107 = vmatpush.xpose.msra.mxu0 0.0
        %1108 = vmatpush.xpose.msra.mxu0 0.0
        %1109 = vmatpush.xpose.msra.mxu0 0.0
        %1110 = vmatpush.xpose.msra.mxu0 0.0
        %1111 = vmatpush.xpose.msra.mxu0 0.0
        %1112 = vmatpush.xpose.msra.mxu0 0.0
        %1113 = vmatpush.xpose.msra.mxu0 0.0
        %1114 = vmatpush.xpose.msra.mxu0 0.0
        %1115 = vmatpush.xpose.msra.mxu0 0.0
        %1116 = vmatpush.xpose.msra.mxu0 %v434
        %1117 = vmatpush.xpose.msra.mxu0 %v287
        %1118 = vmatmul.f32.gmra.mxu0 %v623
        %v1119 = vpop.f32.mrf.mxu0
        %v1120 = vadd.f32 %v1100, %v1119
        %1121 = vdwg.mxu0
        %1122 = vmatpush.xpose.msra.mxu0 0.0
        %1123 = vmatpush.xpose.msra.mxu0 0.0
        %1124 = vmatpush.xpose.msra.mxu0 0.0
        %1125 = vmatpush.xpose.msra.mxu0 0.0
        %1126 = vmatpush.xpose.msra.mxu0 0.0
        %1127 = vmatpush.xpose.msra.mxu0 0.0
        %1128 = vmatpush.xpose.msra.mxu0 0.0
        %1129 = vmatpush.xpose.msra.mxu0 0.0
        %1130 = vmatpush.xpose.msra.mxu0 0.0
        %1131 = vmatpush.xpose.msra.mxu0 0.0
        %1132 = vmatpush.xpose.msra.mxu0 0.0
        %1133 = vmatpush.xpose.msra.mxu0 0.0
        %1134 = vmatpush.xpose.msra.mxu0 0.0
        %1135 = vmatpush.xpose.msra.mxu0 0.0
        %1136 = vmatpush.xpose.msra.mxu0 %v435
        %1137 = vmatpush.xpose.msra.mxu0 %v288
        %1138 = vmatmul.f32.gmra.mxu0 %v624
        %v1139 = vpop.f32.mrf.mxu0
        %v1140 = vadd.f32 %v1120, %v1139
        %1141 = vdwg.mxu0
        %1142 = vmatpush.xpose.msra.mxu0 0.0
        %1143 = vmatpush.xpose.msra.mxu0 0.0
        %1144 = vmatpush.xpose.msra.mxu0 0.0
        %1145 = vmatpush.xpose.msra.mxu0 0.0
        %1146 = vmatpush.xpose.msra.mxu0 0.0
        %1147 = vmatpush.xpose.msra.mxu0 0.0
        %1148 = vmatpush.xpose.msra.mxu0 0.0
        %1149 = vmatpush.xpose.msra.mxu0 0.0
        %1150 = vmatpush.xpose.msra.mxu0 0.0
        %1151 = vmatpush.xpose.msra.mxu0 0.0
        %1152 = vmatpush.xpose.msra.mxu0 0.0
        %1153 = vmatpush.xpose.msra.mxu0 0.0
        %1154 = vmatpush.xpose.msra.mxu0 0.0
        %1155 = vmatpush.xpose.msra.mxu0 0.0
        %1156 = vmatpush.xpose.msra.mxu0 %v436
        %1157 = vmatpush.xpose.msra.mxu0 %v289
        %1158 = vmatmul.f32.gmra.mxu0 %v625
        %v1159 = vpop.f32.mrf.mxu0
        %v1160 = vadd.f32 %v1140, %v1159
        %1161 = vdwg.mxu0
        %1162 = vmatpush.xpose.msra.mxu0 0.0
        %1163 = vmatpush.xpose.msra.mxu0 0.0
        %1164 = vmatpush.xpose.msra.mxu0 0.0
        %1165 = vmatpush.xpose.msra.mxu0 0.0
        %1166 = vmatpush.xpose.msra.mxu0 0.0
        %1167 = vmatpush.xpose.msra.mxu0 0.0
        %1168 = vmatpush.xpose.msra.mxu0 0.0
        %1169 = vmatpush.xpose.msra.mxu0 0.0
        %1170 = vmatpush.xpose.msra.mxu0 0.0
        %1171 = vmatpush.xpose.msra.mxu0 0.0
        %1172 = vmatpush.xpose.msra.mxu0 0.0
        %1173 = vmatpush.xpose.msra.mxu0 0.0
        %1174 = vmatpush.xpose.msra.mxu0 0.0
        %1175 = vmatpush.xpose.msra.mxu0 0.0
        %1176 = vmatpush.xpose.msra.mxu0 %v437
        %1177 = vmatpush.xpose.msra.mxu0 %v290
        %1178 = vmatmul.f32.gmra.mxu0 %v626
        %v1179 = vpop.f32.mrf.mxu0
        %v1180 = vadd.f32 %v1160, %v1179
        %1181 = vdwg.mxu0
        %1182 = vmatpush.xpose.msra.mxu0 0.0
        %1183 = vmatpush.xpose.msra.mxu0 0.0
        %1184 = vmatpush.xpose.msra.mxu0 0.0
        %1185 = vmatpush.xpose.msra.mxu0 0.0
        %1186 = vmatpush.xpose.msra.mxu0 0.0
        %1187 = vmatpush.xpose.msra.mxu0 0.0
        %1188 = vmatpush.xpose.msra.mxu0 0.0
        %1189 = vmatpush.xpose.msra.mxu0 0.0
        %1190 = vmatpush.xpose.msra.mxu0 0.0
        %1191 = vmatpush.xpose.msra.mxu0 0.0
        %1192 = vmatpush.xpose.msra.mxu0 0.0
        %1193 = vmatpush.xpose.msra.mxu0 0.0
        %1194 = vmatpush.xpose.msra.mxu0 0.0
        %1195 = vmatpush.xpose.msra.mxu0 0.0
        %1196 = vmatpush.xpose.msra.mxu0 %v438
        %1197 = vmatpush.xpose.msra.mxu0 %v291
        %1198 = vmatmul.f32.gmra.mxu0 %v627
        %v1199 = vpop.f32.mrf.mxu0
        %v1200 = vadd.f32 %v1180, %v1199
        %1201 = vdwg.mxu0
        %1202 = vmatpush.xpose.msra.mxu0 0.0
        %1203 = vmatpush.xpose.msra.mxu0 0.0
        %1204 = vmatpush.xpose.msra.mxu0 0.0
        %1205 = vmatpush.xpose.msra.mxu0 0.0
        %1206 = vmatpush.xpose.msra.mxu0 0.0
        %1207 = vmatpush.xpose.msra.mxu0 0.0
        %1208 = vmatpush.xpose.msra.mxu0 0.0
        %1209 = vmatpush.xpose.msra.mxu0 0.0
        %1210 = vmatpush.xpose.msra.mxu0 0.0
        %1211 = vmatpush.xpose.msra.mxu0 0.0
        %1212 = vmatpush.xpose.msra.mxu0 0.0
        %1213 = vmatpush.xpose.msra.mxu0 0.0
        %1214 = vmatpush.xpose.msra.mxu0 0.0
        %1215 = vmatpush.xpose.msra.mxu0 0.0
        %1216 = vmatpush.xpose.msra.mxu0 %v439
        %1217 = vmatpush.xpose.msra.mxu0 %v292
        %1218 = vmatmul.f32.gmra.mxu0 %v628
        %v1219 = vpop.f32.mrf.mxu0
        %v1220 = vadd.f32 %v1200, %v1219
        %1221 = vdwg.mxu0
        %1222 = vmatpush.xpose.msra.mxu0 0.0
        %1223 = vmatpush.xpose.msra.mxu0 0.0
        %1224 = vmatpush.xpose.msra.mxu0 0.0
        %1225 = vmatpush.xpose.msra.mxu0 0.0
        %1226 = vmatpush.xpose.msra.mxu0 0.0
        %1227 = vmatpush.xpose.msra.mxu0 0.0
        %1228 = vmatpush.xpose.msra.mxu0 0.0
        %1229 = vmatpush.xpose.msra.mxu0 0.0
        %1230 = vmatpush.xpose.msra.mxu0 0.0
        %1231 = vmatpush.xpose.msra.mxu0 0.0
        %1232 = vmatpush.xpose.msra.mxu0 0.0
        %1233 = vmatpush.xpose.msra.mxu0 0.0
        %1234 = vmatpush.xpose.msra.mxu0 0.0
        %1235 = vmatpush.xpose.msra.mxu0 0.0
        %1236 = vmatpush.xpose.msra.mxu0 %v440
        %1237 = vmatpush.xpose.msra.mxu0 %v293
        %1238 = vmatmul.f32.gmra.mxu0 %v629
        %v1239 = vpop.f32.mrf.mxu0
        %v1240 = vadd.f32 %v1220, %v1239
        %1241 = vdwg.mxu0
        %1242 = vmatpush.xpose.msra.mxu0 0.0
        %1243 = vmatpush.xpose.msra.mxu0 0.0
        %1244 = vmatpush.xpose.msra.mxu0 0.0
        %1245 = vmatpush.xpose.msra.mxu0 0.0
        %1246 = vmatpush.xpose.msra.mxu0 0.0
        %1247 = vmatpush.xpose.msra.mxu0 0.0
        %1248 = vmatpush.xpose.msra.mxu0 0.0
        %1249 = vmatpush.xpose.msra.mxu0 0.0
        %1250 = vmatpush.xpose.msra.mxu0 0.0
        %1251 = vmatpush.xpose.msra.mxu0 0.0
        %1252 = vmatpush.xpose.msra.mxu0 0.0
        %1253 = vmatpush.xpose.msra.mxu0 0.0
        %1254 = vmatpush.xpose.msra.mxu0 0.0
        %1255 = vmatpush.xpose.msra.mxu0 0.0
        %1256 = vmatpush.xpose.msra.mxu0 %v441
        %1257 = vmatpush.xpose.msra.mxu0 %v294
        %1258 = vmatmul.f32.gmra.mxu0 %v630
        %v1259 = vpop.f32.mrf.mxu0
        %v1260 = vadd.f32 %v1240, %v1259
        %1261 = vdwg.mxu0
        %1262 = vmatpush.xpose.msra.mxu0 0.0
        %1263 = vmatpush.xpose.msra.mxu0 0.0
        %1264 = vmatpush.xpose.msra.mxu0 0.0
        %1265 = vmatpush.xpose.msra.mxu0 0.0
        %1266 = vmatpush.xpose.msra.mxu0 0.0
        %1267 = vmatpush.xpose.msra.mxu0 0.0
        %1268 = vmatpush.xpose.msra.mxu0 0.0
        %1269 = vmatpush.xpose.msra.mxu0 0.0
        %1270 = vmatpush.xpose.msra.mxu0 0.0
        %1271 = vmatpush.xpose.msra.mxu0 0.0
        %1272 = vmatpush.xpose.msra.mxu0 0.0
        %1273 = vmatpush.xpose.msra.mxu0 0.0
        %1274 = vmatpush.xpose.msra.mxu0 0.0
        %1275 = vmatpush.xpose.msra.mxu0 0.0
        %1276 = vmatpush.xpose.msra.mxu0 %v442
        %1277 = vmatpush.xpose.msra.mxu0 %v295
        %1278 = vmatmul.f32.gmra.mxu0 %v633
        %v1279 = vpop.f32.mrf.mxu0
        %v1280 = vadd.f32 %v1260, %v1279
        %1281 = vdwg.mxu0
        %1282 = vmatpush.xpose.msra.mxu0 0.0
        %1283 = vmatpush.xpose.msra.mxu0 0.0
        %1284 = vmatpush.xpose.msra.mxu0 0.0
        %1285 = vmatpush.xpose.msra.mxu0 0.0
        %1286 = vmatpush.xpose.msra.mxu0 0.0
        %1287 = vmatpush.xpose.msra.mxu0 0.0
        %1288 = vmatpush.xpose.msra.mxu0 0.0
        %1289 = vmatpush.xpose.msra.mxu0 0.0
        %1290 = vmatpush.xpose.msra.mxu0 0.0
        %1291 = vmatpush.xpose.msra.mxu0 0.0
        %1292 = vmatpush.xpose.msra.mxu0 0.0
        %1293 = vmatpush.xpose.msra.mxu0 0.0
        %1294 = vmatpush.xpose.msra.mxu0 0.0
        %1295 = vmatpush.xpose.msra.mxu0 0.0
        %1296 = vmatpush.xpose.msra.mxu0 %v443
        %1297 = vmatpush.xpose.msra.mxu0 %v296
        %1298 = vmatmul.f32.gmra.mxu0 %v634
        %v1299 = vpop.f32.mrf.mxu0
        %v1300 = vadd.f32 %v1280, %v1299
        %1301 = vdwg.mxu0
        %1302 = vmatpush.xpose.msra.mxu0 0.0
        %1303 = vmatpush.xpose.msra.mxu0 0.0
        %1304 = vmatpush.xpose.msra.mxu0 0.0
        %1305 = vmatpush.xpose.msra.mxu0 0.0
        %1306 = vmatpush.xpose.msra.mxu0 0.0
        %1307 = vmatpush.xpose.msra.mxu0 0.0
        %1308 = vmatpush.xpose.msra.mxu0 0.0
        %1309 = vmatpush.xpose.msra.mxu0 0.0
        %1310 = vmatpush.xpose.msra.mxu0 0.0
        %1311 = vmatpush.xpose.msra.mxu0 0.0
        %1312 = vmatpush.xpose.msra.mxu0 0.0
        %1313 = vmatpush.xpose.msra.mxu0 0.0
        %1314 = vmatpush.xpose.msra.mxu0 0.0
        %1315 = vmatpush.xpose.msra.mxu0 0.0
        %1316 = vmatpush.xpose.msra.mxu0 %v444
        %1317 = vmatpush.xpose.msra.mxu0 %v297
        %1318 = vmatmul.f32.gmra.mxu0 %v635
        %v1319 = vpop.f32.mrf.mxu0
        %v1320 = vadd.f32 %v1300, %v1319
        %1321 = vdwg.mxu0
        %1322 = vmatpush.xpose.msra.mxu0 0.0
        %1323 = vmatpush.xpose.msra.mxu0 0.0
        %1324 = vmatpush.xpose.msra.mxu0 0.0
        %1325 = vmatpush.xpose.msra.mxu0 0.0
        %1326 = vmatpush.xpose.msra.mxu0 0.0
        %1327 = vmatpush.xpose.msra.mxu0 0.0
        %1328 = vmatpush.xpose.msra.mxu0 0.0
        %1329 = vmatpush.xpose.msra.mxu0 0.0
        %1330 = vmatpush.xpose.msra.mxu0 0.0
        %1331 = vmatpush.xpose.msra.mxu0 0.0
        %1332 = vmatpush.xpose.msra.mxu0 0.0
        %1333 = vmatpush.xpose.msra.mxu0 0.0
        %1334 = vmatpush.xpose.msra.mxu0 0.0
        %1335 = vmatpush.xpose.msra.mxu0 0.0
        %1336 = vmatpush.xpose.msra.mxu0 %v445
        %1337 = vmatpush.xpose.msra.mxu0 %v298
        %1338 = vmatmul.f32.gmra.mxu0 %v636
        %v1339 = vpop.f32.mrf.mxu0
        %v1340 = vadd.f32 %v1320, %v1339
        %1341 = vdwg.mxu0
        %1342 = vmatpush.xpose.msra.mxu0 0.0
        %1343 = vmatpush.xpose.msra.mxu0 0.0
        %1344 = vmatpush.xpose.msra.mxu0 0.0
        %1345 = vmatpush.xpose.msra.mxu0 0.0
        %1346 = vmatpush.xpose.msra.mxu0 0.0
        %1347 = vmatpush.xpose.msra.mxu0 0.0
        %1348 = vmatpush.xpose.msra.mxu0 0.0
        %1349 = vmatpush.xpose.msra.mxu0 0.0
        %1350 = vmatpush.xpose.msra.mxu0 0.0
        %1351 = vmatpush.xpose.msra.mxu0 0.0
        %1352 = vmatpush.xpose.msra.mxu0 0.0
        %1353 = vmatpush.xpose.msra.mxu0 0.0
        %1354 = vmatpush.xpose.msra.mxu0 0.0
        %1355 = vmatpush.xpose.msra.mxu0 0.0
        %1356 = vmatpush.xpose.msra.mxu0 %v446
        %1357 = vmatpush.xpose.msra.mxu0 %v299
        %1358 = vmatmul.f32.gmra.mxu0 %v637
        %v1359 = vpop.f32.mrf.mxu0
        %v1360 = vadd.f32 %v1340, %v1359
        %1361 = vdwg.mxu0
        %1362 = vmatpush.xpose.msra.mxu0 0.0
        %1363 = vmatpush.xpose.msra.mxu0 0.0
        %1364 = vmatpush.xpose.msra.mxu0 0.0
        %1365 = vmatpush.xpose.msra.mxu0 0.0
        %1366 = vmatpush.xpose.msra.mxu0 0.0
        %1367 = vmatpush.xpose.msra.mxu0 0.0
        %1368 = vmatpush.xpose.msra.mxu0 0.0
        %1369 = vmatpush.xpose.msra.mxu0 0.0
        %1370 = vmatpush.xpose.msra.mxu0 0.0
        %1371 = vmatpush.xpose.msra.mxu0 0.0
        %1372 = vmatpush.xpose.msra.mxu0 0.0
        %1373 = vmatpush.xpose.msra.mxu0 0.0
        %1374 = vmatpush.xpose.msra.mxu0 0.0
        %1375 = vmatpush.xpose.msra.mxu0 0.0
        %1376 = vmatpush.xpose.msra.mxu0 %v447
        %1377 = vmatpush.xpose.msra.mxu0 %v300
        %1378 = vmatmul.f32.gmra.mxu0 %v638
        %v1379 = vpop.f32.mrf.mxu0
        %v1380 = vadd.f32 %v1360, %v1379
        %1381 = vdwg.mxu0
        %1382 = vmatpush.xpose.msra.mxu0 0.0
        %1383 = vmatpush.xpose.msra.mxu0 0.0
        %1384 = vmatpush.xpose.msra.mxu0 0.0
        %1385 = vmatpush.xpose.msra.mxu0 0.0
        %1386 = vmatpush.xpose.msra.mxu0 0.0
        %1387 = vmatpush.xpose.msra.mxu0 0.0
        %1388 = vmatpush.xpose.msra.mxu0 0.0
        %1389 = vmatpush.xpose.msra.mxu0 0.0
        %1390 = vmatpush.xpose.msra.mxu0 0.0
        %1391 = vmatpush.xpose.msra.mxu0 0.0
        %1392 = vmatpush.xpose.msra.mxu0 0.0
        %1393 = vmatpush.xpose.msra.mxu0 0.0
        %1394 = vmatpush.xpose.msra.mxu0 0.0
        %1395 = vmatpush.xpose.msra.mxu0 0.0
        %1396 = vmatpush.xpose.msra.mxu0 %v448
        %1397 = vmatpush.xpose.msra.mxu0 %v301
        %1398 = vmatmul.f32.gmra.mxu0 %v639
        %v1399 = vpop.f32.mrf.mxu0
        %v1400 = vadd.f32 %v1380, %v1399
        %1401 = vdwg.mxu0
        %1402 = vmatpush.xpose.msra.mxu0 0.0
        %1403 = vmatpush.xpose.msra.mxu0 0.0
        %1404 = vmatpush.xpose.msra.mxu0 0.0
        %1405 = vmatpush.xpose.msra.mxu0 0.0
        %1406 = vmatpush.xpose.msra.mxu0 0.0
        %1407 = vmatpush.xpose.msra.mxu0 0.0
        %1408 = vmatpush.xpose.msra.mxu0 0.0
        %1409 = vmatpush.xpose.msra.mxu0 0.0
        %1410 = vmatpush.xpose.msra.mxu0 0.0
        %1411 = vmatpush.xpose.msra.mxu0 0.0
        %1412 = vmatpush.xpose.msra.mxu0 0.0
        %1413 = vmatpush.xpose.msra.mxu0 0.0
        %1414 = vmatpush.xpose.msra.mxu0 0.0
        %1415 = vmatpush.xpose.msra.mxu0 0.0
        %1416 = vmatpush.xpose.msra.mxu0 %v449
        %1417 = vmatpush.xpose.msra.mxu0 %v302
        %1418 = vmatmul.f32.gmra.mxu0 %v640
        %v1419 = vpop.f32.mrf.mxu0
        %v1420 = vadd.f32 %v1400, %v1419
        %1421 = vdwg.mxu0
        %1422 = vmatpush.xpose.msra.mxu0 0.0
        %1423 = vmatpush.xpose.msra.mxu0 0.0
        %1424 = vmatpush.xpose.msra.mxu0 0.0
        %1425 = vmatpush.xpose.msra.mxu0 0.0
        %1426 = vmatpush.xpose.msra.mxu0 0.0
        %1427 = vmatpush.xpose.msra.mxu0 0.0
        %1428 = vmatpush.xpose.msra.mxu0 0.0
        %1429 = vmatpush.xpose.msra.mxu0 0.0
        %1430 = vmatpush.xpose.msra.mxu0 0.0
        %1431 = vmatpush.xpose.msra.mxu0 0.0
        %1432 = vmatpush.xpose.msra.mxu0 0.0
        %1433 = vmatpush.xpose.msra.mxu0 0.0
        %1434 = vmatpush.xpose.msra.mxu0 0.0
        %1435 = vmatpush.xpose.msra.mxu0 0.0
        %1436 = vmatpush.xpose.msra.mxu0 %v450
        %1437 = vmatpush.xpose.msra.mxu0 %v303
        %1438 = vmatmul.f32.gmra.mxu0 %v643
        %v1439 = vpop.f32.mrf.mxu0
        %v1440 = vadd.f32 %v1420, %v1439
        %1441 = vdwg.mxu0
        %1442 = vmatpush.xpose.msra.mxu0 0.0
        %1443 = vmatpush.xpose.msra.mxu0 0.0
        %1444 = vmatpush.xpose.msra.mxu0 0.0
        %1445 = vmatpush.xpose.msra.mxu0 0.0
        %1446 = vmatpush.xpose.msra.mxu0 0.0
        %1447 = vmatpush.xpose.msra.mxu0 0.0
        %1448 = vmatpush.xpose.msra.mxu0 0.0
        %1449 = vmatpush.xpose.msra.mxu0 0.0
        %1450 = vmatpush.xpose.msra.mxu0 0.0
        %1451 = vmatpush.xpose.msra.mxu0 0.0
        %1452 = vmatpush.xpose.msra.mxu0 0.0
        %1453 = vmatpush.xpose.msra.mxu0 0.0
        %1454 = vmatpush.xpose.msra.mxu0 0.0
        %1455 = vmatpush.xpose.msra.mxu0 0.0
        %1456 = vmatpush.xpose.msra.mxu0 %v451
        %1457 = vmatpush.xpose.msra.mxu0 %v304
        %1458 = vmatmul.f32.gmra.mxu0 %v644
        %v1459 = vpop.f32.mrf.mxu0
        %v1460 = vadd.f32 %v1440, %v1459
        %1461 = vdwg.mxu0
        %1462 = vmatpush.xpose.msra.mxu0 0.0
        %1463 = vmatpush.xpose.msra.mxu0 0.0
        %1464 = vmatpush.xpose.msra.mxu0 0.0
        %1465 = vmatpush.xpose.msra.mxu0 0.0
        %1466 = vmatpush.xpose.msra.mxu0 0.0
        %1467 = vmatpush.xpose.msra.mxu0 0.0
        %1468 = vmatpush.xpose.msra.mxu0 0.0
        %1469 = vmatpush.xpose.msra.mxu0 0.0
        %1470 = vmatpush.xpose.msra.mxu0 0.0
        %1471 = vmatpush.xpose.msra.mxu0 0.0
        %1472 = vmatpush.xpose.msra.mxu0 0.0
        %1473 = vmatpush.xpose.msra.mxu0 0.0
        %1474 = vmatpush.xpose.msra.mxu0 0.0
        %1475 = vmatpush.xpose.msra.mxu0 0.0
        %1476 = vmatpush.xpose.msra.mxu0 %v452
        %1477 = vmatpush.xpose.msra.mxu0 %v305
        %1478 = vmatmul.f32.gmra.mxu0 %v645
        %v1479 = vpop.f32.mrf.mxu0
        %v1480 = vadd.f32 %v1460, %v1479
        %1481 = vdwg.mxu0
        %1482 = vmatpush.xpose.msra.mxu0 0.0
        %1483 = vmatpush.xpose.msra.mxu0 0.0
        %1484 = vmatpush.xpose.msra.mxu0 0.0
        %1485 = vmatpush.xpose.msra.mxu0 0.0
        %1486 = vmatpush.xpose.msra.mxu0 0.0
        %1487 = vmatpush.xpose.msra.mxu0 0.0
        %1488 = vmatpush.xpose.msra.mxu0 0.0
        %1489 = vmatpush.xpose.msra.mxu0 0.0
        %1490 = vmatpush.xpose.msra.mxu0 0.0
        %1491 = vmatpush.xpose.msra.mxu0 0.0
        %1492 = vmatpush.xpose.msra.mxu0 0.0
        %1493 = vmatpush.xpose.msra.mxu0 0.0
        %1494 = vmatpush.xpose.msra.mxu0 0.0
        %1495 = vmatpush.xpose.msra.mxu0 0.0
        %1496 = vmatpush.xpose.msra.mxu0 %v453
        %1497 = vmatpush.xpose.msra.mxu0 %v306
        %1498 = vmatmul.f32.gmra.mxu0 %v646
        %v1499 = vpop.f32.mrf.mxu0
        %v1500 = vadd.f32 %v1480, %v1499
        %1501 = vdwg.mxu0
        %1502 = vmatpush.xpose.msra.mxu0 0.0
        %1503 = vmatpush.xpose.msra.mxu0 0.0
        %1504 = vmatpush.xpose.msra.mxu0 0.0
        %1505 = vmatpush.xpose.msra.mxu0 0.0
        %1506 = vmatpush.xpose.msra.mxu0 0.0
        %1507 = vmatpush.xpose.msra.mxu0 0.0
        %1508 = vmatpush.xpose.msra.mxu0 0.0
        %1509 = vmatpush.xpose.msra.mxu0 0.0
        %1510 = vmatpush.xpose.msra.mxu0 0.0
        %1511 = vmatpush.xpose.msra.mxu0 0.0
        %1512 = vmatpush.xpose.msra.mxu0 0.0
        %1513 = vmatpush.xpose.msra.mxu0 0.0
        %1514 = vmatpush.xpose.msra.mxu0 0.0
        %1515 = vmatpush.xpose.msra.mxu0 0.0
        %1516 = vmatpush.xpose.msra.mxu0 %v454
        %1517 = vmatpush.xpose.msra.mxu0 %v307
        %1518 = vmatmul.f32.gmra.mxu0 %v647
        %v1519 = vpop.f32.mrf.mxu0
        %v1520 = vadd.f32 %v1500, %v1519
        %1521 = vdwg.mxu0
        %1522 = vmatpush.xpose.msra.mxu0 0.0
        %1523 = vmatpush.xpose.msra.mxu0 0.0
        %1524 = vmatpush.xpose.msra.mxu0 0.0
        %1525 = vmatpush.xpose.msra.mxu0 0.0
        %1526 = vmatpush.xpose.msra.mxu0 0.0
        %1527 = vmatpush.xpose.msra.mxu0 0.0
        %1528 = vmatpush.xpose.msra.mxu0 0.0
        %1529 = vmatpush.xpose.msra.mxu0 0.0
        %1530 = vmatpush.xpose.msra.mxu0 0.0
        %1531 = vmatpush.xpose.msra.mxu0 0.0
        %1532 = vmatpush.xpose.msra.mxu0 0.0
        %1533 = vmatpush.xpose.msra.mxu0 0.0
        %1534 = vmatpush.xpose.msra.mxu0 0.0
        %1535 = vmatpush.xpose.msra.mxu0 0.0
        %1536 = vmatpush.xpose.msra.mxu0 %v455
        %1537 = vmatpush.xpose.msra.mxu0 %v308
        %1538 = vmatmul.f32.gmra.mxu0 %v648
        %v1539 = vpop.f32.mrf.mxu0
        %v1540 = vadd.f32 %v1520, %v1539
        %1541 = vdwg.mxu0
        %1542 = vmatpush.xpose.msra.mxu0 0.0
        %1543 = vmatpush.xpose.msra.mxu0 0.0
        %1544 = vmatpush.xpose.msra.mxu0 0.0
        %1545 = vmatpush.xpose.msra.mxu0 0.0
        %1546 = vmatpush.xpose.msra.mxu0 0.0
        %1547 = vmatpush.xpose.msra.mxu0 0.0
        %1548 = vmatpush.xpose.msra.mxu0 0.0
        %1549 = vmatpush.xpose.msra.mxu0 0.0
        %1550 = vmatpush.xpose.msra.mxu0 0.0
        %1551 = vmatpush.xpose.msra.mxu0 0.0
        %1552 = vmatpush.xpose.msra.mxu0 0.0
        %1553 = vmatpush.xpose.msra.mxu0 0.0
        %1554 = vmatpush.xpose.msra.mxu0 0.0
        %1555 = vmatpush.xpose.msra.mxu0 0.0
        %1556 = vmatpush.xpose.msra.mxu0 %v456
        %1557 = vmatpush.xpose.msra.mxu0 %v309
        %1558 = vmatmul.f32.gmra.mxu0 %v649
        %v1559 = vpop.f32.mrf.mxu0
        %v1560 = vadd.f32 %v1540, %v1559
        %1561 = vdwg.mxu0
        %1562 = vmatpush.xpose.msra.mxu0 0.0
        %1563 = vmatpush.xpose.msra.mxu0 0.0
        %1564 = vmatpush.xpose.msra.mxu0 0.0
        %1565 = vmatpush.xpose.msra.mxu0 0.0
        %1566 = vmatpush.xpose.msra.mxu0 0.0
        %1567 = vmatpush.xpose.msra.mxu0 0.0
        %1568 = vmatpush.xpose.msra.mxu0 0.0
        %1569 = vmatpush.xpose.msra.mxu0 0.0
        %1570 = vmatpush.xpose.msra.mxu0 0.0
        %1571 = vmatpush.xpose.msra.mxu0 0.0
        %1572 = vmatpush.xpose.msra.mxu0 0.0
        %1573 = vmatpush.xpose.msra.mxu0 0.0
        %1574 = vmatpush.xpose.msra.mxu0 0.0
        %1575 = vmatpush.xpose.msra.mxu0 0.0
        %1576 = vmatpush.xpose.msra.mxu0 %v457
        %1577 = vmatpush.xpose.msra.mxu0 %v310
        %1578 = vmatmul.f32.gmra.mxu0 %v650
        %v1579 = vpop.f32.mrf.mxu0
        %v1580 = vadd.f32 %v1560, %v1579
        %1581 = vdwg.mxu0
        %1582 = vmatpush.xpose.msra.mxu0 0.0
        %1583 = vmatpush.xpose.msra.mxu0 0.0
        %1584 = vmatpush.xpose.msra.mxu0 0.0
        %1585 = vmatpush.xpose.msra.mxu0 0.0
        %1586 = vmatpush.xpose.msra.mxu0 0.0
        %1587 = vmatpush.xpose.msra.mxu0 0.0
        %1588 = vmatpush.xpose.msra.mxu0 0.0
        %1589 = vmatpush.xpose.msra.mxu0 0.0
        %1590 = vmatpush.xpose.msra.mxu0 0.0
        %1591 = vmatpush.xpose.msra.mxu0 0.0
        %1592 = vmatpush.xpose.msra.mxu0 0.0
        %1593 = vmatpush.xpose.msra.mxu0 0.0
        %1594 = vmatpush.xpose.msra.mxu0 0.0
        %1595 = vmatpush.xpose.msra.mxu0 0.0
        %1596 = vmatpush.xpose.msra.mxu0 %v458
        %1597 = vmatpush.xpose.msra.mxu0 %v311
        %1598 = vmatmul.f32.gmra.mxu0 %v653
        %v1599 = vpop.f32.mrf.mxu0
        %v1600 = vadd.f32 %v1580, %v1599
        %1601 = vdwg.mxu0
        %1602 = vmatpush.xpose.msra.mxu0 0.0
        %1603 = vmatpush.xpose.msra.mxu0 0.0
        %1604 = vmatpush.xpose.msra.mxu0 0.0
        %1605 = vmatpush.xpose.msra.mxu0 0.0
        %1606 = vmatpush.xpose.msra.mxu0 0.0
        %1607 = vmatpush.xpose.msra.mxu0 0.0
        %1608 = vmatpush.xpose.msra.mxu0 0.0
        %1609 = vmatpush.xpose.msra.mxu0 0.0
        %1610 = vmatpush.xpose.msra.mxu0 0.0
        %1611 = vmatpush.xpose.msra.mxu0 0.0
        %1612 = vmatpush.xpose.msra.mxu0 0.0
        %1613 = vmatpush.xpose.msra.mxu0 0.0
        %1614 = vmatpush.xpose.msra.mxu0 0.0
        %1615 = vmatpush.xpose.msra.mxu0 0.0
        %1616 = vmatpush.xpose.msra.mxu0 %v459
        %1617 = vmatpush.xpose.msra.mxu0 %v312
        %1618 = vmatmul.f32.gmra.mxu0 %v654
        %v1619 = vpop.f32.mrf.mxu0
        %v1620 = vadd.f32 %v1600, %v1619
        %1621 = vdwg.mxu0
        %1622 = vmatpush.xpose.msra.mxu0 0.0
        %1623 = vmatpush.xpose.msra.mxu0 0.0
        %1624 = vmatpush.xpose.msra.mxu0 0.0
        %1625 = vmatpush.xpose.msra.mxu0 0.0
        %1626 = vmatpush.xpose.msra.mxu0 0.0
        %1627 = vmatpush.xpose.msra.mxu0 0.0
        %1628 = vmatpush.xpose.msra.mxu0 0.0
        %1629 = vmatpush.xpose.msra.mxu0 0.0
        %1630 = vmatpush.xpose.msra.mxu0 0.0
        %1631 = vmatpush.xpose.msra.mxu0 0.0
        %1632 = vmatpush.xpose.msra.mxu0 0.0
        %1633 = vmatpush.xpose.msra.mxu0 0.0
        %1634 = vmatpush.xpose.msra.mxu0 0.0
        %1635 = vmatpush.xpose.msra.mxu0 0.0
        %1636 = vmatpush.xpose.msra.mxu0 %v460
        %1637 = vmatpush.xpose.msra.mxu0 %v313
        %1638 = vmatmul.f32.gmra.mxu0 %v655
        %v1639 = vpop.f32.mrf.mxu0
        %v1640 = vadd.f32 %v1620, %v1639
        %1641 = vdwg.mxu0
        %1642 = vmatpush.xpose.msra.mxu0 0.0
        %1643 = vmatpush.xpose.msra.mxu0 0.0
        %1644 = vmatpush.xpose.msra.mxu0 0.0
        %1645 = vmatpush.xpose.msra.mxu0 0.0
        %1646 = vmatpush.xpose.msra.mxu0 0.0
        %1647 = vmatpush.xpose.msra.mxu0 0.0
        %1648 = vmatpush.xpose.msra.mxu0 0.0
        %1649 = vmatpush.xpose.msra.mxu0 0.0
        %1650 = vmatpush.xpose.msra.mxu0 0.0
        %1651 = vmatpush.xpose.msra.mxu0 0.0
        %1652 = vmatpush.xpose.msra.mxu0 0.0
        %1653 = vmatpush.xpose.msra.mxu0 0.0
        %1654 = vmatpush.xpose.msra.mxu0 0.0
        %1655 = vmatpush.xpose.msra.mxu0 0.0
        %1656 = vmatpush.xpose.msra.mxu0 %v461
        %1657 = vmatpush.xpose.msra.mxu0 %v314
        %1658 = vmatmul.f32.gmra.mxu0 %v656
        %v1659 = vpop.f32.mrf.mxu0
        %v1660 = vadd.f32 %v1640, %v1659
        %1661 = vdwg.mxu0
        %1662 = vmatpush.xpose.msra.mxu0 0.0
        %1663 = vmatpush.xpose.msra.mxu0 0.0
        %1664 = vmatpush.xpose.msra.mxu0 0.0
        %1665 = vmatpush.xpose.msra.mxu0 0.0
        %1666 = vmatpush.xpose.msra.mxu0 0.0
        %1667 = vmatpush.xpose.msra.mxu0 0.0
        %1668 = vmatpush.xpose.msra.mxu0 0.0
        %1669 = vmatpush.xpose.msra.mxu0 0.0
        %1670 = vmatpush.xpose.msra.mxu0 0.0
        %1671 = vmatpush.xpose.msra.mxu0 0.0
        %1672 = vmatpush.xpose.msra.mxu0 0.0
        %1673 = vmatpush.xpose.msra.mxu0 0.0
        %1674 = vmatpush.xpose.msra.mxu0 0.0
        %1675 = vmatpush.xpose.msra.mxu0 0.0
        %1676 = vmatpush.xpose.msra.mxu0 %v462
        %1677 = vmatpush.xpose.msra.mxu0 %v315
        %1678 = vmatmul.f32.gmra.mxu0 %v657
        %v1679 = vpop.f32.mrf.mxu0
        %v1680 = vadd.f32 %v1660, %v1679
        %1681 = vdwg.mxu0
        %1682 = vmatpush.xpose.msra.mxu0 0.0
        %1683 = vmatpush.xpose.msra.mxu0 0.0
        %1684 = vmatpush.xpose.msra.mxu0 0.0
        %1685 = vmatpush.xpose.msra.mxu0 0.0
        %1686 = vmatpush.xpose.msra.mxu0 0.0
        %1687 = vmatpush.xpose.msra.mxu0 0.0
        %1688 = vmatpush.xpose.msra.mxu0 0.0
        %1689 = vmatpush.xpose.msra.mxu0 0.0
        %1690 = vmatpush.xpose.msra.mxu0 0.0
        %1691 = vmatpush.xpose.msra.mxu0 0.0
        %1692 = vmatpush.xpose.msra.mxu0 0.0
        %1693 = vmatpush.xpose.msra.mxu0 0.0
        %1694 = vmatpush.xpose.msra.mxu0 0.0
        %1695 = vmatpush.xpose.msra.mxu0 0.0
        %1696 = vmatpush.xpose.msra.mxu0 %v463
        %1697 = vmatpush.xpose.msra.mxu0 %v316
        %1698 = vmatmul.f32.gmra.mxu0 %v658
        %v1699 = vpop.f32.mrf.mxu0
        %v1700 = vadd.f32 %v1680, %v1699
        %1701 = vdwg.mxu0
        %1702 = vmatpush.xpose.msra.mxu0 0.0
        %1703 = vmatpush.xpose.msra.mxu0 0.0
        %1704 = vmatpush.xpose.msra.mxu0 0.0
        %1705 = vmatpush.xpose.msra.mxu0 0.0
        %1706 = vmatpush.xpose.msra.mxu0 0.0
        %1707 = vmatpush.xpose.msra.mxu0 0.0
        %1708 = vmatpush.xpose.msra.mxu0 0.0
        %1709 = vmatpush.xpose.msra.mxu0 0.0
        %1710 = vmatpush.xpose.msra.mxu0 0.0
        %1711 = vmatpush.xpose.msra.mxu0 0.0
        %1712 = vmatpush.xpose.msra.mxu0 0.0
        %1713 = vmatpush.xpose.msra.mxu0 0.0
        %1714 = vmatpush.xpose.msra.mxu0 0.0
        %1715 = vmatpush.xpose.msra.mxu0 0.0
        %1716 = vmatpush.xpose.msra.mxu0 %v464
        %1717 = vmatpush.xpose.msra.mxu0 %v317
        %1718 = vmatmul.f32.gmra.mxu0 %v659
        %v1719 = vpop.f32.mrf.mxu0
        %v1720 = vadd.f32 %v1700, %v1719
        %1721 = vdwg.mxu0
        %1722 = vmatpush.xpose.msra.mxu0 0.0
        %1723 = vmatpush.xpose.msra.mxu0 0.0
        %1724 = vmatpush.xpose.msra.mxu0 0.0
        %1725 = vmatpush.xpose.msra.mxu0 0.0
        %1726 = vmatpush.xpose.msra.mxu0 0.0
        %1727 = vmatpush.xpose.msra.mxu0 0.0
        %1728 = vmatpush.xpose.msra.mxu0 0.0
        %1729 = vmatpush.xpose.msra.mxu0 0.0
        %1730 = vmatpush.xpose.msra.mxu0 0.0
        %1731 = vmatpush.xpose.msra.mxu0 0.0
        %1732 = vmatpush.xpose.msra.mxu0 0.0
        %1733 = vmatpush.xpose.msra.mxu0 0.0
        %1734 = vmatpush.xpose.msra.mxu0 0.0
        %1735 = vmatpush.xpose.msra.mxu0 0.0
        %1736 = vmatpush.xpose.msra.mxu0 %v465
        %1737 = vmatpush.xpose.msra.mxu0 %v318
        %1738 = vmatmul.f32.gmra.mxu0 %v660
        %v1739 = vpop.f32.mrf.mxu0
        %v1740 = vadd.f32 %v1720, %v1739
        %1741 = vdwg.mxu0
        %1742 = vmatpush.xpose.msra.mxu0 0.0
        %1743 = vmatpush.xpose.msra.mxu0 0.0
        %1744 = vmatpush.xpose.msra.mxu0 0.0
        %1745 = vmatpush.xpose.msra.mxu0 0.0
        %1746 = vmatpush.xpose.msra.mxu0 0.0
        %1747 = vmatpush.xpose.msra.mxu0 0.0
        %1748 = vmatpush.xpose.msra.mxu0 0.0
        %1749 = vmatpush.xpose.msra.mxu0 0.0
        %1750 = vmatpush.xpose.msra.mxu0 0.0
        %1751 = vmatpush.xpose.msra.mxu0 0.0
        %1752 = vmatpush.xpose.msra.mxu0 0.0
        %1753 = vmatpush.xpose.msra.mxu0 0.0
        %1754 = vmatpush.xpose.msra.mxu0 0.0
        %1755 = vmatpush.xpose.msra.mxu0 0.0
        %1756 = vmatpush.xpose.msra.mxu0 %v466
        %1757 = vmatpush.xpose.msra.mxu0 %v319
        %1758 = vmatmul.f32.gmra.mxu0 %v663
        %v1759 = vpop.f32.mrf.mxu0
        %v1760 = vadd.f32 %v1740, %v1759
        %1761 = vdwg.mxu0
        %1762 = vmatpush.xpose.msra.mxu0 0.0
        %1763 = vmatpush.xpose.msra.mxu0 0.0
        %1764 = vmatpush.xpose.msra.mxu0 0.0
        %1765 = vmatpush.xpose.msra.mxu0 0.0
        %1766 = vmatpush.xpose.msra.mxu0 0.0
        %1767 = vmatpush.xpose.msra.mxu0 0.0
        %1768 = vmatpush.xpose.msra.mxu0 0.0
        %1769 = vmatpush.xpose.msra.mxu0 0.0
        %1770 = vmatpush.xpose.msra.mxu0 0.0
        %1771 = vmatpush.xpose.msra.mxu0 0.0
        %1772 = vmatpush.xpose.msra.mxu0 0.0
        %1773 = vmatpush.xpose.msra.mxu0 0.0
        %1774 = vmatpush.xpose.msra.mxu0 0.0
        %1775 = vmatpush.xpose.msra.mxu0 0.0
        %1776 = vmatpush.xpose.msra.mxu0 %v467
        %1777 = vmatpush.xpose.msra.mxu0 %v320
        %1778 = vmatmul.f32.gmra.mxu0 %v664
        %v1779 = vpop.f32.mrf.mxu0
        %v1780 = vadd.f32 %v1760, %v1779
        %1781 = vdwg.mxu0
        %1782 = vmatpush.xpose.msra.mxu0 0.0
        %1783 = vmatpush.xpose.msra.mxu0 0.0
        %1784 = vmatpush.xpose.msra.mxu0 0.0
        %1785 = vmatpush.xpose.msra.mxu0 0.0
        %1786 = vmatpush.xpose.msra.mxu0 0.0
        %1787 = vmatpush.xpose.msra.mxu0 0.0
        %1788 = vmatpush.xpose.msra.mxu0 0.0
        %1789 = vmatpush.xpose.msra.mxu0 0.0
        %1790 = vmatpush.xpose.msra.mxu0 0.0
        %1791 = vmatpush.xpose.msra.mxu0 0.0
        %1792 = vmatpush.xpose.msra.mxu0 0.0
        %1793 = vmatpush.xpose.msra.mxu0 0.0
        %1794 = vmatpush.xpose.msra.mxu0 0.0
        %1795 = vmatpush.xpose.msra.mxu0 0.0
        %1796 = vmatpush.xpose.msra.mxu0 %v468
        %1797 = vmatpush.xpose.msra.mxu0 %v321
        %1798 = vmatmul.f32.gmra.mxu0 %v665
        %v1799 = vpop.f32.mrf.mxu0
        %v1800 = vadd.f32 %v1780, %v1799
        %1801 = vdwg.mxu0
        %1802 = vmatpush.xpose.msra.mxu0 0.0
        %1803 = vmatpush.xpose.msra.mxu0 0.0
        %1804 = vmatpush.xpose.msra.mxu0 0.0
        %1805 = vmatpush.xpose.msra.mxu0 0.0
        %1806 = vmatpush.xpose.msra.mxu0 0.0
        %1807 = vmatpush.xpose.msra.mxu0 0.0
        %1808 = vmatpush.xpose.msra.mxu0 0.0
        %1809 = vmatpush.xpose.msra.mxu0 0.0
        %1810 = vmatpush.xpose.msra.mxu0 0.0
        %1811 = vmatpush.xpose.msra.mxu0 0.0
        %1812 = vmatpush.xpose.msra.mxu0 0.0
        %1813 = vmatpush.xpose.msra.mxu0 0.0
        %1814 = vmatpush.xpose.msra.mxu0 0.0
        %1815 = vmatpush.xpose.msra.mxu0 0.0
        %1816 = vmatpush.xpose.msra.mxu0 %v469
        %1817 = vmatpush.xpose.msra.mxu0 %v322
        %1818 = vmatmul.f32.gmra.mxu0 %v666
        %v1819 = vpop.f32.mrf.mxu0
        %v1820 = vadd.f32 %v1800, %v1819
        %1821 = vdwg.mxu0
        %1822 = vmatpush.xpose.msra.mxu0 0.0
        %1823 = vmatpush.xpose.msra.mxu0 0.0
        %1824 = vmatpush.xpose.msra.mxu0 0.0
        %1825 = vmatpush.xpose.msra.mxu0 0.0
        %1826 = vmatpush.xpose.msra.mxu0 0.0
        %1827 = vmatpush.xpose.msra.mxu0 0.0
        %1828 = vmatpush.xpose.msra.mxu0 0.0
        %1829 = vmatpush.xpose.msra.mxu0 0.0
        %1830 = vmatpush.xpose.msra.mxu0 0.0
        %1831 = vmatpush.xpose.msra.mxu0 0.0
        %1832 = vmatpush.xpose.msra.mxu0 0.0
        %1833 = vmatpush.xpose.msra.mxu0 0.0
        %1834 = vmatpush.xpose.msra.mxu0 0.0
        %1835 = vmatpush.xpose.msra.mxu0 0.0
        %1836 = vmatpush.xpose.msra.mxu0 %v470
        %1837 = vmatpush.xpose.msra.mxu0 %v323
        %1838 = vmatmul.f32.gmra.mxu0 %v667
        %v1839 = vpop.f32.mrf.mxu0
        %v1840 = vadd.f32 %v1820, %v1839
        %1841 = vdwg.mxu0
        %1842 = vmatpush.xpose.msra.mxu0 0.0
        %1843 = vmatpush.xpose.msra.mxu0 0.0
        %1844 = vmatpush.xpose.msra.mxu0 0.0
        %1845 = vmatpush.xpose.msra.mxu0 0.0
        %1846 = vmatpush.xpose.msra.mxu0 0.0
        %1847 = vmatpush.xpose.msra.mxu0 0.0
        %1848 = vmatpush.xpose.msra.mxu0 0.0
        %1849 = vmatpush.xpose.msra.mxu0 0.0
        %1850 = vmatpush.xpose.msra.mxu0 0.0
        %1851 = vmatpush.xpose.msra.mxu0 0.0
        %1852 = vmatpush.xpose.msra.mxu0 0.0
        %1853 = vmatpush.xpose.msra.mxu0 0.0
        %1854 = vmatpush.xpose.msra.mxu0 0.0
        %1855 = vmatpush.xpose.msra.mxu0 0.0
        %1856 = vmatpush.xpose.msra.mxu0 %v471
        %1857 = vmatpush.xpose.msra.mxu0 %v324
        %1858 = vmatmul.f32.gmra.mxu0 %v668
        %v1859 = vpop.f32.mrf.mxu0
        %v1860 = vadd.f32 %v1840, %v1859
        %1861 = vdwg.mxu0
        %1862 = vmatpush.xpose.msra.mxu0 0.0
        %1863 = vmatpush.xpose.msra.mxu0 0.0
        %1864 = vmatpush.xpose.msra.mxu0 0.0
        %1865 = vmatpush.xpose.msra.mxu0 0.0
        %1866 = vmatpush.xpose.msra.mxu0 0.0
        %1867 = vmatpush.xpose.msra.mxu0 0.0
        %1868 = vmatpush.xpose.msra.mxu0 0.0
        %1869 = vmatpush.xpose.msra.mxu0 0.0
        %1870 = vmatpush.xpose.msra.mxu0 0.0
        %1871 = vmatpush.xpose.msra.mxu0 0.0
        %1872 = vmatpush.xpose.msra.mxu0 0.0
        %1873 = vmatpush.xpose.msra.mxu0 0.0
        %1874 = vmatpush.xpose.msra.mxu0 0.0
        %1875 = vmatpush.xpose.msra.mxu0 0.0
        %1876 = vmatpush.xpose.msra.mxu0 %v472
        %1877 = vmatpush.xpose.msra.mxu0 %v325
        %1878 = vmatmul.f32.gmra.mxu0 %v669
        %v1879 = vpop.f32.mrf.mxu0
        %v1880 = vadd.f32 %v1860, %v1879
        %1881 = vdwg.mxu0
        %1882 = vmatpush.xpose.msra.mxu0 0.0
        %1883 = vmatpush.xpose.msra.mxu0 0.0
        %1884 = vmatpush.xpose.msra.mxu0 0.0
        %1885 = vmatpush.xpose.msra.mxu0 0.0
        %1886 = vmatpush.xpose.msra.mxu0 0.0
        %1887 = vmatpush.xpose.msra.mxu0 0.0
        %1888 = vmatpush.xpose.msra.mxu0 0.0
        %1889 = vmatpush.xpose.msra.mxu0 0.0
        %1890 = vmatpush.xpose.msra.mxu0 0.0
        %1891 = vmatpush.xpose.msra.mxu0 0.0
        %1892 = vmatpush.xpose.msra.mxu0 0.0
        %1893 = vmatpush.xpose.msra.mxu0 0.0
        %1894 = vmatpush.xpose.msra.mxu0 0.0
        %1895 = vmatpush.xpose.msra.mxu0 0.0
        %1896 = vmatpush.xpose.msra.mxu0 %v473
        %1897 = vmatpush.xpose.msra.mxu0 %v326
        %1898 = vmatmul.f32.gmra.mxu0 %v670
        %v1899 = vpop.f32.mrf.mxu0
        %v1900 = vadd.f32 %v1880, %v1899
        %1901 = vdwg.mxu0
        %1902 = vmatpush.xpose.msra.mxu0 0.0
        %1903 = vmatpush.xpose.msra.mxu0 0.0
        %1904 = vmatpush.xpose.msra.mxu0 0.0
        %1905 = vmatpush.xpose.msra.mxu0 0.0
        %1906 = vmatpush.xpose.msra.mxu0 0.0
        %1907 = vmatpush.xpose.msra.mxu0 0.0
        %1908 = vmatpush.xpose.msra.mxu0 0.0
        %1909 = vmatpush.xpose.msra.mxu0 0.0
        %1910 = vmatpush.xpose.msra.mxu0 0.0
        %1911 = vmatpush.xpose.msra.mxu0 0.0
        %1912 = vmatpush.xpose.msra.mxu0 0.0
        %1913 = vmatpush.xpose.msra.mxu0 0.0
        %1914 = vmatpush.xpose.msra.mxu0 0.0
        %1915 = vmatpush.xpose.msra.mxu0 0.0
        %1916 = vmatpush.xpose.msra.mxu0 %v474
        %1917 = vmatpush.xpose.msra.mxu0 %v327
        %1918 = vmatmul.f32.gmra.mxu0 %v673
        %v1919 = vpop.f32.mrf.mxu0
        %v1920 = vadd.f32 %v1900, %v1919
        %1921 = vdwg.mxu0
        %1922 = vmatpush.xpose.msra.mxu0 0.0
        %1923 = vmatpush.xpose.msra.mxu0 0.0
        %1924 = vmatpush.xpose.msra.mxu0 0.0
        %1925 = vmatpush.xpose.msra.mxu0 0.0
        %1926 = vmatpush.xpose.msra.mxu0 0.0
        %1927 = vmatpush.xpose.msra.mxu0 0.0
        %1928 = vmatpush.xpose.msra.mxu0 0.0
        %1929 = vmatpush.xpose.msra.mxu0 0.0
        %1930 = vmatpush.xpose.msra.mxu0 0.0
        %1931 = vmatpush.xpose.msra.mxu0 0.0
        %1932 = vmatpush.xpose.msra.mxu0 0.0
        %1933 = vmatpush.xpose.msra.mxu0 0.0
        %1934 = vmatpush.xpose.msra.mxu0 0.0
        %1935 = vmatpush.xpose.msra.mxu0 0.0
        %1936 = vmatpush.xpose.msra.mxu0 %v475
        %1937 = vmatpush.xpose.msra.mxu0 %v328
        %1938 = vmatmul.f32.gmra.mxu0 %v674
        %v1939 = vpop.f32.mrf.mxu0
        %v1940 = vadd.f32 %v1920, %v1939
        %1941 = vdwg.mxu0
        %1942 = vmatpush.xpose.msra.mxu0 0.0
        %1943 = vmatpush.xpose.msra.mxu0 0.0
        %1944 = vmatpush.xpose.msra.mxu0 0.0
        %1945 = vmatpush.xpose.msra.mxu0 0.0
        %1946 = vmatpush.xpose.msra.mxu0 0.0
        %1947 = vmatpush.xpose.msra.mxu0 0.0
        %1948 = vmatpush.xpose.msra.mxu0 0.0
        %1949 = vmatpush.xpose.msra.mxu0 0.0
        %1950 = vmatpush.xpose.msra.mxu0 0.0
        %1951 = vmatpush.xpose.msra.mxu0 0.0
        %1952 = vmatpush.xpose.msra.mxu0 0.0
        %1953 = vmatpush.xpose.msra.mxu0 0.0
        %1954 = vmatpush.xpose.msra.mxu0 0.0
        %1955 = vmatpush.xpose.msra.mxu0 0.0
        %1956 = vmatpush.xpose.msra.mxu0 %v476
        %1957 = vmatpush.xpose.msra.mxu0 %v329
        %1958 = vmatmul.f32.gmra.mxu0 %v675
        %v1959 = vpop.f32.mrf.mxu0
        %v1960 = vadd.f32 %v1940, %v1959
        %1961 = vdwg.mxu0
        %1962 = vmatpush.xpose.msra.mxu0 0.0
        %1963 = vmatpush.xpose.msra.mxu0 0.0
        %1964 = vmatpush.xpose.msra.mxu0 0.0
        %1965 = vmatpush.xpose.msra.mxu0 0.0
        %1966 = vmatpush.xpose.msra.mxu0 0.0
        %1967 = vmatpush.xpose.msra.mxu0 0.0
        %1968 = vmatpush.xpose.msra.mxu0 0.0
        %1969 = vmatpush.xpose.msra.mxu0 0.0
        %1970 = vmatpush.xpose.msra.mxu0 0.0
        %1971 = vmatpush.xpose.msra.mxu0 0.0
        %1972 = vmatpush.xpose.msra.mxu0 0.0
        %1973 = vmatpush.xpose.msra.mxu0 0.0
        %1974 = vmatpush.xpose.msra.mxu0 0.0
        %1975 = vmatpush.xpose.msra.mxu0 0.0
        %1976 = vmatpush.xpose.msra.mxu0 %v477
        %1977 = vmatpush.xpose.msra.mxu0 %v330
        %1978 = vmatmul.f32.gmra.mxu0 %v676
        %v1979 = vpop.f32.mrf.mxu0
        %v1980 = vadd.f32 %v1960, %v1979
        %1981 = vdwg.mxu0
        %1982 = vmatpush.xpose.msra.mxu0 0.0
        %1983 = vmatpush.xpose.msra.mxu0 0.0
        %1984 = vmatpush.xpose.msra.mxu0 0.0
        %1985 = vmatpush.xpose.msra.mxu0 0.0
        %1986 = vmatpush.xpose.msra.mxu0 0.0
        %1987 = vmatpush.xpose.msra.mxu0 0.0
        %1988 = vmatpush.xpose.msra.mxu0 0.0
        %1989 = vmatpush.xpose.msra.mxu0 0.0
        %1990 = vmatpush.xpose.msra.mxu0 0.0
        %1991 = vmatpush.xpose.msra.mxu0 0.0
        %1992 = vmatpush.xpose.msra.mxu0 0.0
        %1993 = vmatpush.xpose.msra.mxu0 0.0
        %1994 = vmatpush.xpose.msra.mxu0 0.0
        %1995 = vmatpush.xpose.msra.mxu0 0.0
        %1996 = vmatpush.xpose.msra.mxu0 %v478
        %1997 = vmatpush.xpose.msra.mxu0 %v331
        %1998 = vmatmul.f32.gmra.mxu0 %v677
        %v1999 = vpop.f32.mrf.mxu0
        %v2000 = vadd.f32 %v1980, %v1999
        %2001 = vdwg.mxu0
        %2002 = vmatpush.xpose.msra.mxu0 0.0
        %2003 = vmatpush.xpose.msra.mxu0 0.0
        %2004 = vmatpush.xpose.msra.mxu0 0.0
        %2005 = vmatpush.xpose.msra.mxu0 0.0
        %2006 = vmatpush.xpose.msra.mxu0 0.0
        %2007 = vmatpush.xpose.msra.mxu0 0.0
        %2008 = vmatpush.xpose.msra.mxu0 0.0
        %2009 = vmatpush.xpose.msra.mxu0 0.0
        %2010 = vmatpush.xpose.msra.mxu0 0.0
        %2011 = vmatpush.xpose.msra.mxu0 0.0
        %2012 = vmatpush.xpose.msra.mxu0 0.0
        %2013 = vmatpush.xpose.msra.mxu0 0.0
        %2014 = vmatpush.xpose.msra.mxu0 0.0
        %2015 = vmatpush.xpose.msra.mxu0 0.0
        %2016 = vmatpush.xpose.msra.mxu0 %v479
        %2017 = vmatpush.xpose.msra.mxu0 %v332
        %2018 = vmatmul.f32.gmra.mxu0 %v678
        %v2019 = vpop.f32.mrf.mxu0
        %v2020 = vadd.f32 %v2000, %v2019
        %2021 = vdwg.mxu0
        %2022 = vmatpush.xpose.msra.mxu0 0.0
        %2023 = vmatpush.xpose.msra.mxu0 0.0
        %2024 = vmatpush.xpose.msra.mxu0 0.0
        %2025 = vmatpush.xpose.msra.mxu0 0.0
        %2026 = vmatpush.xpose.msra.mxu0 0.0
        %2027 = vmatpush.xpose.msra.mxu0 0.0
        %2028 = vmatpush.xpose.msra.mxu0 0.0
        %2029 = vmatpush.xpose.msra.mxu0 0.0
        %2030 = vmatpush.xpose.msra.mxu0 0.0
        %2031 = vmatpush.xpose.msra.mxu0 0.0
        %2032 = vmatpush.xpose.msra.mxu0 0.0
        %2033 = vmatpush.xpose.msra.mxu0 0.0
        %2034 = vmatpush.xpose.msra.mxu0 0.0
        %2035 = vmatpush.xpose.msra.mxu0 0.0
        %2036 = vmatpush.xpose.msra.mxu0 %v480
        %2037 = vmatpush.xpose.msra.mxu0 %v333
        %2038 = vmatmul.f32.gmra.mxu0 %v679
        %v2039 = vpop.f32.mrf.mxu0
        %v2040 = vadd.f32 %v2020, %v2039
        %2041 = vdwg.mxu0
        %2042 = vmatpush.xpose.msra.mxu0 0.0
        %2043 = vmatpush.xpose.msra.mxu0 0.0
        %2044 = vmatpush.xpose.msra.mxu0 0.0
        %2045 = vmatpush.xpose.msra.mxu0 0.0
        %2046 = vmatpush.xpose.msra.mxu0 0.0
        %2047 = vmatpush.xpose.msra.mxu0 0.0
        %2048 = vmatpush.xpose.msra.mxu0 0.0
        %2049 = vmatpush.xpose.msra.mxu0 0.0
        %2050 = vmatpush.xpose.msra.mxu0 0.0
        %2051 = vmatpush.xpose.msra.mxu0 0.0
        %2052 = vmatpush.xpose.msra.mxu0 0.0
        %2053 = vmatpush.xpose.msra.mxu0 0.0
        %2054 = vmatpush.xpose.msra.mxu0 0.0
        %2055 = vmatpush.xpose.msra.mxu0 0.0
        %2056 = vmatpush.xpose.msra.mxu0 %v481
        %2057 = vmatpush.xpose.msra.mxu0 %v334
        %2058 = vmatmul.f32.gmra.mxu0 %v680
        %v2059 = vpop.f32.mrf.mxu0
        %v2060 = vadd.f32 %v2040, %v2059
        %2061 = vdwg.mxu0
        %2062 = vmatpush.xpose.msra.mxu0 0.0
        %2063 = vmatpush.xpose.msra.mxu0 0.0
        %2064 = vmatpush.xpose.msra.mxu0 0.0
        %2065 = vmatpush.xpose.msra.mxu0 0.0
        %2066 = vmatpush.xpose.msra.mxu0 0.0
        %2067 = vmatpush.xpose.msra.mxu0 0.0
        %2068 = vmatpush.xpose.msra.mxu0 0.0
        %2069 = vmatpush.xpose.msra.mxu0 0.0
        %2070 = vmatpush.xpose.msra.mxu0 0.0
        %2071 = vmatpush.xpose.msra.mxu0 0.0
        %2072 = vmatpush.xpose.msra.mxu0 0.0
        %2073 = vmatpush.xpose.msra.mxu0 0.0
        %2074 = vmatpush.xpose.msra.mxu0 0.0
        %2075 = vmatpush.xpose.msra.mxu0 0.0
        %2076 = vmatpush.xpose.msra.mxu0 %v482
        %2077 = vmatpush.xpose.msra.mxu0 %v335
        %2078 = vmatmul.f32.gmra.mxu0 %v683
        %v2079 = vpop.f32.mrf.mxu0
        %v2080 = vadd.f32 %v2060, %v2079
        %2081 = vdwg.mxu0
        %2082 = vmatpush.xpose.msra.mxu0 0.0
        %2083 = vmatpush.xpose.msra.mxu0 0.0
        %2084 = vmatpush.xpose.msra.mxu0 0.0
        %2085 = vmatpush.xpose.msra.mxu0 0.0
        %2086 = vmatpush.xpose.msra.mxu0 0.0
        %2087 = vmatpush.xpose.msra.mxu0 0.0
        %2088 = vmatpush.xpose.msra.mxu0 0.0
        %2089 = vmatpush.xpose.msra.mxu0 0.0
        %2090 = vmatpush.xpose.msra.mxu0 0.0
        %2091 = vmatpush.xpose.msra.mxu0 0.0
        %2092 = vmatpush.xpose.msra.mxu0 0.0
        %2093 = vmatpush.xpose.msra.mxu0 0.0
        %2094 = vmatpush.xpose.msra.mxu0 0.0
        %2095 = vmatpush.xpose.msra.mxu0 0.0
        %2096 = vmatpush.xpose.msra.mxu0 %v483
        %2097 = vmatpush.xpose.msra.mxu0 %v336
        %2098 = vmatmul.f32.gmra.mxu0 %v684
        %v2099 = vpop.f32.mrf.mxu0
        %v2100 = vadd.f32 %v2080, %v2099
        %2101 = vdwg.mxu0
        %2102 = vmatpush.xpose.msra.mxu0 0.0
        %2103 = vmatpush.xpose.msra.mxu0 0.0
        %2104 = vmatpush.xpose.msra.mxu0 0.0
        %2105 = vmatpush.xpose.msra.mxu0 0.0
        %2106 = vmatpush.xpose.msra.mxu0 0.0
        %2107 = vmatpush.xpose.msra.mxu0 0.0
        %2108 = vmatpush.xpose.msra.mxu0 0.0
        %2109 = vmatpush.xpose.msra.mxu0 0.0
        %2110 = vmatpush.xpose.msra.mxu0 0.0
        %2111 = vmatpush.xpose.msra.mxu0 0.0
        %2112 = vmatpush.xpose.msra.mxu0 0.0
        %2113 = vmatpush.xpose.msra.mxu0 0.0
        %2114 = vmatpush.xpose.msra.mxu0 0.0
        %2115 = vmatpush.xpose.msra.mxu0 0.0
        %2116 = vmatpush.xpose.msra.mxu0 %v484
        %2117 = vmatpush.xpose.msra.mxu0 %v337
        %2118 = vmatmul.f32.gmra.mxu0 %v685
        %v2119 = vpop.f32.mrf.mxu0
        %v2120 = vadd.f32 %v2100, %v2119
        %2121 = vdwg.mxu0
        %2122 = vmatpush.xpose.msra.mxu0 0.0
        %2123 = vmatpush.xpose.msra.mxu0 0.0
        %2124 = vmatpush.xpose.msra.mxu0 0.0
        %2125 = vmatpush.xpose.msra.mxu0 0.0
        %2126 = vmatpush.xpose.msra.mxu0 0.0
        %2127 = vmatpush.xpose.msra.mxu0 0.0
        %2128 = vmatpush.xpose.msra.mxu0 0.0
        %2129 = vmatpush.xpose.msra.mxu0 0.0
        %2130 = vmatpush.xpose.msra.mxu0 0.0
        %2131 = vmatpush.xpose.msra.mxu0 0.0
        %2132 = vmatpush.xpose.msra.mxu0 0.0
        %2133 = vmatpush.xpose.msra.mxu0 0.0
        %2134 = vmatpush.xpose.msra.mxu0 0.0
        %2135 = vmatpush.xpose.msra.mxu0 0.0
        %2136 = vmatpush.xpose.msra.mxu0 %v485
        %2137 = vmatpush.xpose.msra.mxu0 %v338
        %2138 = vmatmul.f32.gmra.mxu0 %v686
        %v2139 = vpop.f32.mrf.mxu0
        %v2140 = vadd.f32 %v2120, %v2139
        %2141 = vdwg.mxu0
        %2142 = vmatpush.xpose.msra.mxu0 0.0
        %2143 = vmatpush.xpose.msra.mxu0 0.0
        %2144 = vmatpush.xpose.msra.mxu0 0.0
        %2145 = vmatpush.xpose.msra.mxu0 0.0
        %2146 = vmatpush.xpose.msra.mxu0 0.0
        %2147 = vmatpush.xpose.msra.mxu0 0.0
        %2148 = vmatpush.xpose.msra.mxu0 0.0
        %2149 = vmatpush.xpose.msra.mxu0 0.0
        %2150 = vmatpush.xpose.msra.mxu0 0.0
        %2151 = vmatpush.xpose.msra.mxu0 0.0
        %2152 = vmatpush.xpose.msra.mxu0 0.0
        %2153 = vmatpush.xpose.msra.mxu0 0.0
        %2154 = vmatpush.xpose.msra.mxu0 0.0
        %2155 = vmatpush.xpose.msra.mxu0 0.0
        %2156 = vmatpush.xpose.msra.mxu0 %v486
        %2157 = vmatpush.xpose.msra.mxu0 %v339
        %2158 = vmatmul.f32.gmra.mxu0 %v687
        %v2159 = vpop.f32.mrf.mxu0
        %v2160 = vadd.f32 %v2140, %v2159
        %2161 = vdwg.mxu0
        %2162 = vmatpush.xpose.msra.mxu0 0.0
        %2163 = vmatpush.xpose.msra.mxu0 0.0
        %2164 = vmatpush.xpose.msra.mxu0 0.0
        %2165 = vmatpush.xpose.msra.mxu0 0.0
        %2166 = vmatpush.xpose.msra.mxu0 0.0
        %2167 = vmatpush.xpose.msra.mxu0 0.0
        %2168 = vmatpush.xpose.msra.mxu0 0.0
        %2169 = vmatpush.xpose.msra.mxu0 0.0
        %2170 = vmatpush.xpose.msra.mxu0 0.0
        %2171 = vmatpush.xpose.msra.mxu0 0.0
        %2172 = vmatpush.xpose.msra.mxu0 0.0
        %2173 = vmatpush.xpose.msra.mxu0 0.0
        %2174 = vmatpush.xpose.msra.mxu0 0.0
        %2175 = vmatpush.xpose.msra.mxu0 0.0
        %2176 = vmatpush.xpose.msra.mxu0 %v487
        %2177 = vmatpush.xpose.msra.mxu0 %v340
        %2178 = vmatmul.f32.gmra.mxu0 %v688
        %v2179 = vpop.f32.mrf.mxu0
        %v2180 = vadd.f32 %v2160, %v2179
        %2181 = vdwg.mxu0
        %2182 = vmatpush.xpose.msra.mxu0 0.0
        %2183 = vmatpush.xpose.msra.mxu0 0.0
        %2184 = vmatpush.xpose.msra.mxu0 0.0
        %2185 = vmatpush.xpose.msra.mxu0 0.0
        %2186 = vmatpush.xpose.msra.mxu0 0.0
        %2187 = vmatpush.xpose.msra.mxu0 0.0
        %2188 = vmatpush.xpose.msra.mxu0 0.0
        %2189 = vmatpush.xpose.msra.mxu0 0.0
        %2190 = vmatpush.xpose.msra.mxu0 0.0
        %2191 = vmatpush.xpose.msra.mxu0 0.0
        %2192 = vmatpush.xpose.msra.mxu0 0.0
        %2193 = vmatpush.xpose.msra.mxu0 0.0
        %2194 = vmatpush.xpose.msra.mxu0 0.0
        %2195 = vmatpush.xpose.msra.mxu0 0.0
        %2196 = vmatpush.xpose.msra.mxu0 %v488
        %2197 = vmatpush.xpose.msra.mxu0 %v341
        %2198 = vmatmul.f32.gmra.mxu0 %v689
        %v2199 = vpop.f32.mrf.mxu0
        %v2200 = vadd.f32 %v2180, %v2199
        %2201 = vdwg.mxu0
        %2202 = vmatpush.xpose.msra.mxu0 0.0
        %2203 = vmatpush.xpose.msra.mxu0 0.0
        %2204 = vmatpush.xpose.msra.mxu0 0.0
        %2205 = vmatpush.xpose.msra.mxu0 0.0
        %2206 = vmatpush.xpose.msra.mxu0 0.0
        %2207 = vmatpush.xpose.msra.mxu0 0.0
        %2208 = vmatpush.xpose.msra.mxu0 0.0
        %2209 = vmatpush.xpose.msra.mxu0 0.0
        %2210 = vmatpush.xpose.msra.mxu0 0.0
        %2211 = vmatpush.xpose.msra.mxu0 0.0
        %2212 = vmatpush.xpose.msra.mxu0 0.0
        %2213 = vmatpush.xpose.msra.mxu0 0.0
        %2214 = vmatpush.xpose.msra.mxu0 0.0
        %2215 = vmatpush.xpose.msra.mxu0 0.0
        %2216 = vmatpush.xpose.msra.mxu0 %v489
        %2217 = vmatpush.xpose.msra.mxu0 %v342
        %2218 = vmatmul.f32.gmra.mxu0 %v690
        %v2219 = vpop.f32.mrf.mxu0
        %v2220 = vadd.f32 %v2200, %v2219
        %2221 = vdwg.mxu0
        %2222 = vmatpush.xpose.msra.mxu0 0.0
        %2223 = vmatpush.xpose.msra.mxu0 0.0
        %2224 = vmatpush.xpose.msra.mxu0 0.0
        %2225 = vmatpush.xpose.msra.mxu0 0.0
        %2226 = vmatpush.xpose.msra.mxu0 0.0
        %2227 = vmatpush.xpose.msra.mxu0 0.0
        %2228 = vmatpush.xpose.msra.mxu0 0.0
        %2229 = vmatpush.xpose.msra.mxu0 0.0
        %2230 = vmatpush.xpose.msra.mxu0 0.0
        %2231 = vmatpush.xpose.msra.mxu0 0.0
        %2232 = vmatpush.xpose.msra.mxu0 0.0
        %2233 = vmatpush.xpose.msra.mxu0 0.0
        %2234 = vmatpush.xpose.msra.mxu0 0.0
        %2235 = vmatpush.xpose.msra.mxu0 0.0
        %2236 = vmatpush.xpose.msra.mxu0 %v490
        %2237 = vmatpush.xpose.msra.mxu0 %v343
        %2238 = vmatmul.f32.gmra.mxu0 %v693
        %v2239 = vpop.f32.mrf.mxu0
        %v2240 = vadd.f32 %v2220, %v2239
        %2241 = vdwg.mxu0
        %2242 = vmatpush.xpose.msra.mxu0 0.0
        %2243 = vmatpush.xpose.msra.mxu0 0.0
        %2244 = vmatpush.xpose.msra.mxu0 0.0
        %2245 = vmatpush.xpose.msra.mxu0 0.0
        %2246 = vmatpush.xpose.msra.mxu0 0.0
        %2247 = vmatpush.xpose.msra.mxu0 0.0
        %2248 = vmatpush.xpose.msra.mxu0 0.0
        %2249 = vmatpush.xpose.msra.mxu0 0.0
        %2250 = vmatpush.xpose.msra.mxu0 0.0
        %2251 = vmatpush.xpose.msra.mxu0 0.0
        %2252 = vmatpush.xpose.msra.mxu0 0.0
        %2253 = vmatpush.xpose.msra.mxu0 0.0
        %2254 = vmatpush.xpose.msra.mxu0 0.0
        %2255 = vmatpush.xpose.msra.mxu0 0.0
        %2256 = vmatpush.xpose.msra.mxu0 %v491
        %2257 = vmatpush.xpose.msra.mxu0 %v344
        %2258 = vmatmul.f32.gmra.mxu0 %v694
        %v2259 = vpop.f32.mrf.mxu0
        %v2260 = vadd.f32 %v2240, %v2259
        %2261 = vdwg.mxu0
        %2262 = vmatpush.xpose.msra.mxu0 0.0
        %2263 = vmatpush.xpose.msra.mxu0 0.0
        %2264 = vmatpush.xpose.msra.mxu0 0.0
        %2265 = vmatpush.xpose.msra.mxu0 0.0
        %2266 = vmatpush.xpose.msra.mxu0 0.0
        %2267 = vmatpush.xpose.msra.mxu0 0.0
        %2268 = vmatpush.xpose.msra.mxu0 0.0
        %2269 = vmatpush.xpose.msra.mxu0 0.0
        %2270 = vmatpush.xpose.msra.mxu0 0.0
        %2271 = vmatpush.xpose.msra.mxu0 0.0
        %2272 = vmatpush.xpose.msra.mxu0 0.0
        %2273 = vmatpush.xpose.msra.mxu0 0.0
        %2274 = vmatpush.xpose.msra.mxu0 0.0
        %2275 = vmatpush.xpose.msra.mxu0 0.0
        %2276 = vmatpush.xpose.msra.mxu0 %v492
        %2277 = vmatpush.xpose.msra.mxu0 %v345
        %2278 = vmatmul.f32.gmra.mxu0 %v695
        %v2279 = vpop.f32.mrf.mxu0
        %v2280 = vadd.f32 %v2260, %v2279
        %2281 = vdwg.mxu0
        %2282 = vmatpush.xpose.msra.mxu0 0.0
        %2283 = vmatpush.xpose.msra.mxu0 0.0
        %2284 = vmatpush.xpose.msra.mxu0 0.0
        %2285 = vmatpush.xpose.msra.mxu0 0.0
        %2286 = vmatpush.xpose.msra.mxu0 0.0
        %2287 = vmatpush.xpose.msra.mxu0 0.0
        %2288 = vmatpush.xpose.msra.mxu0 0.0
        %2289 = vmatpush.xpose.msra.mxu0 0.0
        %2290 = vmatpush.xpose.msra.mxu0 0.0
        %2291 = vmatpush.xpose.msra.mxu0 0.0
        %2292 = vmatpush.xpose.msra.mxu0 0.0
        %2293 = vmatpush.xpose.msra.mxu0 0.0
        %2294 = vmatpush.xpose.msra.mxu0 0.0
        %2295 = vmatpush.xpose.msra.mxu0 0.0
        %2296 = vmatpush.xpose.msra.mxu0 %v493
        %2297 = vmatpush.xpose.msra.mxu0 %v346
        %2298 = vmatmul.f32.gmra.mxu0 %v696
        %v2299 = vpop.f32.mrf.mxu0
        %v2300 = vadd.f32 %v2280, %v2299
        %2301 = vdwg.mxu0
        %2302 = vmatpush.xpose.msra.mxu0 0.0
        %2303 = vmatpush.xpose.msra.mxu0 0.0
        %2304 = vmatpush.xpose.msra.mxu0 0.0
        %2305 = vmatpush.xpose.msra.mxu0 0.0
        %2306 = vmatpush.xpose.msra.mxu0 0.0
        %2307 = vmatpush.xpose.msra.mxu0 0.0
        %2308 = vmatpush.xpose.msra.mxu0 0.0
        %2309 = vmatpush.xpose.msra.mxu0 0.0
        %2310 = vmatpush.xpose.msra.mxu0 0.0
        %2311 = vmatpush.xpose.msra.mxu0 0.0
        %2312 = vmatpush.xpose.msra.mxu0 0.0
        %2313 = vmatpush.xpose.msra.mxu0 0.0
        %2314 = vmatpush.xpose.msra.mxu0 0.0
        %2315 = vmatpush.xpose.msra.mxu0 0.0
        %2316 = vmatpush.xpose.msra.mxu0 %v494
        %2317 = vmatpush.xpose.msra.mxu0 %v347
        %2318 = vmatmul.f32.gmra.mxu0 %v697
        %v2319 = vpop.f32.mrf.mxu0
        %v2320 = vadd.f32 %v2300, %v2319
        %2321 = vdwg.mxu0
        %2322 = vmatpush.xpose.msra.mxu0 0.0
        %2323 = vmatpush.xpose.msra.mxu0 0.0
        %2324 = vmatpush.xpose.msra.mxu0 0.0
        %2325 = vmatpush.xpose.msra.mxu0 0.0
        %2326 = vmatpush.xpose.msra.mxu0 0.0
        %2327 = vmatpush.xpose.msra.mxu0 0.0
        %2328 = vmatpush.xpose.msra.mxu0 0.0
        %2329 = vmatpush.xpose.msra.mxu0 0.0
        %2330 = vmatpush.xpose.msra.mxu0 0.0
        %2331 = vmatpush.xpose.msra.mxu0 0.0
        %2332 = vmatpush.xpose.msra.mxu0 0.0
        %2333 = vmatpush.xpose.msra.mxu0 0.0
        %2334 = vmatpush.xpose.msra.mxu0 0.0
        %2335 = vmatpush.xpose.msra.mxu0 0.0
        %2336 = vmatpush.xpose.msra.mxu0 %v495
        %2337 = vmatpush.xpose.msra.mxu0 %v348
        %2338 = vmatmul.f32.gmra.mxu0 %v698
        %v2339 = vpop.f32.mrf.mxu0
        %v2340 = vadd.f32 %v2320, %v2339
        %2341 = vdwg.mxu0
        %2342 = vmatpush.xpose.msra.mxu0 0.0
        %2343 = vmatpush.xpose.msra.mxu0 0.0
        %2344 = vmatpush.xpose.msra.mxu0 0.0
        %2345 = vmatpush.xpose.msra.mxu0 0.0
        %2346 = vmatpush.xpose.msra.mxu0 0.0
        %2347 = vmatpush.xpose.msra.mxu0 0.0
        %2348 = vmatpush.xpose.msra.mxu0 0.0
        %2349 = vmatpush.xpose.msra.mxu0 0.0
        %2350 = vmatpush.xpose.msra.mxu0 0.0
        %2351 = vmatpush.xpose.msra.mxu0 0.0
        %2352 = vmatpush.xpose.msra.mxu0 0.0
        %2353 = vmatpush.xpose.msra.mxu0 0.0
        %2354 = vmatpush.xpose.msra.mxu0 0.0
        %2355 = vmatpush.xpose.msra.mxu0 0.0
        %2356 = vmatpush.xpose.msra.mxu0 %v496
        %2357 = vmatpush.xpose.msra.mxu0 %v349
        %2358 = vmatmul.f32.gmra.mxu0 %v699
        %v2359 = vpop.f32.mrf.mxu0
        %v2360 = vadd.f32 %v2340, %v2359
        %2361 = vdwg.mxu0
        %2362 = vmatpush.xpose.msra.mxu0 0.0
        %2363 = vmatpush.xpose.msra.mxu0 0.0
        %2364 = vmatpush.xpose.msra.mxu0 0.0
        %2365 = vmatpush.xpose.msra.mxu0 0.0
        %2366 = vmatpush.xpose.msra.mxu0 0.0
        %2367 = vmatpush.xpose.msra.mxu0 0.0
        %2368 = vmatpush.xpose.msra.mxu0 0.0
        %2369 = vmatpush.xpose.msra.mxu0 0.0
        %2370 = vmatpush.xpose.msra.mxu0 0.0
        %2371 = vmatpush.xpose.msra.mxu0 0.0
        %2372 = vmatpush.xpose.msra.mxu0 0.0
        %2373 = vmatpush.xpose.msra.mxu0 0.0
        %2374 = vmatpush.xpose.msra.mxu0 0.0
        %2375 = vmatpush.xpose.msra.mxu0 0.0
        %2376 = vmatpush.xpose.msra.mxu0 %v497
        %2377 = vmatpush.xpose.msra.mxu0 %v350
        %2378 = vmatmul.f32.gmra.mxu0 %v700
        %v2379 = vpop.f32.mrf.mxu0
        %v2380 = vadd.f32 %v2360, %v2379
        %2381 = vdwg.mxu0
        %2382 = vmatpush.xpose.msra.mxu0 0.0
        %2383 = vmatpush.xpose.msra.mxu0 0.0
        %2384 = vmatpush.xpose.msra.mxu0 0.0
        %2385 = vmatpush.xpose.msra.mxu0 0.0
        %2386 = vmatpush.xpose.msra.mxu0 0.0
        %2387 = vmatpush.xpose.msra.mxu0 0.0
        %2388 = vmatpush.xpose.msra.mxu0 0.0
        %2389 = vmatpush.xpose.msra.mxu0 0.0
        %2390 = vmatpush.xpose.msra.mxu0 0.0
        %2391 = vmatpush.xpose.msra.mxu0 0.0
        %2392 = vmatpush.xpose.msra.mxu0 0.0
        %2393 = vmatpush.xpose.msra.mxu0 0.0
        %2394 = vmatpush.xpose.msra.mxu0 0.0
        %2395 = vmatpush.xpose.msra.mxu0 0.0
        %2396 = vmatpush.xpose.msra.mxu0 %v498
        %2397 = vmatpush.xpose.msra.mxu0 %v351
        %2398 = vmatmul.f32.gmra.mxu0 %v703
        %v2399 = vpop.f32.mrf.mxu0
        %v2400 = vadd.f32 %v2380, %v2399
        %2401 = vdwg.mxu0
        %2402 = vmatpush.xpose.msra.mxu0 0.0
        %2403 = vmatpush.xpose.msra.mxu0 0.0
        %2404 = vmatpush.xpose.msra.mxu0 0.0
        %2405 = vmatpush.xpose.msra.mxu0 0.0
        %2406 = vmatpush.xpose.msra.mxu0 0.0
        %2407 = vmatpush.xpose.msra.mxu0 0.0
        %2408 = vmatpush.xpose.msra.mxu0 0.0
        %2409 = vmatpush.xpose.msra.mxu0 0.0
        %2410 = vmatpush.xpose.msra.mxu0 0.0
        %2411 = vmatpush.xpose.msra.mxu0 0.0
        %2412 = vmatpush.xpose.msra.mxu0 0.0
        %2413 = vmatpush.xpose.msra.mxu0 0.0
        %2414 = vmatpush.xpose.msra.mxu0 0.0
        %2415 = vmatpush.xpose.msra.mxu0 0.0
        %2416 = vmatpush.xpose.msra.mxu0 %v499
        %2417 = vmatpush.xpose.msra.mxu0 %v352
        %2418 = vmatmul.f32.gmra.mxu0 %v704
        %v2419 = vpop.f32.mrf.mxu0
        %v2420 = vadd.f32 %v2400, %v2419
        %2421 = vdwg.mxu0
        %2422 = vmatpush.xpose.msra.mxu0 0.0
        %2423 = vmatpush.xpose.msra.mxu0 0.0
        %2424 = vmatpush.xpose.msra.mxu0 0.0
        %2425 = vmatpush.xpose.msra.mxu0 0.0
        %2426 = vmatpush.xpose.msra.mxu0 0.0
        %2427 = vmatpush.xpose.msra.mxu0 0.0
        %2428 = vmatpush.xpose.msra.mxu0 0.0
        %2429 = vmatpush.xpose.msra.mxu0 0.0
        %2430 = vmatpush.xpose.msra.mxu0 0.0
        %2431 = vmatpush.xpose.msra.mxu0 0.0
        %2432 = vmatpush.xpose.msra.mxu0 0.0
        %2433 = vmatpush.xpose.msra.mxu0 0.0
        %2434 = vmatpush.xpose.msra.mxu0 0.0
        %2435 = vmatpush.xpose.msra.mxu0 0.0
        %2436 = vmatpush.xpose.msra.mxu0 %v500
        %2437 = vmatpush.xpose.msra.mxu0 %v353
        %2438 = vmatmul.f32.gmra.mxu0 %v705
        %v2439 = vpop.f32.mrf.mxu0
        %v2440 = vadd.f32 %v2420, %v2439
        %2441 = vdwg.mxu0
        %2442 = vmatpush.xpose.msra.mxu0 0.0
        %2443 = vmatpush.xpose.msra.mxu0 0.0
        %2444 = vmatpush.xpose.msra.mxu0 0.0
        %2445 = vmatpush.xpose.msra.mxu0 0.0
        %2446 = vmatpush.xpose.msra.mxu0 0.0
        %2447 = vmatpush.xpose.msra.mxu0 0.0
        %2448 = vmatpush.xpose.msra.mxu0 0.0
        %2449 = vmatpush.xpose.msra.mxu0 0.0
        %2450 = vmatpush.xpose.msra.mxu0 0.0
        %2451 = vmatpush.xpose.msra.mxu0 0.0
        %2452 = vmatpush.xpose.msra.mxu0 0.0
        %2453 = vmatpush.xpose.msra.mxu0 0.0
        %2454 = vmatpush.xpose.msra.mxu0 0.0
        %2455 = vmatpush.xpose.msra.mxu0 0.0
        %2456 = vmatpush.xpose.msra.mxu0 %v501
        %2457 = vmatpush.xpose.msra.mxu0 %v354
        %2458 = vmatmul.f32.gmra.mxu0 %v706
        %v2459 = vpop.f32.mrf.mxu0
        %v2460 = vadd.f32 %v2440, %v2459
        %2461 = vdwg.mxu0
        %2462 = vmatpush.xpose.msra.mxu0 0.0
        %2463 = vmatpush.xpose.msra.mxu0 0.0
        %2464 = vmatpush.xpose.msra.mxu0 0.0
        %2465 = vmatpush.xpose.msra.mxu0 0.0
        %2466 = vmatpush.xpose.msra.mxu0 0.0
        %2467 = vmatpush.xpose.msra.mxu0 0.0
        %2468 = vmatpush.xpose.msra.mxu0 0.0
        %2469 = vmatpush.xpose.msra.mxu0 0.0
        %2470 = vmatpush.xpose.msra.mxu0 0.0
        %2471 = vmatpush.xpose.msra.mxu0 0.0
        %2472 = vmatpush.xpose.msra.mxu0 0.0
        %2473 = vmatpush.xpose.msra.mxu0 0.0
        %2474 = vmatpush.xpose.msra.mxu0 0.0
        %2475 = vmatpush.xpose.msra.mxu0 0.0
        %2476 = vmatpush.xpose.msra.mxu0 %v502
        %2477 = vmatpush.xpose.msra.mxu0 %v355
        %2478 = vmatmul.f32.gmra.mxu0 %v707
        %v2479 = vpop.f32.mrf.mxu0
        %v2480 = vadd.f32 %v2460, %v2479
        %2481 = vdwg.mxu0
        %2482 = vmatpush.xpose.msra.mxu0 0.0
        %2483 = vmatpush.xpose.msra.mxu0 0.0
        %2484 = vmatpush.xpose.msra.mxu0 0.0
        %2485 = vmatpush.xpose.msra.mxu0 0.0
        %2486 = vmatpush.xpose.msra.mxu0 0.0
        %2487 = vmatpush.xpose.msra.mxu0 0.0
        %2488 = vmatpush.xpose.msra.mxu0 0.0
        %2489 = vmatpush.xpose.msra.mxu0 0.0
        %2490 = vmatpush.xpose.msra.mxu0 0.0
        %2491 = vmatpush.xpose.msra.mxu0 0.0
        %2492 = vmatpush.xpose.msra.mxu0 0.0
        %2493 = vmatpush.xpose.msra.mxu0 0.0
        %2494 = vmatpush.xpose.msra.mxu0 0.0
        %2495 = vmatpush.xpose.msra.mxu0 0.0
        %2496 = vmatpush.xpose.msra.mxu0 %v503
        %2497 = vmatpush.xpose.msra.mxu0 %v356
        %2498 = vmatmul.f32.gmra.mxu0 %v708
        %v2499 = vpop.f32.mrf.mxu0
        %v2500 = vadd.f32 %v2480, %v2499
        %2501 = vdwg.mxu0
        %2502 = vmatpush.xpose.msra.mxu0 0.0
        %2503 = vmatpush.xpose.msra.mxu0 0.0
        %2504 = vmatpush.xpose.msra.mxu0 0.0
        %2505 = vmatpush.xpose.msra.mxu0 0.0
        %2506 = vmatpush.xpose.msra.mxu0 0.0
        %2507 = vmatpush.xpose.msra.mxu0 0.0
        %2508 = vmatpush.xpose.msra.mxu0 0.0
        %2509 = vmatpush.xpose.msra.mxu0 0.0
        %2510 = vmatpush.xpose.msra.mxu0 0.0
        %2511 = vmatpush.xpose.msra.mxu0 0.0
        %2512 = vmatpush.xpose.msra.mxu0 0.0
        %2513 = vmatpush.xpose.msra.mxu0 0.0
        %2514 = vmatpush.xpose.msra.mxu0 0.0
        %2515 = vmatpush.xpose.msra.mxu0 0.0
        %2516 = vmatpush.xpose.msra.mxu0 %v504
        %2517 = vmatpush.xpose.msra.mxu0 %v357
        %2518 = vmatmul.f32.gmra.mxu0 %v709
        %v2519 = vpop.f32.mrf.mxu0
        %v2520 = vadd.f32 %v2500, %v2519
        %2521 = vdwg.mxu0
        %2522 = vmatpush.xpose.msra.mxu0 0.0
        %2523 = vmatpush.xpose.msra.mxu0 0.0
        %2524 = vmatpush.xpose.msra.mxu0 0.0
        %2525 = vmatpush.xpose.msra.mxu0 0.0
        %2526 = vmatpush.xpose.msra.mxu0 0.0
        %2527 = vmatpush.xpose.msra.mxu0 0.0
        %2528 = vmatpush.xpose.msra.mxu0 0.0
        %2529 = vmatpush.xpose.msra.mxu0 0.0
        %2530 = vmatpush.xpose.msra.mxu0 0.0
        %2531 = vmatpush.xpose.msra.mxu0 0.0
        %2532 = vmatpush.xpose.msra.mxu0 0.0
        %2533 = vmatpush.xpose.msra.mxu0 0.0
        %2534 = vmatpush.xpose.msra.mxu0 0.0
        %2535 = vmatpush.xpose.msra.mxu0 0.0
        %2536 = vmatpush.xpose.msra.mxu0 %v505
        %2537 = vmatpush.xpose.msra.mxu0 %v358
        %2538 = vmatmul.f32.gmra.mxu0 %v710
        %v2539 = vpop.f32.mrf.mxu0
        %v2540 = vadd.f32 %v2520, %v2539
        %2541 = vdwg.mxu0
        %2542 = vmatpush.xpose.msra.mxu0 0.0
        %2543 = vmatpush.xpose.msra.mxu0 0.0
        %2544 = vmatpush.xpose.msra.mxu0 0.0
        %2545 = vmatpush.xpose.msra.mxu0 0.0
        %2546 = vmatpush.xpose.msra.mxu0 0.0
        %2547 = vmatpush.xpose.msra.mxu0 0.0
        %2548 = vmatpush.xpose.msra.mxu0 0.0
        %2549 = vmatpush.xpose.msra.mxu0 0.0
        %2550 = vmatpush.xpose.msra.mxu0 0.0
        %2551 = vmatpush.xpose.msra.mxu0 0.0
        %2552 = vmatpush.xpose.msra.mxu0 0.0
        %2553 = vmatpush.xpose.msra.mxu0 0.0
        %2554 = vmatpush.xpose.msra.mxu0 0.0
        %2555 = vmatpush.xpose.msra.mxu0 0.0
        %2556 = vmatpush.xpose.msra.mxu0 %v506
        %2557 = vmatpush.xpose.msra.mxu0 %v359
        %2558 = vmatmul.f32.gmra.mxu0 %v713
        %v2559 = vpop.f32.mrf.mxu0
        %v2560 = vadd.f32 %v2540, %v2559
        %2561 = vdwg.mxu0
        %2562 = vmatpush.xpose.msra.mxu0 0.0
        %2563 = vmatpush.xpose.msra.mxu0 0.0
        %2564 = vmatpush.xpose.msra.mxu0 0.0
        %2565 = vmatpush.xpose.msra.mxu0 0.0
        %2566 = vmatpush.xpose.msra.mxu0 0.0
        %2567 = vmatpush.xpose.msra.mxu0 0.0
        %2568 = vmatpush.xpose.msra.mxu0 0.0
        %2569 = vmatpush.xpose.msra.mxu0 0.0
        %2570 = vmatpush.xpose.msra.mxu0 0.0
        %2571 = vmatpush.xpose.msra.mxu0 0.0
        %2572 = vmatpush.xpose.msra.mxu0 0.0
        %2573 = vmatpush.xpose.msra.mxu0 0.0
        %2574 = vmatpush.xpose.msra.mxu0 0.0
        %2575 = vmatpush.xpose.msra.mxu0 0.0
        %2576 = vmatpush.xpose.msra.mxu0 %v507
        %2577 = vmatpush.xpose.msra.mxu0 %v360
        %2578 = vmatmul.f32.gmra.mxu0 %v714
        %v2579 = vpop.f32.mrf.mxu0
        %v2580 = vadd.f32 %v2560, %v2579
        %2581 = vdwg.mxu0
        %2582 = vmatpush.xpose.msra.mxu0 0.0
        %2583 = vmatpush.xpose.msra.mxu0 0.0
        %2584 = vmatpush.xpose.msra.mxu0 0.0
        %2585 = vmatpush.xpose.msra.mxu0 0.0
        %2586 = vmatpush.xpose.msra.mxu0 0.0
        %2587 = vmatpush.xpose.msra.mxu0 0.0
        %2588 = vmatpush.xpose.msra.mxu0 0.0
        %2589 = vmatpush.xpose.msra.mxu0 0.0
        %2590 = vmatpush.xpose.msra.mxu0 0.0
        %2591 = vmatpush.xpose.msra.mxu0 0.0
        %2592 = vmatpush.xpose.msra.mxu0 0.0
        %2593 = vmatpush.xpose.msra.mxu0 0.0
        %2594 = vmatpush.xpose.msra.mxu0 0.0
        %2595 = vmatpush.xpose.msra.mxu0 0.0
        %2596 = vmatpush.xpose.msra.mxu0 %v508
        %2597 = vmatpush.xpose.msra.mxu0 %v361
        %2598 = vmatmul.f32.gmra.mxu0 %v715
        %v2599 = vpop.f32.mrf.mxu0
        %v2600 = vadd.f32 %v2580, %v2599
        %2601 = vdwg.mxu0
        %2602 = vmatpush.xpose.msra.mxu0 0.0
        %2603 = vmatpush.xpose.msra.mxu0 0.0
        %2604 = vmatpush.xpose.msra.mxu0 0.0
        %2605 = vmatpush.xpose.msra.mxu0 0.0
        %2606 = vmatpush.xpose.msra.mxu0 0.0
        %2607 = vmatpush.xpose.msra.mxu0 0.0
        %2608 = vmatpush.xpose.msra.mxu0 0.0
        %2609 = vmatpush.xpose.msra.mxu0 0.0
        %2610 = vmatpush.xpose.msra.mxu0 0.0
        %2611 = vmatpush.xpose.msra.mxu0 0.0
        %2612 = vmatpush.xpose.msra.mxu0 0.0
        %2613 = vmatpush.xpose.msra.mxu0 0.0
        %2614 = vmatpush.xpose.msra.mxu0 0.0
        %2615 = vmatpush.xpose.msra.mxu0 0.0
        %2616 = vmatpush.xpose.msra.mxu0 %v509
        %2617 = vmatpush.xpose.msra.mxu0 %v362
        %2618 = vmatmul.f32.gmra.mxu0 %v716
        %v2619 = vpop.f32.mrf.mxu0
        %v2620 = vadd.f32 %v2600, %v2619
        %2621 = vdwg.mxu0
        %2622 = vmatpush.xpose.msra.mxu0 0.0
        %2623 = vmatpush.xpose.msra.mxu0 0.0
        %2624 = vmatpush.xpose.msra.mxu0 0.0
        %2625 = vmatpush.xpose.msra.mxu0 0.0
        %2626 = vmatpush.xpose.msra.mxu0 0.0
        %2627 = vmatpush.xpose.msra.mxu0 0.0
        %2628 = vmatpush.xpose.msra.mxu0 0.0
        %2629 = vmatpush.xpose.msra.mxu0 0.0
        %2630 = vmatpush.xpose.msra.mxu0 0.0
        %2631 = vmatpush.xpose.msra.mxu0 0.0
        %2632 = vmatpush.xpose.msra.mxu0 0.0
        %2633 = vmatpush.xpose.msra.mxu0 0.0
        %2634 = vmatpush.xpose.msra.mxu0 0.0
        %2635 = vmatpush.xpose.msra.mxu0 0.0
        %2636 = vmatpush.xpose.msra.mxu0 %v510
        %2637 = vmatpush.xpose.msra.mxu0 %v363
        %2638 = vmatmul.f32.gmra.mxu0 %v717
        %v2639 = vpop.f32.mrf.mxu0
        %v2640 = vadd.f32 %v2620, %v2639
        %2641 = vdwg.mxu0
        %2642 = vmatpush.xpose.msra.mxu0 0.0
        %2643 = vmatpush.xpose.msra.mxu0 0.0
        %2644 = vmatpush.xpose.msra.mxu0 0.0
        %2645 = vmatpush.xpose.msra.mxu0 0.0
        %2646 = vmatpush.xpose.msra.mxu0 0.0
        %2647 = vmatpush.xpose.msra.mxu0 0.0
        %2648 = vmatpush.xpose.msra.mxu0 0.0
        %2649 = vmatpush.xpose.msra.mxu0 0.0
        %2650 = vmatpush.xpose.msra.mxu0 0.0
        %2651 = vmatpush.xpose.msra.mxu0 0.0
        %2652 = vmatpush.xpose.msra.mxu0 0.0
        %2653 = vmatpush.xpose.msra.mxu0 0.0
        %2654 = vmatpush.xpose.msra.mxu0 0.0
        %2655 = vmatpush.xpose.msra.mxu0 0.0
        %2656 = vmatpush.xpose.msra.mxu0 %v511
        %2657 = vmatpush.xpose.msra.mxu0 %v364
        %2658 = vmatmul.f32.gmra.mxu0 %v718
        %v2659 = vpop.f32.mrf.mxu0
        %v2660 = vadd.f32 %v2640, %v2659
        %2661 = vdwg.mxu0
        %2662 = vmatpush.xpose.msra.mxu0 0.0
        %2663 = vmatpush.xpose.msra.mxu0 0.0
        %2664 = vmatpush.xpose.msra.mxu0 0.0
        %2665 = vmatpush.xpose.msra.mxu0 0.0
        %2666 = vmatpush.xpose.msra.mxu0 0.0
        %2667 = vmatpush.xpose.msra.mxu0 0.0
        %2668 = vmatpush.xpose.msra.mxu0 0.0
        %2669 = vmatpush.xpose.msra.mxu0 0.0
        %2670 = vmatpush.xpose.msra.mxu0 0.0
        %2671 = vmatpush.xpose.msra.mxu0 0.0
        %2672 = vmatpush.xpose.msra.mxu0 0.0
        %2673 = vmatpush.xpose.msra.mxu0 0.0
        %2674 = vmatpush.xpose.msra.mxu0 0.0
        %2675 = vmatpush.xpose.msra.mxu0 0.0
        %2676 = vmatpush.xpose.msra.mxu0 %v512
        %2677 = vmatpush.xpose.msra.mxu0 %v365
        %2678 = vmatmul.f32.gmra.mxu0 %v719
        %v2679 = vpop.f32.mrf.mxu0
        %v2680 = vadd.f32 %v2660, %v2679
        %2681 = vdwg.mxu0
        %2682 = vmatpush.xpose.msra.mxu0 0.0
        %2683 = vmatpush.xpose.msra.mxu0 0.0
        %2684 = vmatpush.xpose.msra.mxu0 0.0
        %2685 = vmatpush.xpose.msra.mxu0 0.0
        %2686 = vmatpush.xpose.msra.mxu0 0.0
        %2687 = vmatpush.xpose.msra.mxu0 0.0
        %2688 = vmatpush.xpose.msra.mxu0 0.0
        %2689 = vmatpush.xpose.msra.mxu0 0.0
        %2690 = vmatpush.xpose.msra.mxu0 0.0
        %2691 = vmatpush.xpose.msra.mxu0 0.0
        %2692 = vmatpush.xpose.msra.mxu0 0.0
        %2693 = vmatpush.xpose.msra.mxu0 0.0
        %2694 = vmatpush.xpose.msra.mxu0 0.0
        %2695 = vmatpush.xpose.msra.mxu0 0.0
        %2696 = vmatpush.xpose.msra.mxu0 %v513
        %2697 = vmatpush.xpose.msra.mxu0 %v366
        %2698 = vmatmul.f32.gmra.mxu0 %v720
        %v2699 = vpop.f32.mrf.mxu0
        %v2700 = vadd.f32 %v2680, %v2699
        %2701 = vdwg.mxu0
        %2702 = vmatpush.xpose.msra.mxu0 0.0
        %2703 = vmatpush.xpose.msra.mxu0 0.0
        %2704 = vmatpush.xpose.msra.mxu0 0.0
        %2705 = vmatpush.xpose.msra.mxu0 0.0
        %2706 = vmatpush.xpose.msra.mxu0 0.0
        %2707 = vmatpush.xpose.msra.mxu0 0.0
        %2708 = vmatpush.xpose.msra.mxu0 0.0
        %2709 = vmatpush.xpose.msra.mxu0 0.0
        %2710 = vmatpush.xpose.msra.mxu0 0.0
        %2711 = vmatpush.xpose.msra.mxu0 0.0
        %2712 = vmatpush.xpose.msra.mxu0 0.0
        %2713 = vmatpush.xpose.msra.mxu0 0.0
        %2714 = vmatpush.xpose.msra.mxu0 0.0
        %2715 = vmatpush.xpose.msra.mxu0 0.0
        %2716 = vmatpush.xpose.msra.mxu0 %v514
        %2717 = vmatpush.xpose.msra.mxu0 %v367
        %2718 = vmatmul.f32.gmra.mxu0 %v723
        %v2719 = vpop.f32.mrf.mxu0
        %v2720 = vadd.f32 %v2700, %v2719
        %2721 = vdwg.mxu0
        %2722 = vmatpush.xpose.msra.mxu0 0.0
        %2723 = vmatpush.xpose.msra.mxu0 0.0
        %2724 = vmatpush.xpose.msra.mxu0 0.0
        %2725 = vmatpush.xpose.msra.mxu0 0.0
        %2726 = vmatpush.xpose.msra.mxu0 0.0
        %2727 = vmatpush.xpose.msra.mxu0 0.0
        %2728 = vmatpush.xpose.msra.mxu0 0.0
        %2729 = vmatpush.xpose.msra.mxu0 0.0
        %2730 = vmatpush.xpose.msra.mxu0 0.0
        %2731 = vmatpush.xpose.msra.mxu0 0.0
        %2732 = vmatpush.xpose.msra.mxu0 0.0
        %2733 = vmatpush.xpose.msra.mxu0 0.0
        %2734 = vmatpush.xpose.msra.mxu0 0.0
        %2735 = vmatpush.xpose.msra.mxu0 0.0
        %2736 = vmatpush.xpose.msra.mxu0 %v515
        %2737 = vmatpush.xpose.msra.mxu0 %v368
        %2738 = vmatmul.f32.gmra.mxu0 %v724
        %v2739 = vpop.f32.mrf.mxu0
        %v2740 = vadd.f32 %v2720, %v2739
        %2741 = vdwg.mxu0
        %2742 = vmatpush.xpose.msra.mxu0 0.0
        %2743 = vmatpush.xpose.msra.mxu0 0.0
        %2744 = vmatpush.xpose.msra.mxu0 0.0
        %2745 = vmatpush.xpose.msra.mxu0 0.0
        %2746 = vmatpush.xpose.msra.mxu0 0.0
        %2747 = vmatpush.xpose.msra.mxu0 0.0
        %2748 = vmatpush.xpose.msra.mxu0 0.0
        %2749 = vmatpush.xpose.msra.mxu0 0.0
        %2750 = vmatpush.xpose.msra.mxu0 0.0
        %2751 = vmatpush.xpose.msra.mxu0 0.0
        %2752 = vmatpush.xpose.msra.mxu0 0.0
        %2753 = vmatpush.xpose.msra.mxu0 0.0
        %2754 = vmatpush.xpose.msra.mxu0 0.0
        %2755 = vmatpush.xpose.msra.mxu0 0.0
        %2756 = vmatpush.xpose.msra.mxu0 %v516
        %2757 = vmatpush.xpose.msra.mxu0 %v369
        %2758 = vmatmul.f32.gmra.mxu0 %v725
        %v2759 = vpop.f32.mrf.mxu0
        %v2760 = vadd.f32 %v2740, %v2759
        %2761 = vdwg.mxu0
        %2762 = vmatpush.xpose.msra.mxu0 0.0
        %2763 = vmatpush.xpose.msra.mxu0 0.0
        %2764 = vmatpush.xpose.msra.mxu0 0.0
        %2765 = vmatpush.xpose.msra.mxu0 0.0
        %2766 = vmatpush.xpose.msra.mxu0 0.0
        %2767 = vmatpush.xpose.msra.mxu0 0.0
        %2768 = vmatpush.xpose.msra.mxu0 0.0
        %2769 = vmatpush.xpose.msra.mxu0 0.0
        %2770 = vmatpush.xpose.msra.mxu0 0.0
        %2771 = vmatpush.xpose.msra.mxu0 0.0
        %2772 = vmatpush.xpose.msra.mxu0 0.0
        %2773 = vmatpush.xpose.msra.mxu0 0.0
        %2774 = vmatpush.xpose.msra.mxu0 0.0
        %2775 = vmatpush.xpose.msra.mxu0 0.0
        %2776 = vmatpush.xpose.msra.mxu0 %v517
        %2777 = vmatpush.xpose.msra.mxu0 %v370
        %2778 = vmatmul.f32.gmra.mxu0 %v726
        %v2779 = vpop.f32.mrf.mxu0
        %v2780 = vadd.f32 %v2760, %v2779
        %2781 = vdwg.mxu0
        %2782 = vmatpush.xpose.msra.mxu0 0.0
        %2783 = vmatpush.xpose.msra.mxu0 0.0
        %2784 = vmatpush.xpose.msra.mxu0 0.0
        %2785 = vmatpush.xpose.msra.mxu0 0.0
        %2786 = vmatpush.xpose.msra.mxu0 0.0
        %2787 = vmatpush.xpose.msra.mxu0 0.0
        %2788 = vmatpush.xpose.msra.mxu0 0.0
        %2789 = vmatpush.xpose.msra.mxu0 0.0
        %2790 = vmatpush.xpose.msra.mxu0 0.0
        %2791 = vmatpush.xpose.msra.mxu0 0.0
        %2792 = vmatpush.xpose.msra.mxu0 0.0
        %2793 = vmatpush.xpose.msra.mxu0 0.0
        %2794 = vmatpush.xpose.msra.mxu0 0.0
        %2795 = vmatpush.xpose.msra.mxu0 0.0
        %2796 = vmatpush.xpose.msra.mxu0 %v518
        %2797 = vmatpush.xpose.msra.mxu0 %v371
        %2798 = vmatmul.f32.gmra.mxu0 %v727
        %v2799 = vpop.f32.mrf.mxu0
        %v2800 = vadd.f32 %v2780, %v2799
        %2801 = vdwg.mxu0
        %2802 = vmatpush.xpose.msra.mxu0 0.0
        %2803 = vmatpush.xpose.msra.mxu0 0.0
        %2804 = vmatpush.xpose.msra.mxu0 0.0
        %2805 = vmatpush.xpose.msra.mxu0 0.0
        %2806 = vmatpush.xpose.msra.mxu0 0.0
        %2807 = vmatpush.xpose.msra.mxu0 0.0
        %2808 = vmatpush.xpose.msra.mxu0 0.0
        %2809 = vmatpush.xpose.msra.mxu0 0.0
        %2810 = vmatpush.xpose.msra.mxu0 0.0
        %2811 = vmatpush.xpose.msra.mxu0 0.0
        %2812 = vmatpush.xpose.msra.mxu0 0.0
        %2813 = vmatpush.xpose.msra.mxu0 0.0
        %2814 = vmatpush.xpose.msra.mxu0 0.0
        %2815 = vmatpush.xpose.msra.mxu0 0.0
        %2816 = vmatpush.xpose.msra.mxu0 %v519
        %2817 = vmatpush.xpose.msra.mxu0 %v372
        %2818 = vmatmul.f32.gmra.mxu0 %v728
        %v2819 = vpop.f32.mrf.mxu0
        %v2820 = vadd.f32 %v2800, %v2819
        %2821 = vdwg.mxu0
        %2822 = vmatpush.xpose.msra.mxu0 0.0
        %2823 = vmatpush.xpose.msra.mxu0 0.0
        %2824 = vmatpush.xpose.msra.mxu0 0.0
        %2825 = vmatpush.xpose.msra.mxu0 0.0
        %2826 = vmatpush.xpose.msra.mxu0 0.0
        %2827 = vmatpush.xpose.msra.mxu0 0.0
        %2828 = vmatpush.xpose.msra.mxu0 0.0
        %2829 = vmatpush.xpose.msra.mxu0 0.0
        %2830 = vmatpush.xpose.msra.mxu0 0.0
        %2831 = vmatpush.xpose.msra.mxu0 0.0
        %2832 = vmatpush.xpose.msra.mxu0 0.0
        %2833 = vmatpush.xpose.msra.mxu0 0.0
        %2834 = vmatpush.xpose.msra.mxu0 0.0
        %2835 = vmatpush.xpose.msra.mxu0 0.0
        %2836 = vmatpush.xpose.msra.mxu0 %v520
        %2837 = vmatpush.xpose.msra.mxu0 %v373
        %2838 = vmatmul.f32.gmra.mxu0 %v729
        %v2839 = vpop.f32.mrf.mxu0
        %v2840 = vadd.f32 %v2820, %v2839
        %2841 = vdwg.mxu0
        %2842 = vmatpush.xpose.msra.mxu0 0.0
        %2843 = vmatpush.xpose.msra.mxu0 0.0
        %2844 = vmatpush.xpose.msra.mxu0 0.0
        %2845 = vmatpush.xpose.msra.mxu0 0.0
        %2846 = vmatpush.xpose.msra.mxu0 0.0
        %2847 = vmatpush.xpose.msra.mxu0 0.0
        %2848 = vmatpush.xpose.msra.mxu0 0.0
        %2849 = vmatpush.xpose.msra.mxu0 0.0
        %2850 = vmatpush.xpose.msra.mxu0 0.0
        %2851 = vmatpush.xpose.msra.mxu0 0.0
        %2852 = vmatpush.xpose.msra.mxu0 0.0
        %2853 = vmatpush.xpose.msra.mxu0 0.0
        %2854 = vmatpush.xpose.msra.mxu0 0.0
        %2855 = vmatpush.xpose.msra.mxu0 0.0
        %2856 = vmatpush.xpose.msra.mxu0 %v521
        %2857 = vmatpush.xpose.msra.mxu0 %v374
        %2858 = vmatmul.f32.gmra.mxu0 %v730
        %v2859 = vpop.f32.mrf.mxu0
        %v2860 = vadd.f32 %v2840, %v2859
        %2861 = vdwg.mxu0
        %2862 = vmatpush.xpose.msra.mxu0 0.0
        %2863 = vmatpush.xpose.msra.mxu0 0.0
        %2864 = vmatpush.xpose.msra.mxu0 0.0
        %2865 = vmatpush.xpose.msra.mxu0 0.0
        %2866 = vmatpush.xpose.msra.mxu0 0.0
        %2867 = vmatpush.xpose.msra.mxu0 0.0
        %2868 = vmatpush.xpose.msra.mxu0 0.0
        %2869 = vmatpush.xpose.msra.mxu0 0.0
        %2870 = vmatpush.xpose.msra.mxu0 0.0
        %2871 = vmatpush.xpose.msra.mxu0 0.0
        %2872 = vmatpush.xpose.msra.mxu0 0.0
        %2873 = vmatpush.xpose.msra.mxu0 0.0
        %2874 = vmatpush.xpose.msra.mxu0 0.0
        %2875 = vmatpush.xpose.msra.mxu0 0.0
        %2876 = vmatpush.xpose.msra.mxu0 %v522
        %2877 = vmatpush.xpose.msra.mxu0 %v375
        %2878 = vmatmul.f32.gmra.mxu0 %v733
        %v2879 = vpop.f32.mrf.mxu0
        %v2880 = vadd.f32 %v2860, %v2879
        %2881 = vdwg.mxu0
        %2882 = vmatpush.xpose.msra.mxu0 0.0
        %2883 = vmatpush.xpose.msra.mxu0 0.0
        %2884 = vmatpush.xpose.msra.mxu0 0.0
        %2885 = vmatpush.xpose.msra.mxu0 0.0
        %2886 = vmatpush.xpose.msra.mxu0 0.0
        %2887 = vmatpush.xpose.msra.mxu0 0.0
        %2888 = vmatpush.xpose.msra.mxu0 0.0
        %2889 = vmatpush.xpose.msra.mxu0 0.0
        %2890 = vmatpush.xpose.msra.mxu0 0.0
        %2891 = vmatpush.xpose.msra.mxu0 0.0
        %2892 = vmatpush.xpose.msra.mxu0 0.0
        %2893 = vmatpush.xpose.msra.mxu0 0.0
        %2894 = vmatpush.xpose.msra.mxu0 0.0
        %2895 = vmatpush.xpose.msra.mxu0 0.0
        %2896 = vmatpush.xpose.msra.mxu0 %v523
        %2897 = vmatpush.xpose.msra.mxu0 %v376
        %2898 = vmatmul.f32.gmra.mxu0 %v734
        %v2899 = vpop.f32.mrf.mxu0
        %v2900 = vadd.f32 %v2880, %v2899
        %2901 = vdwg.mxu0
        %2902 = vmatpush.xpose.msra.mxu0 0.0
        %2903 = vmatpush.xpose.msra.mxu0 0.0
        %2904 = vmatpush.xpose.msra.mxu0 0.0
        %2905 = vmatpush.xpose.msra.mxu0 0.0
        %2906 = vmatpush.xpose.msra.mxu0 0.0
        %2907 = vmatpush.xpose.msra.mxu0 0.0
        %2908 = vmatpush.xpose.msra.mxu0 0.0
        %2909 = vmatpush.xpose.msra.mxu0 0.0
        %2910 = vmatpush.xpose.msra.mxu0 0.0
        %2911 = vmatpush.xpose.msra.mxu0 0.0
        %2912 = vmatpush.xpose.msra.mxu0 0.0
        %2913 = vmatpush.xpose.msra.mxu0 0.0
        %2914 = vmatpush.xpose.msra.mxu0 0.0
        %2915 = vmatpush.xpose.msra.mxu0 0.0
        %2916 = vmatpush.xpose.msra.mxu0 %v524
        %2917 = vmatpush.xpose.msra.mxu0 %v377
        %2918 = vmatmul.f32.gmra.mxu0 %v735
        %v2919 = vpop.f32.mrf.mxu0
        %v2920 = vadd.f32 %v2900, %v2919
        %2921 = vdwg.mxu0
        %2922 = vmatpush.xpose.msra.mxu0 0.0
        %2923 = vmatpush.xpose.msra.mxu0 0.0
        %2924 = vmatpush.xpose.msra.mxu0 0.0
        %2925 = vmatpush.xpose.msra.mxu0 0.0
        %2926 = vmatpush.xpose.msra.mxu0 0.0
        %2927 = vmatpush.xpose.msra.mxu0 0.0
        %2928 = vmatpush.xpose.msra.mxu0 0.0
        %2929 = vmatpush.xpose.msra.mxu0 0.0
        %2930 = vmatpush.xpose.msra.mxu0 0.0
        %2931 = vmatpush.xpose.msra.mxu0 0.0
        %2932 = vmatpush.xpose.msra.mxu0 0.0
        %2933 = vmatpush.xpose.msra.mxu0 0.0
        %2934 = vmatpush.xpose.msra.mxu0 0.0
        %2935 = vmatpush.xpose.msra.mxu0 0.0
        %2936 = vmatpush.xpose.msra.mxu0 %v525
        %2937 = vmatpush.xpose.msra.mxu0 %v378
        %2938 = vmatmul.f32.gmra.mxu0 %v736
        %v2939 = vpop.f32.mrf.mxu0
        %v2940 = vadd.f32 %v2920, %v2939
        %2941 = vdwg.mxu0
        %2942 = vmatpush.xpose.msra.mxu0 0.0
        %2943 = vmatpush.xpose.msra.mxu0 0.0
        %2944 = vmatpush.xpose.msra.mxu0 0.0
        %2945 = vmatpush.xpose.msra.mxu0 0.0
        %2946 = vmatpush.xpose.msra.mxu0 0.0
        %2947 = vmatpush.xpose.msra.mxu0 0.0
        %2948 = vmatpush.xpose.msra.mxu0 0.0
        %2949 = vmatpush.xpose.msra.mxu0 0.0
        %2950 = vmatpush.xpose.msra.mxu0 0.0
        %2951 = vmatpush.xpose.msra.mxu0 0.0
        %2952 = vmatpush.xpose.msra.mxu0 0.0
        %2953 = vmatpush.xpose.msra.mxu0 0.0
        %2954 = vmatpush.xpose.msra.mxu0 0.0
        %2955 = vmatpush.xpose.msra.mxu0 0.0
        %2956 = vmatpush.xpose.msra.mxu0 %v526
        %2957 = vmatpush.xpose.msra.mxu0 %v379
        %2958 = vmatmul.f32.gmra.mxu0 %v737
        %v2959 = vpop.f32.mrf.mxu0
        %v2960 = vadd.f32 %v2940, %v2959
        %2961 = vdwg.mxu0
        %2962 = vmatpush.xpose.msra.mxu0 0.0
        %2963 = vmatpush.xpose.msra.mxu0 0.0
        %2964 = vmatpush.xpose.msra.mxu0 0.0
        %2965 = vmatpush.xpose.msra.mxu0 0.0
        %2966 = vmatpush.xpose.msra.mxu0 0.0
        %2967 = vmatpush.xpose.msra.mxu0 0.0
        %2968 = vmatpush.xpose.msra.mxu0 0.0
        %2969 = vmatpush.xpose.msra.mxu0 0.0
        %2970 = vmatpush.xpose.msra.mxu0 0.0
        %2971 = vmatpush.xpose.msra.mxu0 0.0
        %2972 = vmatpush.xpose.msra.mxu0 0.0
        %2973 = vmatpush.xpose.msra.mxu0 0.0
        %2974 = vmatpush.xpose.msra.mxu0 0.0
        %2975 = vmatpush.xpose.msra.mxu0 0.0
        %2976 = vmatpush.xpose.msra.mxu0 %v527
        %2977 = vmatpush.xpose.msra.mxu0 %v380
        %2978 = vmatmul.f32.gmra.mxu0 %v738
        %v2979 = vpop.f32.mrf.mxu0
        %v2980 = vadd.f32 %v2960, %v2979
        %2981 = vdwg.mxu0
        %2982 = vmatpush.xpose.msra.mxu0 0.0
        %2983 = vmatpush.xpose.msra.mxu0 0.0
        %2984 = vmatpush.xpose.msra.mxu0 0.0
        %2985 = vmatpush.xpose.msra.mxu0 0.0
        %2986 = vmatpush.xpose.msra.mxu0 0.0
        %2987 = vmatpush.xpose.msra.mxu0 0.0
        %2988 = vmatpush.xpose.msra.mxu0 0.0
        %2989 = vmatpush.xpose.msra.mxu0 0.0
        %2990 = vmatpush.xpose.msra.mxu0 0.0
        %2991 = vmatpush.xpose.msra.mxu0 0.0
        %2992 = vmatpush.xpose.msra.mxu0 0.0
        %2993 = vmatpush.xpose.msra.mxu0 0.0
        %2994 = vmatpush.xpose.msra.mxu0 0.0
        %2995 = vmatpush.xpose.msra.mxu0 0.0
        %2996 = vmatpush.xpose.msra.mxu0 %v528
        %2997 = vmatpush.xpose.msra.mxu0 %v381
        %2998 = vmatmul.f32.gmra.mxu0 %v739
        %v2999 = vpop.f32.mrf.mxu0
        %v3000 = vadd.f32 %v2980, %v2999
        %3001 = vdwg.mxu0
        %3002 = vmatpush.xpose.msra.mxu0 0.0
        %3003 = vmatpush.xpose.msra.mxu0 0.0
        %3004 = vmatpush.xpose.msra.mxu0 0.0
        %3005 = vmatpush.xpose.msra.mxu0 0.0
        %3006 = vmatpush.xpose.msra.mxu0 0.0
        %3007 = vmatpush.xpose.msra.mxu0 0.0
        %3008 = vmatpush.xpose.msra.mxu0 0.0
        %3009 = vmatpush.xpose.msra.mxu0 0.0
        %3010 = vmatpush.xpose.msra.mxu0 0.0
        %3011 = vmatpush.xpose.msra.mxu0 0.0
        %3012 = vmatpush.xpose.msra.mxu0 0.0
        %3013 = vmatpush.xpose.msra.mxu0 0.0
        %3014 = vmatpush.xpose.msra.mxu0 0.0
        %3015 = vmatpush.xpose.msra.mxu0 0.0
        %3016 = vmatpush.xpose.msra.mxu0 %v529
        %3017 = vmatpush.xpose.msra.mxu0 %v382
        %3018 = vmatmul.f32.gmra.mxu0 %v740
        %v3019 = vpop.f32.mrf.mxu0
        %v3020 = vadd.f32 %v3000, %v3019
        %3021 = vdwg.mxu0
        %3022 = vmatpush.xpose.msra.mxu0 0.0
        %3023 = vmatpush.xpose.msra.mxu0 0.0
        %3024 = vmatpush.xpose.msra.mxu0 0.0
        %3025 = vmatpush.xpose.msra.mxu0 0.0
        %3026 = vmatpush.xpose.msra.mxu0 0.0
        %3027 = vmatpush.xpose.msra.mxu0 0.0
        %3028 = vmatpush.xpose.msra.mxu0 0.0
        %3029 = vmatpush.xpose.msra.mxu0 0.0
        %3030 = vmatpush.xpose.msra.mxu0 0.0
        %3031 = vmatpush.xpose.msra.mxu0 0.0
        %3032 = vmatpush.xpose.msra.mxu0 0.0
        %3033 = vmatpush.xpose.msra.mxu0 0.0
        %3034 = vmatpush.xpose.msra.mxu0 0.0
        %3035 = vmatpush.xpose.msra.mxu0 0.0
        %3036 = vmatpush.xpose.msra.mxu0 %v530
        %3037 = vmatpush.xpose.msra.mxu0 %v383
        %3038 = vmatmul.f32.gmra.mxu0 %v743
        %v3039 = vpop.f32.mrf.mxu0
        %v3040 = vadd.f32 %v3020, %v3039
        %3041 = vdwg.mxu0
        %3042 = vmatpush.xpose.msra.mxu0 0.0
        %3043 = vmatpush.xpose.msra.mxu0 0.0
        %3044 = vmatpush.xpose.msra.mxu0 0.0
        %3045 = vmatpush.xpose.msra.mxu0 0.0
        %3046 = vmatpush.xpose.msra.mxu0 0.0
        %3047 = vmatpush.xpose.msra.mxu0 0.0
        %3048 = vmatpush.xpose.msra.mxu0 0.0
        %3049 = vmatpush.xpose.msra.mxu0 0.0
        %3050 = vmatpush.xpose.msra.mxu0 0.0
        %3051 = vmatpush.xpose.msra.mxu0 0.0
        %3052 = vmatpush.xpose.msra.mxu0 0.0
        %3053 = vmatpush.xpose.msra.mxu0 0.0
        %3054 = vmatpush.xpose.msra.mxu0 0.0
        %3055 = vmatpush.xpose.msra.mxu0 0.0
        %3056 = vmatpush.xpose.msra.mxu0 %v531
        %3057 = vmatpush.xpose.msra.mxu0 %v384
        %3058 = vmatmul.f32.gmra.mxu0 %v744
        %v3059 = vpop.f32.mrf.mxu0
        %v3060 = vadd.f32 %v3040, %v3059
        %3061 = vdwg.mxu0
        %3062 = vmatpush.xpose.msra.mxu0 0.0
        %3063 = vmatpush.xpose.msra.mxu0 0.0
        %3064 = vmatpush.xpose.msra.mxu0 0.0
        %3065 = vmatpush.xpose.msra.mxu0 0.0
        %3066 = vmatpush.xpose.msra.mxu0 0.0
        %3067 = vmatpush.xpose.msra.mxu0 0.0
        %3068 = vmatpush.xpose.msra.mxu0 0.0
        %3069 = vmatpush.xpose.msra.mxu0 0.0
        %3070 = vmatpush.xpose.msra.mxu0 0.0
        %3071 = vmatpush.xpose.msra.mxu0 0.0
        %3072 = vmatpush.xpose.msra.mxu0 0.0
        %3073 = vmatpush.xpose.msra.mxu0 0.0
        %3074 = vmatpush.xpose.msra.mxu0 0.0
        %3075 = vmatpush.xpose.msra.mxu0 0.0
        %3076 = vmatpush.xpose.msra.mxu0 %v532
        %3077 = vmatpush.xpose.msra.mxu0 %v385
        %3078 = vmatmul.f32.gmra.mxu0 %v745
        %v3079 = vpop.f32.mrf.mxu0
        %v3080 = vadd.f32 %v3060, %v3079
        %3081 = vdwg.mxu0
        %3082 = vmatpush.xpose.msra.mxu0 0.0
        %3083 = vmatpush.xpose.msra.mxu0 0.0
        %3084 = vmatpush.xpose.msra.mxu0 0.0
        %3085 = vmatpush.xpose.msra.mxu0 0.0
        %3086 = vmatpush.xpose.msra.mxu0 0.0
        %3087 = vmatpush.xpose.msra.mxu0 0.0
        %3088 = vmatpush.xpose.msra.mxu0 0.0
        %3089 = vmatpush.xpose.msra.mxu0 0.0
        %3090 = vmatpush.xpose.msra.mxu0 0.0
        %3091 = vmatpush.xpose.msra.mxu0 0.0
        %3092 = vmatpush.xpose.msra.mxu0 0.0
        %3093 = vmatpush.xpose.msra.mxu0 0.0
        %3094 = vmatpush.xpose.msra.mxu0 0.0
        %3095 = vmatpush.xpose.msra.mxu0 0.0
        %3096 = vmatpush.xpose.msra.mxu0 %v533
        %3097 = vmatpush.xpose.msra.mxu0 %v386
        %3098 = vmatmul.f32.gmra.mxu0 %v746
        %v3099 = vpop.f32.mrf.mxu0
        %v3100 = vadd.f32 %v3080, %v3099
        %3101 = vdwg.mxu0
        %3102 = vmatpush.xpose.msra.mxu0 0.0
        %3103 = vmatpush.xpose.msra.mxu0 0.0
        %3104 = vmatpush.xpose.msra.mxu0 0.0
        %3105 = vmatpush.xpose.msra.mxu0 0.0
        %3106 = vmatpush.xpose.msra.mxu0 0.0
        %3107 = vmatpush.xpose.msra.mxu0 0.0
        %3108 = vmatpush.xpose.msra.mxu0 0.0
        %3109 = vmatpush.xpose.msra.mxu0 0.0
        %3110 = vmatpush.xpose.msra.mxu0 0.0
        %3111 = vmatpush.xpose.msra.mxu0 0.0
        %3112 = vmatpush.xpose.msra.mxu0 0.0
        %3113 = vmatpush.xpose.msra.mxu0 0.0
        %3114 = vmatpush.xpose.msra.mxu0 0.0
        %3115 = vmatpush.xpose.msra.mxu0 0.0
        %3116 = vmatpush.xpose.msra.mxu0 %v534
        %3117 = vmatpush.xpose.msra.mxu0 %v387
        %3118 = vmatmul.f32.gmra.mxu0 %v747
        %v3119 = vpop.f32.mrf.mxu0
        %v3120 = vadd.f32 %v3100, %v3119
        %3121 = vdwg.mxu0
        %3122 = vmatpush.xpose.msra.mxu0 0.0
        %3123 = vmatpush.xpose.msra.mxu0 0.0
        %3124 = vmatpush.xpose.msra.mxu0 0.0
        %3125 = vmatpush.xpose.msra.mxu0 0.0
        %3126 = vmatpush.xpose.msra.mxu0 0.0
        %3127 = vmatpush.xpose.msra.mxu0 0.0
        %3128 = vmatpush.xpose.msra.mxu0 0.0
        %3129 = vmatpush.xpose.msra.mxu0 0.0
        %3130 = vmatpush.xpose.msra.mxu0 0.0
        %3131 = vmatpush.xpose.msra.mxu0 0.0
        %3132 = vmatpush.xpose.msra.mxu0 0.0
        %3133 = vmatpush.xpose.msra.mxu0 0.0
        %3134 = vmatpush.xpose.msra.mxu0 0.0
        %3135 = vmatpush.xpose.msra.mxu0 0.0
        %3136 = vmatpush.xpose.msra.mxu0 %v535
        %3137 = vmatpush.xpose.msra.mxu0 %v388
        %3138 = vmatmul.f32.gmra.mxu0 %v748
        %v3139 = vpop.f32.mrf.mxu0
        %v3140 = vadd.f32 %v3120, %v3139
        %3141 = vdwg.mxu0
        %3142 = vmatpush.xpose.msra.mxu0 0.0
        %3143 = vmatpush.xpose.msra.mxu0 0.0
        %3144 = vmatpush.xpose.msra.mxu0 0.0
        %3145 = vmatpush.xpose.msra.mxu0 0.0
        %3146 = vmatpush.xpose.msra.mxu0 0.0
        %3147 = vmatpush.xpose.msra.mxu0 0.0
        %3148 = vmatpush.xpose.msra.mxu0 0.0
        %3149 = vmatpush.xpose.msra.mxu0 0.0
        %3150 = vmatpush.xpose.msra.mxu0 0.0
        %3151 = vmatpush.xpose.msra.mxu0 0.0
        %3152 = vmatpush.xpose.msra.mxu0 0.0
        %3153 = vmatpush.xpose.msra.mxu0 0.0
        %3154 = vmatpush.xpose.msra.mxu0 0.0
        %3155 = vmatpush.xpose.msra.mxu0 0.0
        %3156 = vmatpush.xpose.msra.mxu0 %v536
        %3157 = vmatpush.xpose.msra.mxu0 %v389
        %3158 = vmatmul.f32.gmra.mxu0 %v749
        %v3159 = vpop.f32.mrf.mxu0
        %v3160 = vadd.f32 %v3140, %v3159
        %3161 = vdwg.mxu0
        %3162 = vmatpush.xpose.msra.mxu0 0.0
        %3163 = vmatpush.xpose.msra.mxu0 0.0
        %3164 = vmatpush.xpose.msra.mxu0 0.0
        %3165 = vmatpush.xpose.msra.mxu0 0.0
        %3166 = vmatpush.xpose.msra.mxu0 0.0
        %3167 = vmatpush.xpose.msra.mxu0 0.0
        %3168 = vmatpush.xpose.msra.mxu0 0.0
        %3169 = vmatpush.xpose.msra.mxu0 0.0
        %3170 = vmatpush.xpose.msra.mxu0 0.0
        %3171 = vmatpush.xpose.msra.mxu0 0.0
        %3172 = vmatpush.xpose.msra.mxu0 0.0
        %3173 = vmatpush.xpose.msra.mxu0 0.0
        %3174 = vmatpush.xpose.msra.mxu0 0.0
        %3175 = vmatpush.xpose.msra.mxu0 0.0
        %3176 = vmatpush.xpose.msra.mxu0 %v537
        %3177 = vmatpush.xpose.msra.mxu0 %v390
        %3178 = vmatmul.f32.gmra.mxu0 %v750
        %v3179 = vpop.f32.mrf.mxu0
        %v3180 = vadd.f32 %v3160, %v3179
        %3181 = vdwg.mxu0
        %3182 = vmatpush.xpose.msra.mxu0 0.0
        %3183 = vmatpush.xpose.msra.mxu0 0.0
        %3184 = vmatpush.xpose.msra.mxu0 0.0
        %3185 = vmatpush.xpose.msra.mxu0 0.0
        %3186 = vmatpush.xpose.msra.mxu0 0.0
        %3187 = vmatpush.xpose.msra.mxu0 0.0
        %3188 = vmatpush.xpose.msra.mxu0 0.0
        %3189 = vmatpush.xpose.msra.mxu0 0.0
        %3190 = vmatpush.xpose.msra.mxu0 0.0
        %3191 = vmatpush.xpose.msra.mxu0 0.0
        %3192 = vmatpush.xpose.msra.mxu0 0.0
        %3193 = vmatpush.xpose.msra.mxu0 0.0
        %3194 = vmatpush.xpose.msra.mxu0 0.0
        %3195 = vmatpush.xpose.msra.mxu0 0.0
        %3196 = vmatpush.xpose.msra.mxu0 %v538
        %3197 = vmatpush.xpose.msra.mxu0 %v391
        %3198 = vmatmul.f32.gmra.mxu0 %v753
        %v3199 = vpop.f32.mrf.mxu0
        %v3200 = vadd.f32 %v3180, %v3199
        %3201 = vdwg.mxu0
        %3202 = vmatpush.xpose.msra.mxu0 0.0
        %3203 = vmatpush.xpose.msra.mxu0 0.0
        %3204 = vmatpush.xpose.msra.mxu0 0.0
        %3205 = vmatpush.xpose.msra.mxu0 0.0
        %3206 = vmatpush.xpose.msra.mxu0 0.0
        %3207 = vmatpush.xpose.msra.mxu0 0.0
        %3208 = vmatpush.xpose.msra.mxu0 0.0
        %3209 = vmatpush.xpose.msra.mxu0 0.0
        %3210 = vmatpush.xpose.msra.mxu0 0.0
        %3211 = vmatpush.xpose.msra.mxu0 0.0
        %3212 = vmatpush.xpose.msra.mxu0 0.0
        %3213 = vmatpush.xpose.msra.mxu0 0.0
        %3214 = vmatpush.xpose.msra.mxu0 0.0
        %3215 = vmatpush.xpose.msra.mxu0 0.0
        %3216 = vmatpush.xpose.msra.mxu0 %v539
        %3217 = vmatpush.xpose.msra.mxu0 %v392
        %3218 = vmatmul.f32.gmra.mxu0 %v754
        %v3219 = vpop.f32.mrf.mxu0
        %v3220 = vadd.f32 %v3200, %v3219
        %3221 = vdwg.mxu0
        %3222 = vmatpush.xpose.msra.mxu0 0.0
        %3223 = vmatpush.xpose.msra.mxu0 0.0
        %3224 = vmatpush.xpose.msra.mxu0 0.0
        %3225 = vmatpush.xpose.msra.mxu0 0.0
        %3226 = vmatpush.xpose.msra.mxu0 0.0
        %3227 = vmatpush.xpose.msra.mxu0 0.0
        %3228 = vmatpush.xpose.msra.mxu0 0.0
        %3229 = vmatpush.xpose.msra.mxu0 0.0
        %3230 = vmatpush.xpose.msra.mxu0 0.0
        %3231 = vmatpush.xpose.msra.mxu0 0.0
        %3232 = vmatpush.xpose.msra.mxu0 0.0
        %3233 = vmatpush.xpose.msra.mxu0 0.0
        %3234 = vmatpush.xpose.msra.mxu0 0.0
        %3235 = vmatpush.xpose.msra.mxu0 0.0
        %3236 = vmatpush.xpose.msra.mxu0 %v540
        %3237 = vmatpush.xpose.msra.mxu0 %v393
        %3238 = vmatmul.f32.gmra.mxu0 %v755
        %v3239 = vpop.f32.mrf.mxu0
        %v3240 = vadd.f32 %v3220, %v3239
        %3241 = vdwg.mxu0
        %3242 = vmatpush.xpose.msra.mxu0 0.0
        %3243 = vmatpush.xpose.msra.mxu0 0.0
        %3244 = vmatpush.xpose.msra.mxu0 0.0
        %3245 = vmatpush.xpose.msra.mxu0 0.0
        %3246 = vmatpush.xpose.msra.mxu0 0.0
        %3247 = vmatpush.xpose.msra.mxu0 0.0
        %3248 = vmatpush.xpose.msra.mxu0 0.0
        %3249 = vmatpush.xpose.msra.mxu0 0.0
        %3250 = vmatpush.xpose.msra.mxu0 0.0
        %3251 = vmatpush.xpose.msra.mxu0 0.0
        %3252 = vmatpush.xpose.msra.mxu0 0.0
        %3253 = vmatpush.xpose.msra.mxu0 0.0
        %3254 = vmatpush.xpose.msra.mxu0 0.0
        %3255 = vmatpush.xpose.msra.mxu0 0.0
        %3256 = vmatpush.xpose.msra.mxu0 %v541
        %3257 = vmatpush.xpose.msra.mxu0 %v394
        %3258 = vmatmul.f32.gmra.mxu0 %v756
        %v3259 = vpop.f32.mrf.mxu0
        %v3260 = vadd.f32 %v3240, %v3259
        %3261 = vdwg.mxu0
        %3262 = vmatpush.xpose.msra.mxu0 0.0
        %3263 = vmatpush.xpose.msra.mxu0 0.0
        %3264 = vmatpush.xpose.msra.mxu0 0.0
        %3265 = vmatpush.xpose.msra.mxu0 0.0
        %3266 = vmatpush.xpose.msra.mxu0 0.0
        %3267 = vmatpush.xpose.msra.mxu0 0.0
        %3268 = vmatpush.xpose.msra.mxu0 0.0
        %3269 = vmatpush.xpose.msra.mxu0 0.0
        %3270 = vmatpush.xpose.msra.mxu0 0.0
        %3271 = vmatpush.xpose.msra.mxu0 0.0
        %3272 = vmatpush.xpose.msra.mxu0 0.0
        %3273 = vmatpush.xpose.msra.mxu0 0.0
        %3274 = vmatpush.xpose.msra.mxu0 0.0
        %3275 = vmatpush.xpose.msra.mxu0 0.0
        %3276 = vmatpush.xpose.msra.mxu0 %v542
        %3277 = vmatpush.xpose.msra.mxu0 %v395
        %3278 = vmatmul.f32.gmra.mxu0 %v757
        %v3279 = vpop.f32.mrf.mxu0
        %v3280 = vadd.f32 %v3260, %v3279
        %3281 = vdwg.mxu0
        %3282 = vmatpush.xpose.msra.mxu0 0.0
        %3283 = vmatpush.xpose.msra.mxu0 0.0
        %3284 = vmatpush.xpose.msra.mxu0 0.0
        %3285 = vmatpush.xpose.msra.mxu0 0.0
        %3286 = vmatpush.xpose.msra.mxu0 0.0
        %3287 = vmatpush.xpose.msra.mxu0 0.0
        %3288 = vmatpush.xpose.msra.mxu0 0.0
        %3289 = vmatpush.xpose.msra.mxu0 0.0
        %3290 = vmatpush.xpose.msra.mxu0 0.0
        %3291 = vmatpush.xpose.msra.mxu0 0.0
        %3292 = vmatpush.xpose.msra.mxu0 0.0
        %3293 = vmatpush.xpose.msra.mxu0 0.0
        %3294 = vmatpush.xpose.msra.mxu0 0.0
        %3295 = vmatpush.xpose.msra.mxu0 0.0
        %3296 = vmatpush.xpose.msra.mxu0 %v543
        %3297 = vmatpush.xpose.msra.mxu0 %v396
        %3298 = vmatmul.f32.gmra.mxu0 %v758
        %v3299 = vpop.f32.mrf.mxu0
        %v3300 = vadd.f32 %v3280, %v3299
        %3301 = vdwg.mxu0
        %3302 = vmatpush.xpose.msra.mxu0 0.0
        %3303 = vmatpush.xpose.msra.mxu0 0.0
        %3304 = vmatpush.xpose.msra.mxu0 0.0
        %3305 = vmatpush.xpose.msra.mxu0 0.0
        %3306 = vmatpush.xpose.msra.mxu0 0.0
        %3307 = vmatpush.xpose.msra.mxu0 0.0
        %3308 = vmatpush.xpose.msra.mxu0 0.0
        %3309 = vmatpush.xpose.msra.mxu0 0.0
        %3310 = vmatpush.xpose.msra.mxu0 0.0
        %3311 = vmatpush.xpose.msra.mxu0 0.0
        %3312 = vmatpush.xpose.msra.mxu0 0.0
        %3313 = vmatpush.xpose.msra.mxu0 0.0
        %3314 = vmatpush.xpose.msra.mxu0 0.0
        %3315 = vmatpush.xpose.msra.mxu0 0.0
        %3316 = vmatpush.xpose.msra.mxu0 %v544
        %3317 = vmatpush.xpose.msra.mxu0 %v397
        %3318 = vmatmul.f32.gmra.mxu0 %v759
        %v3319 = vpop.f32.mrf.mxu0
        %v3320 = vadd.f32 %v3300, %v3319
        %3321 = vdwg.mxu0
        %3322 = vmatpush.xpose.msra.mxu0 0.0
        %3323 = vmatpush.xpose.msra.mxu0 0.0
        %3324 = vmatpush.xpose.msra.mxu0 0.0
        %3325 = vmatpush.xpose.msra.mxu0 0.0
        %3326 = vmatpush.xpose.msra.mxu0 0.0
        %3327 = vmatpush.xpose.msra.mxu0 0.0
        %3328 = vmatpush.xpose.msra.mxu0 0.0
        %3329 = vmatpush.xpose.msra.mxu0 0.0
        %3330 = vmatpush.xpose.msra.mxu0 0.0
        %3331 = vmatpush.xpose.msra.mxu0 0.0
        %3332 = vmatpush.xpose.msra.mxu0 0.0
        %3333 = vmatpush.xpose.msra.mxu0 0.0
        %3334 = vmatpush.xpose.msra.mxu0 0.0
        %3335 = vmatpush.xpose.msra.mxu0 0.0
        %3336 = vmatpush.xpose.msra.mxu0 %v545
        %3337 = vmatpush.xpose.msra.mxu0 %v398
        %3338 = vmatmul.f32.gmra.mxu0 %v760
        %v3339 = vpop.f32.mrf.mxu0
        %v3340 = vadd.f32 %v3320, %v3339
        %3341 = vdwg.mxu0
        %3342 = vmatpush.xpose.msra.mxu0 0.0
        %3343 = vmatpush.xpose.msra.mxu0 0.0
        %3344 = vmatpush.xpose.msra.mxu0 0.0
        %3345 = vmatpush.xpose.msra.mxu0 0.0
        %3346 = vmatpush.xpose.msra.mxu0 0.0
        %3347 = vmatpush.xpose.msra.mxu0 0.0
        %3348 = vmatpush.xpose.msra.mxu0 0.0
        %3349 = vmatpush.xpose.msra.mxu0 0.0
        %3350 = vmatpush.xpose.msra.mxu0 0.0
        %3351 = vmatpush.xpose.msra.mxu0 0.0
        %3352 = vmatpush.xpose.msra.mxu0 0.0
        %3353 = vmatpush.xpose.msra.mxu0 0.0
        %3354 = vmatpush.xpose.msra.mxu0 0.0
        %3355 = vmatpush.xpose.msra.mxu0 0.0
        %3356 = vmatpush.xpose.msra.mxu0 %v546
        %3357 = vmatpush.xpose.msra.mxu0 %v399
        %3358 = vmatmul.f32.gmra.mxu0 %v763
        %v3359 = vpop.f32.mrf.mxu0
        %v3360 = vadd.f32 %v3340, %v3359
        %3361 = vdwg.mxu0
        %3362 = vmatpush.xpose.msra.mxu0 0.0
        %3363 = vmatpush.xpose.msra.mxu0 0.0
        %3364 = vmatpush.xpose.msra.mxu0 0.0
        %3365 = vmatpush.xpose.msra.mxu0 0.0
        %3366 = vmatpush.xpose.msra.mxu0 0.0
        %3367 = vmatpush.xpose.msra.mxu0 0.0
        %3368 = vmatpush.xpose.msra.mxu0 0.0
        %3369 = vmatpush.xpose.msra.mxu0 0.0
        %3370 = vmatpush.xpose.msra.mxu0 0.0
        %3371 = vmatpush.xpose.msra.mxu0 0.0
        %3372 = vmatpush.xpose.msra.mxu0 0.0
        %3373 = vmatpush.xpose.msra.mxu0 0.0
        %3374 = vmatpush.xpose.msra.mxu0 0.0
        %3375 = vmatpush.xpose.msra.mxu0 0.0
        %3376 = vmatpush.xpose.msra.mxu0 %v547
        %3377 = vmatpush.xpose.msra.mxu0 %v400
        %3378 = vmatmul.f32.gmra.mxu0 %v764
        %v3379 = vpop.f32.mrf.mxu0
        %v3380 = vadd.f32 %v3360, %v3379
        %3381 = vdwg.mxu0
        %3382 = vmatpush.xpose.msra.mxu0 0.0
        %3383 = vmatpush.xpose.msra.mxu0 0.0
        %3384 = vmatpush.xpose.msra.mxu0 0.0
        %3385 = vmatpush.xpose.msra.mxu0 0.0
        %3386 = vmatpush.xpose.msra.mxu0 0.0
        %3387 = vmatpush.xpose.msra.mxu0 0.0
        %3388 = vmatpush.xpose.msra.mxu0 0.0
        %3389 = vmatpush.xpose.msra.mxu0 0.0
        %3390 = vmatpush.xpose.msra.mxu0 0.0
        %3391 = vmatpush.xpose.msra.mxu0 0.0
        %3392 = vmatpush.xpose.msra.mxu0 0.0
        %3393 = vmatpush.xpose.msra.mxu0 0.0
        %3394 = vmatpush.xpose.msra.mxu0 0.0
        %3395 = vmatpush.xpose.msra.mxu0 0.0
        %3396 = vmatpush.xpose.msra.mxu0 %v548
        %3397 = vmatpush.xpose.msra.mxu0 %v401
        %3398 = vmatmul.f32.gmra.mxu0 %v765
        %v3399 = vpop.f32.mrf.mxu0
        %v3400 = vadd.f32 %v3380, %v3399
        %3401 = vdwg.mxu0
        %3402 = vmatpush.xpose.msra.mxu0 0.0
        %3403 = vmatpush.xpose.msra.mxu0 0.0
        %3404 = vmatpush.xpose.msra.mxu0 0.0
        %3405 = vmatpush.xpose.msra.mxu0 0.0
        %3406 = vmatpush.xpose.msra.mxu0 0.0
        %3407 = vmatpush.xpose.msra.mxu0 0.0
        %3408 = vmatpush.xpose.msra.mxu0 0.0
        %3409 = vmatpush.xpose.msra.mxu0 0.0
        %3410 = vmatpush.xpose.msra.mxu0 0.0
        %3411 = vmatpush.xpose.msra.mxu0 0.0
        %3412 = vmatpush.xpose.msra.mxu0 0.0
        %3413 = vmatpush.xpose.msra.mxu0 0.0
        %3414 = vmatpush.xpose.msra.mxu0 0.0
        %3415 = vmatpush.xpose.msra.mxu0 0.0
        %3416 = vmatpush.xpose.msra.mxu0 %v549
        %3417 = vmatpush.xpose.msra.mxu0 %v402
        %3418 = vmatmul.f32.gmra.mxu0 %v766
        %v3419 = vpop.f32.mrf.mxu0
        %v3420 = vadd.f32 %v3400, %v3419
        %3421 = vdwg.mxu0
        %3422 = vmatpush.xpose.msra.mxu0 0.0
        %3423 = vmatpush.xpose.msra.mxu0 0.0
        %3424 = vmatpush.xpose.msra.mxu0 0.0
        %3425 = vmatpush.xpose.msra.mxu0 0.0
        %3426 = vmatpush.xpose.msra.mxu0 0.0
        %3427 = vmatpush.xpose.msra.mxu0 0.0
        %3428 = vmatpush.xpose.msra.mxu0 0.0
        %3429 = vmatpush.xpose.msra.mxu0 0.0
        %3430 = vmatpush.xpose.msra.mxu0 0.0
        %3431 = vmatpush.xpose.msra.mxu0 0.0
        %3432 = vmatpush.xpose.msra.mxu0 0.0
        %3433 = vmatpush.xpose.msra.mxu0 0.0
        %3434 = vmatpush.xpose.msra.mxu0 0.0
        %3435 = vmatpush.xpose.msra.mxu0 0.0
        %3436 = vmatpush.xpose.msra.mxu0 %v550
        %3437 = vmatpush.xpose.msra.mxu0 %v403
        %3438 = vmatmul.f32.gmra.mxu0 %v767
        %v3439 = vpop.f32.mrf.mxu0
        %v3440 = vadd.f32 %v3420, %v3439
        %3441 = vdwg.mxu0
        %3442 = vmatpush.xpose.msra.mxu0 0.0
        %3443 = vmatpush.xpose.msra.mxu0 0.0
        %3444 = vmatpush.xpose.msra.mxu0 0.0
        %3445 = vmatpush.xpose.msra.mxu0 0.0
        %3446 = vmatpush.xpose.msra.mxu0 0.0
        %3447 = vmatpush.xpose.msra.mxu0 0.0
        %3448 = vmatpush.xpose.msra.mxu0 0.0
        %3449 = vmatpush.xpose.msra.mxu0 0.0
        %3450 = vmatpush.xpose.msra.mxu0 0.0
        %3451 = vmatpush.xpose.msra.mxu0 0.0
        %3452 = vmatpush.xpose.msra.mxu0 0.0
        %3453 = vmatpush.xpose.msra.mxu0 0.0
        %3454 = vmatpush.xpose.msra.mxu0 0.0
        %3455 = vmatpush.xpose.msra.mxu0 0.0
        %3456 = vmatpush.xpose.msra.mxu0 %v551
        %3457 = vmatpush.xpose.msra.mxu0 %v404
        %3458 = vmatmul.f32.gmra.mxu0 %v768
        %v3459 = vpop.f32.mrf.mxu0
        %v3460 = vadd.f32 %v3440, %v3459
        %3461 = vdwg.mxu0
        %3462 = vmatpush.xpose.msra.mxu0 0.0
        %3463 = vmatpush.xpose.msra.mxu0 0.0
        %3464 = vmatpush.xpose.msra.mxu0 0.0
        %3465 = vmatpush.xpose.msra.mxu0 0.0
        %3466 = vmatpush.xpose.msra.mxu0 0.0
        %3467 = vmatpush.xpose.msra.mxu0 0.0
        %3468 = vmatpush.xpose.msra.mxu0 0.0
        %3469 = vmatpush.xpose.msra.mxu0 0.0
        %3470 = vmatpush.xpose.msra.mxu0 0.0
        %3471 = vmatpush.xpose.msra.mxu0 0.0
        %3472 = vmatpush.xpose.msra.mxu0 0.0
        %3473 = vmatpush.xpose.msra.mxu0 0.0
        %3474 = vmatpush.xpose.msra.mxu0 0.0
        %3475 = vmatpush.xpose.msra.mxu0 0.0
        %3476 = vmatpush.xpose.msra.mxu0 %v552
        %3477 = vmatpush.xpose.msra.mxu0 %v405
        %3478 = vmatmul.f32.gmra.mxu0 %v769
        %v3479 = vpop.f32.mrf.mxu0
        %v3480 = vadd.f32 %v3460, %v3479
        %3481 = vdwg.mxu0
        %3482 = vmatpush.xpose.msra.mxu0 0.0
        %3483 = vmatpush.xpose.msra.mxu0 0.0
        %3484 = vmatpush.xpose.msra.mxu0 0.0
        %3485 = vmatpush.xpose.msra.mxu0 0.0
        %3486 = vmatpush.xpose.msra.mxu0 0.0
        %3487 = vmatpush.xpose.msra.mxu0 0.0
        %3488 = vmatpush.xpose.msra.mxu0 0.0
        %3489 = vmatpush.xpose.msra.mxu0 0.0
        %3490 = vmatpush.xpose.msra.mxu0 0.0
        %3491 = vmatpush.xpose.msra.mxu0 0.0
        %3492 = vmatpush.xpose.msra.mxu0 0.0
        %3493 = vmatpush.xpose.msra.mxu0 0.0
        %3494 = vmatpush.xpose.msra.mxu0 0.0
        %3495 = vmatpush.xpose.msra.mxu0 0.0
        %3496 = vmatpush.xpose.msra.mxu0 %v553
        %3497 = vmatpush.xpose.msra.mxu0 %v406
        %3498 = vmatmul.f32.gmra.mxu0 %v770
        %v3499 = vpop.f32.mrf.mxu0
        %v3500 = vadd.f32 %v3480, %v3499
        %3501 = vdwg.mxu0
        %3502 = vmatpush.xpose.msra.mxu0 0.0
        %3503 = vmatpush.xpose.msra.mxu0 0.0
        %3504 = vmatpush.xpose.msra.mxu0 0.0
        %3505 = vmatpush.xpose.msra.mxu0 0.0
        %3506 = vmatpush.xpose.msra.mxu0 0.0
        %3507 = vmatpush.xpose.msra.mxu0 0.0
        %3508 = vmatpush.xpose.msra.mxu0 0.0
        %3509 = vmatpush.xpose.msra.mxu0 0.0
        %3510 = vmatpush.xpose.msra.mxu0 0.0
        %3511 = vmatpush.xpose.msra.mxu0 0.0
        %3512 = vmatpush.xpose.msra.mxu0 0.0
        %3513 = vmatpush.xpose.msra.mxu0 0.0
        %3514 = vmatpush.xpose.msra.mxu0 0.0
        %3515 = vmatpush.xpose.msra.mxu0 0.0
        %3516 = vmatpush.xpose.msra.mxu0 %v554
        %3517 = vmatpush.xpose.msra.mxu0 %v407
        %3518 = vmatmul.f32.gmra.mxu0 %v773
        %v3519 = vpop.f32.mrf.mxu0
        %v3520 = vadd.f32 %v3500, %v3519
        %3521 = vdwg.mxu0
        %3522 = vmatpush.xpose.msra.mxu0 0.0
        %3523 = vmatpush.xpose.msra.mxu0 0.0
        %3524 = vmatpush.xpose.msra.mxu0 0.0
        %3525 = vmatpush.xpose.msra.mxu0 0.0
        %3526 = vmatpush.xpose.msra.mxu0 0.0
        %3527 = vmatpush.xpose.msra.mxu0 0.0
        %3528 = vmatpush.xpose.msra.mxu0 0.0
        %3529 = vmatpush.xpose.msra.mxu0 0.0
        %3530 = vmatpush.xpose.msra.mxu0 0.0
        %3531 = vmatpush.xpose.msra.mxu0 0.0
        %3532 = vmatpush.xpose.msra.mxu0 0.0
        %3533 = vmatpush.xpose.msra.mxu0 0.0
        %3534 = vmatpush.xpose.msra.mxu0 0.0
        %3535 = vmatpush.xpose.msra.mxu0 0.0
        %3536 = vmatpush.xpose.msra.mxu0 %v555
        %3537 = vmatpush.xpose.msra.mxu0 %v408
        %3538 = vmatmul.f32.gmra.mxu0 %v774
        %v3539 = vpop.f32.mrf.mxu0
        %v3540 = vadd.f32 %v3520, %v3539
        %3541 = vdwg.mxu0
        %3542 = vmatpush.xpose.msra.mxu0 0.0
        %3543 = vmatpush.xpose.msra.mxu0 0.0
        %3544 = vmatpush.xpose.msra.mxu0 0.0
        %3545 = vmatpush.xpose.msra.mxu0 0.0
        %3546 = vmatpush.xpose.msra.mxu0 0.0
        %3547 = vmatpush.xpose.msra.mxu0 0.0
        %3548 = vmatpush.xpose.msra.mxu0 0.0
        %3549 = vmatpush.xpose.msra.mxu0 0.0
        %3550 = vmatpush.xpose.msra.mxu0 0.0
        %3551 = vmatpush.xpose.msra.mxu0 0.0
        %3552 = vmatpush.xpose.msra.mxu0 0.0
        %3553 = vmatpush.xpose.msra.mxu0 0.0
        %3554 = vmatpush.xpose.msra.mxu0 0.0
        %3555 = vmatpush.xpose.msra.mxu0 0.0
        %3556 = vmatpush.xpose.msra.mxu0 %v556
        %3557 = vmatpush.xpose.msra.mxu0 %v409
        %3558 = vmatmul.f32.gmra.mxu0 %v775
        %v3559 = vpop.f32.mrf.mxu0
        %v3560 = vadd.f32 %v3540, %v3559
        %3561 = vdwg.mxu0
        %3562 = vmatpush.xpose.msra.mxu0 0.0
        %3563 = vmatpush.xpose.msra.mxu0 0.0
        %3564 = vmatpush.xpose.msra.mxu0 0.0
        %3565 = vmatpush.xpose.msra.mxu0 0.0
        %3566 = vmatpush.xpose.msra.mxu0 0.0
        %3567 = vmatpush.xpose.msra.mxu0 0.0
        %3568 = vmatpush.xpose.msra.mxu0 0.0
        %3569 = vmatpush.xpose.msra.mxu0 0.0
        %3570 = vmatpush.xpose.msra.mxu0 0.0
        %3571 = vmatpush.xpose.msra.mxu0 0.0
        %3572 = vmatpush.xpose.msra.mxu0 0.0
        %3573 = vmatpush.xpose.msra.mxu0 0.0
        %3574 = vmatpush.xpose.msra.mxu0 0.0
        %3575 = vmatpush.xpose.msra.mxu0 0.0
        %3576 = vmatpush.xpose.msra.mxu0 %v557
        %3577 = vmatpush.xpose.msra.mxu0 %v410
        %3578 = vmatmul.f32.gmra.mxu0 %v776
        %v3579 = vpop.f32.mrf.mxu0
        %v3580 = vadd.f32 %v3560, %v3579
        %3581 = vdwg.mxu0
        %3582 = vmatpush.xpose.msra.mxu0 0.0
        %3583 = vmatpush.xpose.msra.mxu0 0.0
        %3584 = vmatpush.xpose.msra.mxu0 0.0
        %3585 = vmatpush.xpose.msra.mxu0 0.0
        %3586 = vmatpush.xpose.msra.mxu0 0.0
        %3587 = vmatpush.xpose.msra.mxu0 0.0
        %3588 = vmatpush.xpose.msra.mxu0 0.0
        %3589 = vmatpush.xpose.msra.mxu0 0.0
        %3590 = vmatpush.xpose.msra.mxu0 0.0
        %3591 = vmatpush.xpose.msra.mxu0 0.0
        %3592 = vmatpush.xpose.msra.mxu0 0.0
        %3593 = vmatpush.xpose.msra.mxu0 0.0
        %3594 = vmatpush.xpose.msra.mxu0 0.0
        %3595 = vmatpush.xpose.msra.mxu0 0.0
        %3596 = vmatpush.xpose.msra.mxu0 %v558
        %3597 = vmatpush.xpose.msra.mxu0 %v411
        %3598 = vmatmul.f32.gmra.mxu0 %v777
        %v3599 = vpop.f32.mrf.mxu0
        %v3600 = vadd.f32 %v3580, %v3599
        %3601 = vdwg.mxu0
        %3602 = vmatpush.xpose.msra.mxu0 0.0
        %3603 = vmatpush.xpose.msra.mxu0 0.0
        %3604 = vmatpush.xpose.msra.mxu0 0.0
        %3605 = vmatpush.xpose.msra.mxu0 0.0
        %3606 = vmatpush.xpose.msra.mxu0 0.0
        %3607 = vmatpush.xpose.msra.mxu0 0.0
        %3608 = vmatpush.xpose.msra.mxu0 0.0
        %3609 = vmatpush.xpose.msra.mxu0 0.0
        %3610 = vmatpush.xpose.msra.mxu0 0.0
        %3611 = vmatpush.xpose.msra.mxu0 0.0
        %3612 = vmatpush.xpose.msra.mxu0 0.0
        %3613 = vmatpush.xpose.msra.mxu0 0.0
        %3614 = vmatpush.xpose.msra.mxu0 0.0
        %3615 = vmatpush.xpose.msra.mxu0 0.0
        %3616 = vmatpush.xpose.msra.mxu0 %v559
        %3617 = vmatpush.xpose.msra.mxu0 %v412
        %3618 = vmatmul.f32.gmra.mxu0 %v778
        %v3619 = vpop.f32.mrf.mxu0
        %v3620 = vadd.f32 %v3600, %v3619
        %3621 = vdwg.mxu0
        %3622 = vmatpush.xpose.msra.mxu0 0.0
        %3623 = vmatpush.xpose.msra.mxu0 0.0
        %3624 = vmatpush.xpose.msra.mxu0 0.0
        %3625 = vmatpush.xpose.msra.mxu0 0.0
        %3626 = vmatpush.xpose.msra.mxu0 0.0
        %3627 = vmatpush.xpose.msra.mxu0 0.0
        %3628 = vmatpush.xpose.msra.mxu0 0.0
        %3629 = vmatpush.xpose.msra.mxu0 0.0
        %3630 = vmatpush.xpose.msra.mxu0 0.0
        %3631 = vmatpush.xpose.msra.mxu0 0.0
        %3632 = vmatpush.xpose.msra.mxu0 0.0
        %3633 = vmatpush.xpose.msra.mxu0 0.0
        %3634 = vmatpush.xpose.msra.mxu0 0.0
        %3635 = vmatpush.xpose.msra.mxu0 0.0
        %3636 = vmatpush.xpose.msra.mxu0 %v560
        %3637 = vmatpush.xpose.msra.mxu0 %v413
        %3638 = vmatmul.f32.gmra.mxu0 %v779
        %v3639 = vpop.f32.mrf.mxu0
        %v3640 = vadd.f32 %v3620, %v3639
        %3641 = vdwg.mxu0
        %3642 = vmatpush.xpose.msra.mxu0 0.0
        %3643 = vmatpush.xpose.msra.mxu0 0.0
        %3644 = vmatpush.xpose.msra.mxu0 0.0
        %3645 = vmatpush.xpose.msra.mxu0 0.0
        %3646 = vmatpush.xpose.msra.mxu0 0.0
        %3647 = vmatpush.xpose.msra.mxu0 0.0
        %3648 = vmatpush.xpose.msra.mxu0 0.0
        %3649 = vmatpush.xpose.msra.mxu0 0.0
        %3650 = vmatpush.xpose.msra.mxu0 0.0
        %3651 = vmatpush.xpose.msra.mxu0 0.0
        %3652 = vmatpush.xpose.msra.mxu0 0.0
        %3653 = vmatpush.xpose.msra.mxu0 0.0
        %3654 = vmatpush.xpose.msra.mxu0 0.0
        %3655 = vmatpush.xpose.msra.mxu0 0.0
        %3656 = vmatpush.xpose.msra.mxu0 %v561
        %3657 = vmatpush.xpose.msra.mxu0 %v414
        %3658 = vmatmul.f32.gmra.mxu0 %v780
        %v3659 = vpop.f32.mrf.mxu0
        %v3660 = vadd.f32 %v3640, %v3659
        %3661 = vdwg.mxu0
        %3662 = vmatpush.xpose.msra.mxu0 0.0
        %3663 = vmatpush.xpose.msra.mxu0 0.0
        %3664 = vmatpush.xpose.msra.mxu0 0.0
        %3665 = vmatpush.xpose.msra.mxu0 0.0
        %3666 = vmatpush.xpose.msra.mxu0 0.0
        %3667 = vmatpush.xpose.msra.mxu0 0.0
        %3668 = vmatpush.xpose.msra.mxu0 0.0
        %3669 = vmatpush.xpose.msra.mxu0 0.0
        %3670 = vmatpush.xpose.msra.mxu0 0.0
        %3671 = vmatpush.xpose.msra.mxu0 0.0
        %3672 = vmatpush.xpose.msra.mxu0 0.0
        %3673 = vmatpush.xpose.msra.mxu0 0.0
        %3674 = vmatpush.xpose.msra.mxu0 0.0
        %3675 = vmatpush.xpose.msra.mxu0 0.0
        %3676 = vmatpush.xpose.msra.mxu0 %v562
        %3677 = vmatpush.xpose.msra.mxu0 %v415
        %3678 = vmatmul.f32.gmra.mxu0 %v783
        %v3679 = vpop.f32.mrf.mxu0
        %v3680 = vadd.f32 %v3660, %v3679
        %3681 = vdwg.mxu0
        %3682 = vmatpush.xpose.msra.mxu0 0.0
        %3683 = vmatpush.xpose.msra.mxu0 0.0
        %3684 = vmatpush.xpose.msra.mxu0 0.0
        %3685 = vmatpush.xpose.msra.mxu0 0.0
        %3686 = vmatpush.xpose.msra.mxu0 0.0
        %3687 = vmatpush.xpose.msra.mxu0 0.0
        %3688 = vmatpush.xpose.msra.mxu0 0.0
        %3689 = vmatpush.xpose.msra.mxu0 0.0
        %3690 = vmatpush.xpose.msra.mxu0 0.0
        %3691 = vmatpush.xpose.msra.mxu0 0.0
        %3692 = vmatpush.xpose.msra.mxu0 0.0
        %3693 = vmatpush.xpose.msra.mxu0 0.0
        %3694 = vmatpush.xpose.msra.mxu0 0.0
        %3695 = vmatpush.xpose.msra.mxu0 0.0
        %3696 = vmatpush.xpose.msra.mxu0 %v563
        %3697 = vmatpush.xpose.msra.mxu0 %v416
        %3698 = vmatmul.f32.gmra.mxu0 %v784
        %v3699 = vpop.f32.mrf.mxu0
        %v3700 = vadd.f32 %v3680, %v3699
        %3701 = vdwg.mxu0
        %3702 = vmatpush.xpose.msra.mxu0 0.0
        %3703 = vmatpush.xpose.msra.mxu0 0.0
        %3704 = vmatpush.xpose.msra.mxu0 0.0
        %3705 = vmatpush.xpose.msra.mxu0 0.0
        %3706 = vmatpush.xpose.msra.mxu0 0.0
        %3707 = vmatpush.xpose.msra.mxu0 0.0
        %3708 = vmatpush.xpose.msra.mxu0 0.0
        %3709 = vmatpush.xpose.msra.mxu0 0.0
        %3710 = vmatpush.xpose.msra.mxu0 0.0
        %3711 = vmatpush.xpose.msra.mxu0 0.0
        %3712 = vmatpush.xpose.msra.mxu0 0.0
        %3713 = vmatpush.xpose.msra.mxu0 0.0
        %3714 = vmatpush.xpose.msra.mxu0 0.0
        %3715 = vmatpush.xpose.msra.mxu0 0.0
        %3716 = vmatpush.xpose.msra.mxu0 %v564
        %3717 = vmatpush.xpose.msra.mxu0 %v417
        %3718 = vmatmul.f32.gmra.mxu0 %v785
        %v3719 = vpop.f32.mrf.mxu0
        %v3720 = vadd.f32 %v3700, %v3719
        %3721 = vdwg.mxu0
        %3722 = vmatpush.xpose.msra.mxu0 0.0
        %3723 = vmatpush.xpose.msra.mxu0 0.0
        %3724 = vmatpush.xpose.msra.mxu0 0.0
        %3725 = vmatpush.xpose.msra.mxu0 0.0
        %3726 = vmatpush.xpose.msra.mxu0 0.0
        %3727 = vmatpush.xpose.msra.mxu0 0.0
        %3728 = vmatpush.xpose.msra.mxu0 0.0
        %3729 = vmatpush.xpose.msra.mxu0 0.0
        %3730 = vmatpush.xpose.msra.mxu0 0.0
        %3731 = vmatpush.xpose.msra.mxu0 0.0
        %3732 = vmatpush.xpose.msra.mxu0 0.0
        %3733 = vmatpush.xpose.msra.mxu0 0.0
        %3734 = vmatpush.xpose.msra.mxu0 0.0
        %3735 = vmatpush.xpose.msra.mxu0 0.0
        %3736 = vmatpush.xpose.msra.mxu0 %v565
        %3737 = vmatpush.xpose.msra.mxu0 %v418
        %3738 = vmatmul.f32.gmra.mxu0 %v786
        %v3739 = vpop.f32.mrf.mxu0
        %v3740 = vadd.f32 %v3720, %v3739
        %3741 = vdwg.mxu0
        %3742 = vmatpush.xpose.msra.mxu0 0.0
        %3743 = vmatpush.xpose.msra.mxu0 0.0
        %3744 = vmatpush.xpose.msra.mxu0 0.0
        %3745 = vmatpush.xpose.msra.mxu0 0.0
        %3746 = vmatpush.xpose.msra.mxu0 0.0
        %3747 = vmatpush.xpose.msra.mxu0 0.0
        %3748 = vmatpush.xpose.msra.mxu0 0.0
        %3749 = vmatpush.xpose.msra.mxu0 0.0
        %3750 = vmatpush.xpose.msra.mxu0 0.0
        %3751 = vmatpush.xpose.msra.mxu0 0.0
        %3752 = vmatpush.xpose.msra.mxu0 0.0
        %3753 = vmatpush.xpose.msra.mxu0 0.0
        %3754 = vmatpush.xpose.msra.mxu0 0.0
        %3755 = vmatpush.xpose.msra.mxu0 0.0
        %3756 = vmatpush.xpose.msra.mxu0 %v566
        %3757 = vmatpush.xpose.msra.mxu0 %v419
        %3758 = vmatmul.f32.gmra.mxu0 %v787
        %v3759 = vpop.f32.mrf.mxu0
        %v3760 = vadd.f32 %v3740, %v3759
        %3761 = vdwg.mxu0
        %3762 = vmatpush.xpose.msra.mxu0 0.0
        %3763 = vmatpush.xpose.msra.mxu0 0.0
        %3764 = vmatpush.xpose.msra.mxu0 0.0
        %3765 = vmatpush.xpose.msra.mxu0 0.0
        %3766 = vmatpush.xpose.msra.mxu0 0.0
        %3767 = vmatpush.xpose.msra.mxu0 0.0
        %3768 = vmatpush.xpose.msra.mxu0 0.0
        %3769 = vmatpush.xpose.msra.mxu0 0.0
        %3770 = vmatpush.xpose.msra.mxu0 0.0
        %3771 = vmatpush.xpose.msra.mxu0 0.0
        %3772 = vmatpush.xpose.msra.mxu0 0.0
        %3773 = vmatpush.xpose.msra.mxu0 0.0
        %3774 = vmatpush.xpose.msra.mxu0 0.0
        %3775 = vmatpush.xpose.msra.mxu0 0.0
        %3776 = vmatpush.xpose.msra.mxu0 %v567
        %3777 = vmatpush.xpose.msra.mxu0 %v420
        %3778 = vmatmul.f32.gmra.mxu0 %v788
        %v3779 = vpop.f32.mrf.mxu0
        %v3780 = vadd.f32 %v3760, %v3779
        %3781 = vdwg.mxu0
        %3782 = vmatpush.xpose.msra.mxu0 0.0
        %3783 = vmatpush.xpose.msra.mxu0 0.0
        %3784 = vmatpush.xpose.msra.mxu0 0.0
        %3785 = vmatpush.xpose.msra.mxu0 0.0
        %3786 = vmatpush.xpose.msra.mxu0 0.0
        %3787 = vmatpush.xpose.msra.mxu0 0.0
        %3788 = vmatpush.xpose.msra.mxu0 0.0
        %3789 = vmatpush.xpose.msra.mxu0 0.0
        %3790 = vmatpush.xpose.msra.mxu0 0.0
        %3791 = vmatpush.xpose.msra.mxu0 0.0
        %3792 = vmatpush.xpose.msra.mxu0 0.0
        %3793 = vmatpush.xpose.msra.mxu0 0.0
        %3794 = vmatpush.xpose.msra.mxu0 0.0
        %3795 = vmatpush.xpose.msra.mxu0 0.0
        %3796 = vmatpush.xpose.msra.mxu0 %v568
        %3797 = vmatpush.xpose.msra.mxu0 %v421
        %3798 = vmatmul.f32.gmra.mxu0 %v789
        %v3799 = vpop.f32.mrf.mxu0
        %v3800 = vadd.f32 %v3780, %v3799
        %3801 = vdwg.mxu0
        %3802 = vmatpush.xpose.msra.mxu0 0.0
        %3803 = vmatpush.xpose.msra.mxu0 0.0
        %3804 = vmatpush.xpose.msra.mxu0 0.0
        %3805 = vmatpush.xpose.msra.mxu0 0.0
        %3806 = vmatpush.xpose.msra.mxu0 0.0
        %3807 = vmatpush.xpose.msra.mxu0 0.0
        %3808 = vmatpush.xpose.msra.mxu0 0.0
        %3809 = vmatpush.xpose.msra.mxu0 0.0
        %3810 = vmatpush.xpose.msra.mxu0 0.0
        %3811 = vmatpush.xpose.msra.mxu0 0.0
        %3812 = vmatpush.xpose.msra.mxu0 0.0
        %3813 = vmatpush.xpose.msra.mxu0 0.0
        %3814 = vmatpush.xpose.msra.mxu0 0.0
        %3815 = vmatpush.xpose.msra.mxu0 0.0
        %3816 = vmatpush.xpose.msra.mxu0 %v569
        %3817 = vmatpush.xpose.msra.mxu0 %v422
        %3818 = vmatmul.f32.gmra.mxu0 %v790
        %v3819 = vpop.f32.mrf.mxu0
        %v3820 = vadd.f32 %v3800, %v3819
        %3821 = vdwg.mxu0
        %3822 = vmatpush.xpose.msra.mxu0 0.0
        %3823 = vmatpush.xpose.msra.mxu0 0.0
        %3824 = vmatpush.xpose.msra.mxu0 0.0
        %3825 = vmatpush.xpose.msra.mxu0 0.0
        %3826 = vmatpush.xpose.msra.mxu0 0.0
        %3827 = vmatpush.xpose.msra.mxu0 0.0
        %3828 = vmatpush.xpose.msra.mxu0 0.0
        %3829 = vmatpush.xpose.msra.mxu0 0.0
        %3830 = vmatpush.xpose.msra.mxu0 0.0
        %3831 = vmatpush.xpose.msra.mxu0 0.0
        %3832 = vmatpush.xpose.msra.mxu0 0.0
        %3833 = vmatpush.xpose.msra.mxu0 0.0
        %3834 = vmatpush.xpose.msra.mxu0 0.0
        %3835 = vmatpush.xpose.msra.mxu0 0.0
        %3836 = vmatpush.xpose.msra.mxu0 %v570
        %3837 = vmatpush.xpose.msra.mxu0 %v423
        %3838 = vmatmul.f32.gmra.mxu0 %v792
        %v3839 = vpop.f32.mrf.mxu0
        %v3840 = vadd.f32 %v3820, %v3839
        %3841 = vdwg.mxu0
        %3842 = vmatpush.xpose.msra.mxu0 0.0
        %3843 = vmatpush.xpose.msra.mxu0 0.0
        %3844 = vmatpush.xpose.msra.mxu0 0.0
        %3845 = vmatpush.xpose.msra.mxu0 0.0
        %3846 = vmatpush.xpose.msra.mxu0 0.0
        %3847 = vmatpush.xpose.msra.mxu0 0.0
        %3848 = vmatpush.xpose.msra.mxu0 0.0
        %3849 = vmatpush.xpose.msra.mxu0 0.0
        %3850 = vmatpush.xpose.msra.mxu0 0.0
        %3851 = vmatpush.xpose.msra.mxu0 0.0
        %3852 = vmatpush.xpose.msra.mxu0 0.0
        %3853 = vmatpush.xpose.msra.mxu0 0.0
        %3854 = vmatpush.xpose.msra.mxu0 0.0
        %3855 = vmatpush.xpose.msra.mxu0 0.0
        %3856 = vmatpush.xpose.msra.mxu0 %v571
        %3857 = vmatpush.xpose.msra.mxu0 %v424
        %3858 = vmatmul.f32.gmra.mxu0 %v793
        %v3859 = vpop.f32.mrf.mxu0
        %v3860 = vadd.f32 %v3840, %v3859
        %3861 = vdwg.mxu0
        %3862 = vmatpush.xpose.msra.mxu0 0.0
        %3863 = vmatpush.xpose.msra.mxu0 0.0
        %3864 = vmatpush.xpose.msra.mxu0 0.0
        %3865 = vmatpush.xpose.msra.mxu0 0.0
        %3866 = vmatpush.xpose.msra.mxu0 0.0
        %3867 = vmatpush.xpose.msra.mxu0 0.0
        %3868 = vmatpush.xpose.msra.mxu0 0.0
        %3869 = vmatpush.xpose.msra.mxu0 0.0
        %3870 = vmatpush.xpose.msra.mxu0 0.0
        %3871 = vmatpush.xpose.msra.mxu0 0.0
        %3872 = vmatpush.xpose.msra.mxu0 0.0
        %3873 = vmatpush.xpose.msra.mxu0 0.0
        %3874 = vmatpush.xpose.msra.mxu0 0.0
        %3875 = vmatpush.xpose.msra.mxu0 0.0
        %3876 = vmatpush.xpose.msra.mxu0 %v572
        %3877 = vmatpush.xpose.msra.mxu0 %v425
        %3878 = vmatmul.f32.gmra.mxu0 %v794
        %v3879 = vpop.f32.mrf.mxu0
        %v3880 = vadd.f32 %v3860, %v3879
        %3881 = vdwg.mxu0
        %v3882 = vadd.f32 %v241, %v3880
        %vm3883 = vcmask 123904
        %3884 = vst.msk [vmem:[#allocation8] sm:$0x3] %vm3883, %v3882
        %p3885 = scmp.eq.s32.totalorder %s21, 7
        // Predicated region
        $region49: #{tpu_custom_call.1} parent=31 // pred_check
          %p3886 = pneg %p3885
        $region50: #{tpu_custom_call.1} parent=31 // pred_check_branch
          %3888 = sbr.rel (%p3886) target = $region52
        $region51: #{tpu_custom_call.1} parent=31 // pred_region
          %v3889 = vld [vmem:[#allocation8] sm:$0x3]
          %v3890 = vld [vmem:[#allocation7] sm:$0x1]
          %v3892 = vperm.slane %v3890, 0
          %v3894 = vadd.f32 %v3889, %v3892
          %3895 = vst.msk [vmem:[#allocation8] sm:$0x3] %vm3883, %v3894
        $region52: #{tpu_custom_call.1} parent=31 // pred_fallthru
          _
        // Predicated region
        $region53: #{tpu_custom_call.1} parent=31 // pred_check
          %p3896 = pneg %p107
        $region54: #{tpu_custom_call.1} parent=31 // pred_check_branch
          %3898 = sbr.rel (%p3896) target = $region56
        $region55: #{tpu_custom_call.1} parent=31 // pred_region
          %3900 = vsyncadd [#allocation4], 0
          %s3902 = sshll.u32 [#allocation8], 4
          %s3903 = int_to_ptr.vmem [resolvable:$true] %s3902
          %s3904 = sshll.u32 %s3, 4
          %s3905 = int_to_ptr.hbm [resolvable:$true] %s3904
          %3907 = dma.vmem_to_hbm [thread:$0]  %s3903, 32, %s3905, [#allocation4]
        $region56: #{tpu_custom_call.1} parent=31 // pred_fallthru
          _
        // Predicated region
        $region57: #{tpu_custom_call.1} parent=31 // pred_check
          %p3908 = pneg %p107
        $region58: #{tpu_custom_call.1} parent=31 // pred_check_branch
          %3910 = sbr.rel (%p3908) target = $region60
        $region59: #{tpu_custom_call.1} parent=31 // pred_region
          %3912 = dma.done [#allocation4], 32
        $region60: #{tpu_custom_call.1} parent=31 // pred_fallthru
          _
      $region32: #{tpu_custom_call.1} parent=5 // pred_fallthru
        _
      %p3913 = scmp.le.s32.totalorder 2, %s16
      // Predicated region
      $region61: #{tpu_custom_call.1} parent=5 // pred_check
        %p3914 = pneg %p3913
      $region62: #{tpu_custom_call.1} parent=5 // pred_check_branch
        %3916 = sbr.rel (%p3914) target = $region64
      $region63: #{tpu_custom_call.1} parent=5 // pred_region
        %s3917 = ssub.s32 %s16, 2
      $region64: #{tpu_custom_call.1} parent=5 // pred_fallthru
        _
    $region6: #{tpu_custom_call.1} parent=1 // loop_footer
      %s20 = sadd.s32 1, %s16
    $region7: #{tpu_custom_call.1} parent=1 // loop_footer_branch
      %15 = sbr.rel target = $region3
    $region8: #{tpu_custom_call.1} parent=1 // loop_exit
      _
    %3918 = vsyncpa [#allocation3], 1
    %s3919 = scalar_lea.sflag [#allocation3], 1
    %3920 = vsyncpa %s3919, 1
    %3921 = vsyncpa [#allocation6], 1
    %s3922 = scalar_lea.sflag [#allocation6], 1
    %3923 = vsyncpa %s3922, 1
    %3924 = vsyncpa [#allocation4], 1
    %s3925 = scalar_lea.sflag [#allocation4], 1
    %3926 = vsyncpa %s3925, 1

</llo_original>
